<compile_context>
chip_gen: v7x
topology: tpu7x:2x2x1
jax: 0.10.0
libtpu: 0.0.40
codegen_flags: <defaults>
</compile_context>

<pallas_src>
import numpy as np

import jax
import jax.numpy as jnp
from jax import lax
from jax.experimental import pallas as pl
from jax.experimental.pallas import tpu as pltpu


# ---------------------------------------------------------------------------
# Host-side helpers (run once per forward, fused under jit)
# ---------------------------------------------------------------------------
def _unfold_kc(x, kernel_size, stride):
    """x: (B, C, H, W) -> (B*ph*pw, kh*kw*C).

    Row order is (b, i, j); column order is (kernel-offset, channel), i.e.
    col = (a*kw + b)*C + c.  This matches the per-offset unfold blocks used
    inside the kernel for the higher layers.
    """
    B, C, H, W = x.shape
    kh, kw = kernel_size
    sh, sw = stride
    ph = (H - kh) // sh + 1
    pw = (W - kw) // sw + 1
    cols = []
    for a in range(kh):
        for b in range(kw):
            win = lax.slice(
                x, (0, 0, a, b),
                (B, C, a + sh * (ph - 1) + 1, b + sw * (pw - 1) + 1),
                strides=(1, 1, sh, sw))                     # (B, C, ph, pw)
            cols.append(jnp.transpose(win, (0, 2, 3, 1)))   # (B, ph, pw, C)
    pat = jnp.stack(cols, axis=3)                           # (B, ph, pw, KK, C)
    return pat.reshape(B * ph * pw, kh * kw * C)


def _build_selectors(B, prev_ph, prev_pw, ph, pw, kernel_size, stride):
    """Constant 0/1 gather matrices implementing unfold of the previous
    layer's r (and, transposed, the fold-adjoint used in the backward pass).

    G[k]  : (B*P_l, B*P_{l-1})   pat_block_k = G[k] @ r_prev      (unfold)
    GT[k] : (B*P_{l-1}, B*P_l)   grad_prev  += GT[k] @ gp_block_k (fold-adjoint)

    TODO(synk): the batch is folded block-diagonally (size ~ B^2*P*P_prev);
    fine at these sizes, switch to an in-kernel gather for large spatial maps.
    """
    kh, kw = kernel_size
    sh, sw = stride
    KK = kh * kw
    P_prev = prev_ph * prev_pw
    P = ph * pw
    G = np.zeros((KK, B * P, B * P_prev), np.float32)
    for b in range(B):
        for i in range(ph):
            for j in range(pw):
                q = i * pw + j
                for a in range(kh):
                    for bb in range(kw):
                        k = a * kw + bb
                        p = (i * sh + a) * prev_pw + (j * sw + bb)
                        G[k, b * P + q, b * P_prev + p] = 1.0
    GT = np.ascontiguousarray(np.transpose(G, (0, 2, 1)))
    return jnp.asarray(G), jnp.asarray(GT)


def _whole_block_spec(shape):
    """Whole-array VMEM block with a constant index map (loaded once)."""
    nd = len(shape)
    zeros = (0,) * nd
    return pl.BlockSpec(tuple(int(s) for s in shape), lambda t, _z=zeros: _z)


# ---------------------------------------------------------------------------
# Fused kernel: grid=(timesteps,), all layers of one timestep per grid step.
# ---------------------------------------------------------------------------
def _make_fused_kernel(cfgs):
    L = len(cfgs)

    def kernel(*refs):
        # -- unpack (order must match the args assembled in _build_run.run) --
        pat0_ref = refs[0]            # (BP0, D0)  constant layer-0 patches
        r_init_refs = [refs[1]]       # (BP_l, nc_l) per layer
        u0_ref = refs[2]              # (nc0, D0)
        u0t_ref = refs[3]             # (D0, nc0)
        pos = 4
        blk = []                      # (U2_blk, U2T_blk, G, GT) per layer >= 1
        for _ in range(1, L):
            r_init_refs.append(refs[pos + 0])
            blk.append((refs[pos + 1], refs[pos + 2], refs[pos + 3], refs[pos + 4]))
            pos += 5
        out_refs = refs[pos:pos + L]  # (BP_l, nc_l) per layer -- doubles as state

        t = pl.program_id(0)

        # Initialize the VMEM-resident state on the first grid step.
        @pl.when(t == 0)
        def _init():
            for l in range(L):
                out_refs[l][...] = r_init_refs[l][...]

        # Start-of-step causes (simultaneous update, as in the torch reference).
        rs = [out_refs[l][...] for l in range(L)]

        # ---- layer 0: patches come from x (constant across timesteps) ----
        c0 = cfgs[0]
        pred0 = jnp.tanh(jnp.dot(rs[0], u0_ref[...],
                                 preferred_element_type=jnp.float32))
        err0 = pat0_ref[...] - pred0
        gpre0 = err0 * (1.0 - pred0 * pred0)
        grads = [(-2.0 * c0["precision"])
                 * jnp.dot(gpre0, u0t_ref[...], preferred_element_type=jnp.float32)
                 + c0["prior_coef"] * rs[0]]

        # ---- layers >= 1: input patches are an unfold of the layer below ----
        # Processed per kernel-offset block so unfold and its adjoint (fold)
        # are plain matmuls against constant selection matrices.
        for l in range(1, L):
            c = cfgs[l]
            u_blk, ut_blk, g_sel, gt_sel = blk[l - 1]
            grad_l = c["prior_coef"] * rs[l]
            adj_prev = jnp.zeros_like(rs[l - 1])
            for k in range(c["KK"]):
                pat_k = jnp.dot(g_sel[k], rs[l - 1],
                                preferred_element_type=jnp.float32)   # (BP_l, nc_prev)
                pred_k = jnp.tanh(jnp.dot(rs[l], u_blk[k],
                                          preferred_element_type=jnp.float32))
                err_k = pat_k - pred_k
                gpre_k = err_k * (1.0 - pred_k * pred_k)
                grad_l = grad_l + (-2.0 * c["precision"]) * jnp.dot(
                    gpre_k, ut_blk[k], preferred_element_type=jnp.float32)
                adj_prev = adj_prev + jnp.dot(
                    gt_sel[k], err_k, preferred_element_type=jnp.float32)
            grads.append(grad_l)
            # gradient flowing from layer l's reconstruction into r_{l-1}
            grads[l - 1] = grads[l - 1] + (2.0 * c["precision"]) * adj_prev

        # ---- simultaneous gradient-descent update of every layer's r ----
        for l in range(L):
            out_refs[l][...] = rs[l] - cfgs[l]["lr"] * grads[l]

    return kernel


# ---------------------------------------------------------------------------
# Network wrapper
# ---------------------------------------------------------------------------
class PallasPredictiveCodingNetwork:
    def __init__(self, input_size, n_layers, n_causes, kernel_size=3, stride=1,
                 padding=0, k1=0.2, k2=0.1, sigma2=0.1, alpha=0.1, lam=1.0,
                 key=None):
        def _as_list(v):
            return [v] * n_layers if isinstance(v, (int, float)) else list(v)

        n_causes = _as_list(n_causes)
        kernel_size = _as_list(kernel_size)
        stride = _as_list(stride)
        padding = _as_list(padding)
        k1 = _as_list(k1)
        k2 = _as_list(k2)
        sigma2 = _as_list(sigma2)
        alpha = _as_list(alpha)
        lam = _as_list(lam)

        if key is None:
            key = jax.random.PRNGKey(42)
        self._rng_key, ukey = jax.random.split(key)

        self.layers = []
        cur = tuple(input_size)
        for i in range(n_layers):
            ks = kernel_size[i]
            ks = (ks, ks) if isinstance(ks, int) else tuple(ks)
            st = stride[i]
            st = (st, st) if isinstance(st, int) else tuple(st)
            pd = padding[i]
            pd = (pd, pd) if isinstance(pd, int) else tuple(pd)
            # TODO(synk): nonzero padding (zero-padded Unfold/Fold) not implemented.
            assert pd == (0, 0)
            ph = (cur[1] - ks[0]) // st[0] + 1
            pw = (cur[2] - ks[1]) // st[1] + 1
            ukey, sub = jax.random.split(ukey)
            # deterministic synthetic init of U (torch.randn analogue)
            U = jax.random.normal(sub, (n_causes[i], cur[0], ks[0], ks[1]),
                                  dtype=jnp.float32)
            KK = ks[0] * ks[1]
            # (kernel-offset, channel) column order (matches _unfold_kc / blocks)
            U2_kc = jnp.transpose(U, (0, 2, 3, 1)).reshape(n_causes[i], KK * cur[0])
            self.layers.append(dict(
                input_size=cur, n_causes=int(n_causes[i]), kernel_size=ks,
                stride=st, ph=int(ph), pw=int(pw), k1=float(k1[i]),
                k2=float(k2[i]), sigma2=float(sigma2[i]), alpha=float(alpha[i]),
                lam=float(lam[i]), U=U,
                U2_kc=U2_kc, U2T_kc=jnp.transpose(U2_kc),
                U2_blk=jnp.transpose(U, (2, 3, 0, 1)).reshape(KK, n_causes[i], cur[0]),
                U2T_blk=jnp.transpose(U, (2, 3, 1, 0)).reshape(KK, cur[0], n_causes[i])))
            cur = (n_causes[i], ph, pw)
        self.rs = None
        self._run_cache = {}

    # -- fused runner, built once per (batch, timesteps) ----------------------
    def _get_run(self, B, timesteps):
        key = (B, timesteps)
        entry = self._run_cache.get(key)
        if entry is None:
            entry = self._build_run(B, timesteps)
            self._run_cache[key] = entry
        return entry

    def _build_run(self, B, timesteps):
        L = len(self.layers)
        cfgs = []
        for lay in self.layers:
            P = lay["ph"] * lay["pw"]
            cfgs.append(dict(
                nc=int(lay["n_causes"]), BP=int(B * P),
                KK=int(lay["kernel_size"][0] * lay["kernel_size"][1]),
                ks=lay["kernel_size"], st=lay["stride"],
                precision=1.0 / lay["sigma2"],
                prior_coef=2.0 * lay["alpha"] / float(B * lay["n_causes"] * P),
                lr=lay["k1"] / 2.0))

        c0 = cfgs[0]
        D0 = int(self.layers[0]["U2_kc"].shape[1])

        in_specs = [
            _whole_block_spec((c0["BP"], D0)),          # pat0
            _whole_block_spec((c0["BP"], c0["nc"])),    # r_init layer 0
            _whole_block_spec((c0["nc"], D0)),          # U2_0
            _whole_block_spec((D0, c0["nc"])),          # U2T_0
        ]
        const_args = [self.layers[0]["U2_kc"], self.layers[0]["U2T_kc"]]
        for l in range(1, L):
            c, cp = cfgs[l], cfgs[l - 1]
            lay, prev = self.layers[l], self.layers[l - 1]
            G, GT = _build_selectors(B, prev["ph"], prev["pw"], lay["ph"],
                                     lay["pw"], lay["kernel_size"], lay["stride"])
            const_args += [lay["U2_blk"], lay["U2T_blk"], G, GT]
            in_specs += [
                _whole_block_spec((c["BP"], c["nc"])),              # r_init layer l
                _whole_block_spec((c["KK"], c["nc"], cp["nc"])),    # U2 blocks
                _whole_block_spec((c["KK"], cp["nc"], c["nc"])),    # U2T blocks
                _whole_block_spec((c["KK"], c["BP"], cp["BP"])),    # unfold selectors
                _whole_block_spec((c["KK"], cp["BP"], c["BP"])),    # fold-adjoint selectors
            ]
        const_args = tuple(const_args)

        out_specs = tuple(_whole_block_spec((c["BP"], c["nc"])) for c in cfgs)
        out_shape = tuple(jax.ShapeDtypeStruct((c["BP"], c["nc"]), jnp.float32)
                          for c in cfgs)

        step_call = pl.pallas_call(
            _make_fused_kernel(cfgs),
            grid=(timesteps,),
            in_specs=in_specs,
            out_specs=out_specs,
            out_shape=out_shape,
            compiler_params=pltpu.CompilerParams(
                dimension_semantics=("arbitrary",)),
        )

        ks0, st0 = cfgs[0]["ks"], cfgs[0]["st"]

        def run(x, r_init_T, consts):
            # layer-0 patches depend only on x -> computed once, outside the loop
            pat0 = _unfold_kc(x.astype(jnp.float32), ks0, st0)     # (BP0, D0)
            args = [pat0, r_init_T[0], consts[0], consts[1]]
            ci = 2
            for l in range(1, L):
                args.append(r_init_T[l])
                args.extend(consts[ci:ci + 4])
                ci += 4
            return step_call(*args)

        return jax.jit(run), const_args

    # -- public forward -------------------------------------------------------
    def forward(self, x, timesteps=1, train_U=False, r_init=None):
        # TODO(synk): train_U=True (U update) and the loss bookkeeping used only
        # for the torch progress bar are not implemented.
        x = jnp.asarray(x, jnp.float32)
        B = int(x.shape[0])

        if r_init is None:
            r_init = []
            key = self._rng_key
            for lay in self.layers:
                key, sub = jax.random.split(key)
                r = jax.random.uniform(sub, (B, lay["n_causes"], lay["ph"], lay["pw"]),
                                       dtype=jnp.float32)
                r_init.append(r / jnp.sum(r, axis=1, keepdims=True))
            self._rng_key = key
        else:
            assert len(r_init) == len(self.layers)

        r_init = [jnp.asarray(r, jnp.float32) for r in r_init]
        # transposed, lane-dense (B*P, nc) layout used inside the kernel
        r_init_T = tuple(
            jnp.transpose(r, (0, 2, 3, 1)).reshape(
                B * lay["ph"] * lay["pw"], lay["n_causes"])
            for r, lay in zip(r_init, self.layers))

        timesteps = int(timesteps)
        if timesteps <= 0:
            self.rs = list(r_init)
            return x

        run, const_args = self._get_run(B, timesteps)
        outs = run(x, r_init_T, const_args)

        # expose r in the torch layout (B, nc, ph, pw)
        self.rs = [
            jnp.transpose(o.reshape(B, lay["ph"], lay["pw"], lay["n_causes"]),
                          (0, 3, 1, 2))
            for o, lay in zip(outs, self.layers)]
        return x  # torch forward returns the (unchanged) input


# ---------------------------------------------------------------------------
# Pure-JAX reference (torch semantics, torch unfold ordering) for validation
# ---------------------------------------------------------------------------
def _reference_forward(layers, x, r_init, timesteps):
    B = x.shape[0]
    x = jnp.asarray(x, jnp.float32)
    rs = [jnp.asarray(r, jnp.float32) for r in r_init]
    L = len(layers)

    def unfold_t(img, ks, st):
        Bb, C, H, W = img.shape
        kh, kw = ks
        sh, sw = st
        ph = (H - kh) // sh + 1
        pw = (W - kw) // sw + 1
        blocks = []
        for a in range(kh):
            for b in range(kw):
                win = img[:, :, a:a + sh * (ph - 1) + 1:sh,
                          b:b + sw * (pw - 1) + 1:sw]          # (B, C, ph, pw)
                blocks.append(win.reshape(Bb, C, 1, ph * pw))
        pat = jnp.concatenate(blocks, axis=2)                  # (B, C, KK, P)
        return pat.reshape(Bb, C * kh * kw, ph * pw)           # torch nn.Unfold order

    def fold_adj(g, out_hw, ks, st):
        Bb = g.shape[0]
        kh, kw = ks
        sh, sw = st
        H, W = out_hw
        ph = (H - kh) // sh + 1
        pw = (W - kw) // sw + 1
        C = g.shape[1] // (kh * kw)
        g = g.reshape(Bb, C, kh, kw, ph, pw)
        out = jnp.zeros((Bb, C, H, W), g.dtype)
        for i in range(ph):
            for j in range(pw):
                out = out.at[:, :, i * sh:i * sh + kh, j * sw:j * sw + kw].add(
                    g[:, :, :, :, i, j])
        return out

    for _ in range(timesteps):
        pats, grads, gps = [], [], [None] * L
        for l, lay in enumerate(layers):
            inp = x if l == 0 else rs[l - 1]
            pats.append(unfold_t(inp, lay["kernel_size"], lay["stride"]))
        for l, lay in enumerate(layers):
            nc, ph, pw = lay["n_causes"], lay["ph"], lay["pw"]
            P = ph * pw
            U2 = lay["U"].reshape(nc, -1)
            r2 = rs[l].reshape(B, nc, P)
            pred = jnp.tanh(jnp.einsum("nd,bnp->bdp", U2, r2))
            err = pats[l] - pred
            gpre = err * (1.0 - pred * pred)
            prec = 1.0 / lay["sigma2"]
            coef = 2.0 * lay["alpha"] / (B * nc * P)
            grad = -2.0 * prec * jnp.einsum("nd,bdp->bnp", U2, gpre) + coef * r2
            grads.append(grad.reshape(B, nc, ph, pw))
            if l > 0:
                gps[l] = 2.0 * prec * err
        for l in range(L - 1):
            nxt = layers[l + 1]
            grads[l] = grads[l] + fold_adj(
                gps[l + 1], (nxt["input_size"][1], nxt["input_size"][2]),
                nxt["kernel_size"], nxt["stride"])
        rs = [rs[l] - (layers[l]["k1"] / 2.0) * grads[l] for l in range(L)]
    return rs


# ---------------------------------------------------------------------------
if __name__ == "__main__":
    key = jax.random.PRNGKey(0)
    kx, kmodel, kr = jax.random.split(key, 3)
    B = 2
    x = jax.random.normal(kx, (B, 3, 16, 16), dtype=jnp.float32)

    model = PallasPredictiveCodingNetwork(
        input_size=(3, 16, 16), n_layers=2, n_causes=[20, 50],
        kernel_size=[[5, 5], [3, 3]], stride=[3, 2], padding=0,
        lam=0.1, alpha=0.1, k1=0.005, k2=0.05, sigma2=10.0, key=kmodel)

    # explicit r_init (torch.rand analogue, normalized over causes) so that the
    # Pallas kernel can be checked against the pure-JAX reference
    r_init = []
    kk = kr
    for lay in model.layers:
        kk, sub = jax.random.split(kk)
        r = jax.random.uniform(sub, (B, lay["n_causes"], lay["ph"], lay["pw"]),
                               dtype=jnp.float32)
        r_init.append(r / jnp.sum(r, axis=1, keepdims=True))

    timesteps = 5
    out = model.forward(x, timesteps=timesteps, train_U=False, r_init=r_init)
    out = jax.block_until_ready(out)
    rs = [jax.block_until_ready(r) for r in model.rs]

    rs_ref = _reference_forward(model.layers, x, r_init, timesteps)
    for got, ref in zip(rs, rs_ref):
        np.testing.assert_allclose(np.asarray(got), np.asarray(ref),
                                   rtol=1e-3, atol=1e-4)

    print("KERNEL_OK")
</pallas_src>

<mosaic_0001>
module attributes {stable_mosaic.version = 11 : i64} {
  func.func @kernel(%arg0: i32, %arg1: memref<32x75xf32, #tpu.memory_space<vmem>>, %arg2: memref<32x20xf32, #tpu.memory_space<vmem>>, %arg3: memref<20x75xf32, #tpu.memory_space<vmem>>, %arg4: memref<75x20xf32, #tpu.memory_space<vmem>>, %arg5: memref<2x50xf32, #tpu.memory_space<vmem>>, %arg6: memref<9x50x20xf32, #tpu.memory_space<vmem>>, %arg7: memref<9x20x50xf32, #tpu.memory_space<vmem>>, %arg8: memref<9x2x32xf32, #tpu.memory_space<vmem>>, %arg9: memref<9x32x2xf32, #tpu.memory_space<vmem>>, %arg10: memref<32x20xf32, #tpu.memory_space<vmem>>, %arg11: memref<2x50xf32, #tpu.memory_space<vmem>>) attributes {dimension_semantics = [#tpu.dimension_semantics<arbitrary>], iteration_bounds = array<i64: 5>, scalar_prefetch = 0 : i64, scratch_operands = 0 : i64, tpu.core_type = #tpu.core_type<tc>, window_params = [{pipeline_mode = #tpu.pipeline_mode<synchronous>, transform_indices = @transform_0, window_bounds = array<i64: 32, 75>}, {pipeline_mode = #tpu.pipeline_mode<synchronous>, transform_indices = @transform_1, window_bounds = array<i64: 32, 20>}, {pipeline_mode = #tpu.pipeline_mode<synchronous>, transform_indices = @transform_2, window_bounds = array<i64: 20, 75>}, {pipeline_mode = #tpu.pipeline_mode<synchronous>, transform_indices = @transform_3, window_bounds = array<i64: 75, 20>}, {pipeline_mode = #tpu.pipeline_mode<synchronous>, transform_indices = @transform_4, window_bounds = array<i64: 2, 50>}, {pipeline_mode = #tpu.pipeline_mode<synchronous>, transform_indices = @transform_5, window_bounds = array<i64: 9, 50, 20>}, {pipeline_mode = #tpu.pipeline_mode<synchronous>, transform_indices = @transform_6, window_bounds = array<i64: 9, 20, 50>}, {pipeline_mode = #tpu.pipeline_mode<synchronous>, transform_indices = @transform_7, window_bounds = array<i64: 9, 2, 32>}, {pipeline_mode = #tpu.pipeline_mode<synchronous>, transform_indices = @transform_8, window_bounds = array<i64: 9, 32, 2>}, {pipeline_mode = #tpu.pipeline_mode<synchronous>, transform_indices = @transform_9, window_bounds = array<i64: 32, 20>}, {pipeline_mode = #tpu.pipeline_mode<synchronous>, transform_indices = @transform_10, window_bounds = array<i64: 2, 50>}]} {
    %c0_i32 = arith.constant 0 : i32
    %0 = arith.cmpi eq, %arg0, %c0_i32 : i32
    %1 = arith.extui %0 : i1 to i32
    %c0_i32_0 = arith.constant 0 : i32
    %2 = arith.cmpi ne, %1, %c0_i32_0 : i32
    scf.if %2 {
      %c0_177 = arith.constant 0 : index
      %c0_178 = arith.constant 0 : index
      %233 = vector.load %arg2[%c0_177, %c0_178] : memref<32x20xf32, #tpu.memory_space<vmem>>, vector<32x20xf32>
      %c0_179 = arith.constant 0 : index
      %c0_180 = arith.constant 0 : index
      %234 = vector.load %arg10[%c0_179, %c0_180] : memref<32x20xf32, #tpu.memory_space<vmem>>, vector<32x20xf32>
      tpu.vector_store %arg10[%c0_179, %c0_180], %233 {strides = array<i32>} : memref<32x20xf32, #tpu.memory_space<vmem>>, vector<32x20xf32>,
      %c0_181 = arith.constant 0 : index
      %c0_182 = arith.constant 0 : index
      %235 = vector.load %arg5[%c0_181, %c0_182] : memref<2x50xf32, #tpu.memory_space<vmem>>, vector<2x50xf32>
      %c0_183 = arith.constant 0 : index
      %c0_184 = arith.constant 0 : index
      %236 = vector.load %arg11[%c0_183, %c0_184] : memref<2x50xf32, #tpu.memory_space<vmem>>, vector<2x50xf32>
      tpu.vector_store %arg11[%c0_183, %c0_184], %235 {strides = array<i32>} : memref<2x50xf32, #tpu.memory_space<vmem>>, vector<2x50xf32>,
    } else {
    }
    %c0 = arith.constant 0 : index
    %c0_1 = arith.constant 0 : index
    %3 = vector.load %arg10[%c0, %c0_1] : memref<32x20xf32, #tpu.memory_space<vmem>>, vector<32x20xf32>
    %c0_2 = arith.constant 0 : index
    %c0_3 = arith.constant 0 : index
    %4 = vector.load %arg11[%c0_2, %c0_3] : memref<2x50xf32, #tpu.memory_space<vmem>>, vector<2x50xf32>
    %c0_4 = arith.constant 0 : index
    %c0_5 = arith.constant 0 : index
    %5 = vector.load %arg3[%c0_4, %c0_5] : memref<20x75xf32, #tpu.memory_space<vmem>>, vector<20x75xf32>
    %cst = arith.constant dense<0.000000e+00> : vector<32x75xf32>
    %6 = tpu.matmul %3, %5, %cst {dimension_numbers = #tpu.dot_dimension_numbers<[1], [0], [0], [1], [0, 0, 1, 1], [], []>} : vector<32x20xf32>, vector<20x75xf32>, vector<32x75xf32> -> vector<32x75xf32>
    %7 = math.tanh %6 : vector<32x75xf32>
    %c0_6 = arith.constant 0 : index
    %c0_7 = arith.constant 0 : index
    %8 = vector.load %arg1[%c0_6, %c0_7] : memref<32x75xf32, #tpu.memory_space<vmem>>, vector<32x75xf32>
    %9 = arith.subf %8, %7 : vector<32x75xf32>
    %10 = arith.mulf %7, %7 : vector<32x75xf32>
    %cst_8 = arith.constant 1.000000e+00 : f32
    %11 = vector.broadcast %cst_8 : f32 to vector<32x75xf32>
    %12 = arith.subf %11, %10 : vector<32x75xf32>
    %13 = arith.mulf %9, %12 : vector<32x75xf32>
    %c0_9 = arith.constant 0 : index
    %c0_10 = arith.constant 0 : index
    %14 = vector.load %arg4[%c0_9, %c0_10] : memref<75x20xf32, #tpu.memory_space<vmem>>, vector<75x20xf32>
    %cst_11 = arith.constant dense<0.000000e+00> : vector<32x20xf32>
    %15 = tpu.matmul %13, %14, %cst_11 {dimension_numbers = #tpu.dot_dimension_numbers<[1], [0], [0], [1], [0, 0, 1, 1], [], []>} : vector<32x75xf32>, vector<75x20xf32>, vector<32x20xf32> -> vector<32x20xf32>
    %cst_12 = arith.constant -2.000000e-01 : f32
    %16 = vector.broadcast %cst_12 : f32 to vector<32x20xf32>
    %17 = arith.mulf %16, %15 : vector<32x20xf32>
    %cst_13 = arith.constant 3.125000e-04 : f32
    %18 = vector.broadcast %cst_13 : f32 to vector<32x20xf32>
    %19 = arith.mulf %18, %3 : vector<32x20xf32>
    %20 = arith.addf %17, %19 : vector<32x20xf32>
    %cst_14 = arith.constant 2.000000e-03 : f32
    %21 = vector.broadcast %cst_14 : f32 to vector<2x50xf32>
    %22 = arith.mulf %21, %4 : vector<2x50xf32>
    %cst_15 = arith.constant 0.000000e+00 : f32
    %23 = vector.broadcast %cst_15 : f32 to vector<32x20xf32>
    %c0_16 = arith.constant 0 : index
    %c0_17 = arith.constant 0 : index
    %c0_18 = arith.constant 0 : index
    %24 = vector.load %arg8[%c0_16, %c0_17, %c0_18] : memref<9x2x32xf32, #tpu.memory_space<vmem>>, vector<1x2x32xf32>
    %25 = vector.shape_cast %24 : vector<1x2x32xf32> to vector<2x32xf32>
    %cst_19 = arith.constant dense<0.000000e+00> : vector<2x20xf32>
    %26 = tpu.matmul %25, %3, %cst_19 {dimension_numbers = #tpu.dot_dimension_numbers<[1], [0], [0], [1], [0, 0, 1, 1], [], []>} : vector<2x32xf32>, vector<32x20xf32>, vector<2x20xf32> -> vector<2x20xf32>
    %c0_20 = arith.constant 0 : index
    %c0_21 = arith.constant 0 : index
    %c0_22 = arith.constant 0 : index
    %27 = vector.load %arg6[%c0_20, %c0_21, %c0_22] : memref<9x50x20xf32, #tpu.memory_space<vmem>>, vector<1x50x20xf32>
    %28 = vector.shape_cast %27 : vector<1x50x20xf32> to vector<50x20xf32>
    %cst_23 = arith.constant dense<0.000000e+00> : vector<2x20xf32>
    %29 = tpu.matmul %4, %28, %cst_23 {dimension_numbers = #tpu.dot_dimension_numbers<[1], [0], [0], [1], [0, 0, 1, 1], [], []>} : vector<2x50xf32>, vector<50x20xf32>, vector<2x20xf32> -> vector<2x20xf32>
    %30 = math.tanh %29 : vector<2x20xf32>
    %31 = arith.subf %26, %30 : vector<2x20xf32>
    %32 = arith.mulf %30, %30 : vector<2x20xf32>
    %cst_24 = arith.constant 1.000000e+00 : f32
    %33 = vector.broadcast %cst_24 : f32 to vector<2x20xf32>
    %34 = arith.subf %33, %32 : vector<2x20xf32>
    %35 = arith.mulf %31, %34 : vector<2x20xf32>
    %c0_25 = arith.constant 0 : index
    %c0_26 = arith.constant 0 : index
    %c0_27 = arith.constant 0 : index
    %36 = vector.load %arg7[%c0_25, %c0_26, %c0_27] : memref<9x20x50xf32, #tpu.memory_space<vmem>>, vector<1x20x50xf32>
    %37 = vector.shape_cast %36 : vector<1x20x50xf32> to vector<20x50xf32>
    %cst_28 = arith.constant dense<0.000000e+00> : vector<2x50xf32>
    %38 = tpu.matmul %35, %37, %cst_28 {dimension_numbers = #tpu.dot_dimension_numbers<[1], [0], [0], [1], [0, 0, 1, 1], [], []>} : vector<2x20xf32>, vector<20x50xf32>, vector<2x50xf32> -> vector<2x50xf32>
    %cst_29 = arith.constant -2.000000e-01 : f32
    %39 = vector.broadcast %cst_29 : f32 to vector<2x50xf32>
    %40 = arith.mulf %39, %38 : vector<2x50xf32>
    %41 = arith.addf %22, %40 : vector<2x50xf32>
    %c0_30 = arith.constant 0 : index
    %c0_31 = arith.constant 0 : index
    %c0_32 = arith.constant 0 : index
    %42 = vector.load %arg9[%c0_30, %c0_31, %c0_32] : memref<9x32x2xf32, #tpu.memory_space<vmem>>, vector<1x32x2xf32>
    %43 = vector.shape_cast %42 : vector<1x32x2xf32> to vector<32x2xf32>
    %cst_33 = arith.constant dense<0.000000e+00> : vector<32x20xf32>
    %44 = tpu.matmul %43, %31, %cst_33 {dimension_numbers = #tpu.dot_dimension_numbers<[1], [0], [0], [1], [0, 0, 1, 1], [], []>} : vector<32x2xf32>, vector<2x20xf32>, vector<32x20xf32> -> vector<32x20xf32>
    %45 = arith.addf %23, %44 : vector<32x20xf32>
    %c1 = arith.constant 1 : index
    %c0_34 = arith.constant 0 : index
    %c0_35 = arith.constant 0 : index
    %46 = vector.load %arg8[%c1, %c0_34, %c0_35] : memref<9x2x32xf32, #tpu.memory_space<vmem>>, vector<1x2x32xf32>
    %47 = vector.shape_cast %46 : vector<1x2x32xf32> to vector<2x32xf32>
    %cst_36 = arith.constant dense<0.000000e+00> : vector<2x20xf32>
    %48 = tpu.matmul %47, %3, %cst_36 {dimension_numbers = #tpu.dot_dimension_numbers<[1], [0], [0], [1], [0, 0, 1, 1], [], []>} : vector<2x32xf32>, vector<32x20xf32>, vector<2x20xf32> -> vector<2x20xf32>
    %c1_37 = arith.constant 1 : index
    %c0_38 = arith.constant 0 : index
    %c0_39 = arith.constant 0 : index
    %49 = vector.load %arg6[%c1_37, %c0_38, %c0_39] : memref<9x50x20xf32, #tpu.memory_space<vmem>>, vector<1x50x20xf32>
    %50 = vector.shape_cast %49 : vector<1x50x20xf32> to vector<50x20xf32>
    %cst_40 = arith.constant dense<0.000000e+00> : vector<2x20xf32>
    %51 = tpu.matmul %4, %50, %cst_40 {dimension_numbers = #tpu.dot_dimension_numbers<[1], [0], [0], [1], [0, 0, 1, 1], [], []>} : vector<2x50xf32>, vector<50x20xf32>, vector<2x20xf32> -> vector<2x20xf32>
    %52 = math.tanh %51 : vector<2x20xf32>
    %53 = arith.subf %48, %52 : vector<2x20xf32>
    %54 = arith.mulf %52, %52 : vector<2x20xf32>
    %cst_41 = arith.constant 1.000000e+00 : f32
    %55 = vector.broadcast %cst_41 : f32 to vector<2x20xf32>
    %56 = arith.subf %55, %54 : vector<2x20xf32>
    %57 = arith.mulf %53, %56 : vector<2x20xf32>
    %c1_42 = arith.constant 1 : index
    %c0_43 = arith.constant 0 : index
    %c0_44 = arith.constant 0 : index
    %58 = vector.load %arg7[%c1_42, %c0_43, %c0_44] : memref<9x20x50xf32, #tpu.memory_space<vmem>>, vector<1x20x50xf32>
    %59 = vector.shape_cast %58 : vector<1x20x50xf32> to vector<20x50xf32>
    %cst_45 = arith.constant dense<0.000000e+00> : vector<2x50xf32>
    %60 = tpu.matmul %57, %59, %cst_45 {dimension_numbers = #tpu.dot_dimension_numbers<[1], [0], [0], [1], [0, 0, 1, 1], [], []>} : vector<2x20xf32>, vector<20x50xf32>, vector<2x50xf32> -> vector<2x50xf32>
    %cst_46 = arith.constant -2.000000e-01 : f32
    %61 = vector.broadcast %cst_46 : f32 to vector<2x50xf32>
    %62 = arith.mulf %61, %60 : vector<2x50xf32>
    %63 = arith.addf %41, %62 : vector<2x50xf32>
    %c1_47 = arith.constant 1 : index
    %c0_48 = arith.constant 0 : index
    %c0_49 = arith.constant 0 : index
    %64 = vector.load %arg9[%c1_47, %c0_48, %c0_49] : memref<9x32x2xf32, #tpu.memory_space<vmem>>, vector<1x32x2xf32>
    %65 = vector.shape_cast %64 : vector<1x32x2xf32> to vector<32x2xf32>
    %cst_50 = arith.constant dense<0.000000e+00> : vector<32x20xf32>
    %66 = tpu.matmul %65, %53, %cst_50 {dimension_numbers = #tpu.dot_dimension_numbers<[1], [0], [0], [1], [0, 0, 1, 1], [], []>} : vector<32x2xf32>, vector<2x20xf32>, vector<32x20xf32> -> vector<32x20xf32>
    %67 = arith.addf %45, %66 : vector<32x20xf32>
    %c2 = arith.constant 2 : index
    %c0_51 = arith.constant 0 : index
    %c0_52 = arith.constant 0 : index
    %68 = vector.load %arg8[%c2, %c0_51, %c0_52] : memref<9x2x32xf32, #tpu.memory_space<vmem>>, vector<1x2x32xf32>
    %69 = vector.shape_cast %68 : vector<1x2x32xf32> to vector<2x32xf32>
    %cst_53 = arith.constant dense<0.000000e+00> : vector<2x20xf32>
    %70 = tpu.matmul %69, %3, %cst_53 {dimension_numbers = #tpu.dot_dimension_numbers<[1], [0], [0], [1], [0, 0, 1, 1], [], []>} : vector<2x32xf32>, vector<32x20xf32>, vector<2x20xf32> -> vector<2x20xf32>
    %c2_54 = arith.constant 2 : index
    %c0_55 = arith.constant 0 : index
    %c0_56 = arith.constant 0 : index
    %71 = vector.load %arg6[%c2_54, %c0_55, %c0_56] : memref<9x50x20xf32, #tpu.memory_space<vmem>>, vector<1x50x20xf32>
    %72 = vector.shape_cast %71 : vector<1x50x20xf32> to vector<50x20xf32>
    %cst_57 = arith.constant dense<0.000000e+00> : vector<2x20xf32>
    %73 = tpu.matmul %4, %72, %cst_57 {dimension_numbers = #tpu.dot_dimension_numbers<[1], [0], [0], [1], [0, 0, 1, 1], [], []>} : vector<2x50xf32>, vector<50x20xf32>, vector<2x20xf32> -> vector<2x20xf32>
    %74 = math.tanh %73 : vector<2x20xf32>
    %75 = arith.subf %70, %74 : vector<2x20xf32>
    %76 = arith.mulf %74, %74 : vector<2x20xf32>
    %cst_58 = arith.constant 1.000000e+00 : f32
    %77 = vector.broadcast %cst_58 : f32 to vector<2x20xf32>
    %78 = arith.subf %77, %76 : vector<2x20xf32>
    %79 = arith.mulf %75, %78 : vector<2x20xf32>
    %c2_59 = arith.constant 2 : index
    %c0_60 = arith.constant 0 : index
    %c0_61 = arith.constant 0 : index
    %80 = vector.load %arg7[%c2_59, %c0_60, %c0_61] : memref<9x20x50xf32, #tpu.memory_space<vmem>>, vector<1x20x50xf32>
    %81 = vector.shape_cast %80 : vector<1x20x50xf32> to vector<20x50xf32>
    %cst_62 = arith.constant dense<0.000000e+00> : vector<2x50xf32>
    %82 = tpu.matmul %79, %81, %cst_62 {dimension_numbers = #tpu.dot_dimension_numbers<[1], [0], [0], [1], [0, 0, 1, 1], [], []>} : vector<2x20xf32>, vector<20x50xf32>, vector<2x50xf32> -> vector<2x50xf32>
    %cst_63 = arith.constant -2.000000e-01 : f32
    %83 = vector.broadcast %cst_63 : f32 to vector<2x50xf32>
    %84 = arith.mulf %83, %82 : vector<2x50xf32>
    %85 = arith.addf %63, %84 : vector<2x50xf32>
    %c2_64 = arith.constant 2 : index
    %c0_65 = arith.constant 0 : index
    %c0_66 = arith.constant 0 : index
    %86 = vector.load %arg9[%c2_64, %c0_65, %c0_66] : memref<9x32x2xf32, #tpu.memory_space<vmem>>, vector<1x32x2xf32>
    %87 = vector.shape_cast %86 : vector<1x32x2xf32> to vector<32x2xf32>
    %cst_67 = arith.constant dense<0.000000e+00> : vector<32x20xf32>
    %88 = tpu.matmul %87, %75, %cst_67 {dimension_numbers = #tpu.dot_dimension_numbers<[1], [0], [0], [1], [0, 0, 1, 1], [], []>} : vector<32x2xf32>, vector<2x20xf32>, vector<32x20xf32> -> vector<32x20xf32>
    %89 = arith.addf %67, %88 : vector<32x20xf32>
    %c3 = arith.constant 3 : index
    %c0_68 = arith.constant 0 : index
    %c0_69 = arith.constant 0 : index
    %90 = vector.load %arg8[%c3, %c0_68, %c0_69] : memref<9x2x32xf32, #tpu.memory_space<vmem>>, vector<1x2x32xf32>
    %91 = vector.shape_cast %90 : vector<1x2x32xf32> to vector<2x32xf32>
    %cst_70 = arith.constant dense<0.000000e+00> : vector<2x20xf32>
    %92 = tpu.matmul %91, %3, %cst_70 {dimension_numbers = #tpu.dot_dimension_numbers<[1], [0], [0], [1], [0, 0, 1, 1], [], []>} : vector<2x32xf32>, vector<32x20xf32>, vector<2x20xf32> -> vector<2x20xf32>
    %c3_71 = arith.constant 3 : index
    %c0_72 = arith.constant 0 : index
    %c0_73 = arith.constant 0 : index
    %93 = vector.load %arg6[%c3_71, %c0_72, %c0_73] : memref<9x50x20xf32, #tpu.memory_space<vmem>>, vector<1x50x20xf32>
    %94 = vector.shape_cast %93 : vector<1x50x20xf32> to vector<50x20xf32>
    %cst_74 = arith.constant dense<0.000000e+00> : vector<2x20xf32>
    %95 = tpu.matmul %4, %94, %cst_74 {dimension_numbers = #tpu.dot_dimension_numbers<[1], [0], [0], [1], [0, 0, 1, 1], [], []>} : vector<2x50xf32>, vector<50x20xf32>, vector<2x20xf32> -> vector<2x20xf32>
    %96 = math.tanh %95 : vector<2x20xf32>
    %97 = arith.subf %92, %96 : vector<2x20xf32>
    %98 = arith.mulf %96, %96 : vector<2x20xf32>
    %cst_75 = arith.constant 1.000000e+00 : f32
    %99 = vector.broadcast %cst_75 : f32 to vector<2x20xf32>
    %100 = arith.subf %99, %98 : vector<2x20xf32>
    %101 = arith.mulf %97, %100 : vector<2x20xf32>
    %c3_76 = arith.constant 3 : index
    %c0_77 = arith.constant 0 : index
    %c0_78 = arith.constant 0 : index
    %102 = vector.load %arg7[%c3_76, %c0_77, %c0_78] : memref<9x20x50xf32, #tpu.memory_space<vmem>>, vector<1x20x50xf32>
    %103 = vector.shape_cast %102 : vector<1x20x50xf32> to vector<20x50xf32>
    %cst_79 = arith.constant dense<0.000000e+00> : vector<2x50xf32>
    %104 = tpu.matmul %101, %103, %cst_79 {dimension_numbers = #tpu.dot_dimension_numbers<[1], [0], [0], [1], [0, 0, 1, 1], [], []>} : vector<2x20xf32>, vector<20x50xf32>, vector<2x50xf32> -> vector<2x50xf32>
    %cst_80 = arith.constant -2.000000e-01 : f32
    %105 = vector.broadcast %cst_80 : f32 to vector<2x50xf32>
    %106 = arith.mulf %105, %104 : vector<2x50xf32>
    %107 = arith.addf %85, %106 : vector<2x50xf32>
    %c3_81 = arith.constant 3 : index
    %c0_82 = arith.constant 0 : index
    %c0_83 = arith.constant 0 : index
    %108 = vector.load %arg9[%c3_81, %c0_82, %c0_83] : memref<9x32x2xf32, #tpu.memory_space<vmem>>, vector<1x32x2xf32>
    %109 = vector.shape_cast %108 : vector<1x32x2xf32> to vector<32x2xf32>
    %cst_84 = arith.constant dense<0.000000e+00> : vector<32x20xf32>
    %110 = tpu.matmul %109, %97, %cst_84 {dimension_numbers = #tpu.dot_dimension_numbers<[1], [0], [0], [1], [0, 0, 1, 1], [], []>} : vector<32x2xf32>, vector<2x20xf32>, vector<32x20xf32> -> vector<32x20xf32>
    %111 = arith.addf %89, %110 : vector<32x20xf32>
    %c4 = arith.constant 4 : index
    %c0_85 = arith.constant 0 : index
    %c0_86 = arith.constant 0 : index
    %112 = vector.load %arg8[%c4, %c0_85, %c0_86] : memref<9x2x32xf32, #tpu.memory_space<vmem>>, vector<1x2x32xf32>
    %113 = vector.shape_cast %112 : vector<1x2x32xf32> to vector<2x32xf32>
    %cst_87 = arith.constant dense<0.000000e+00> : vector<2x20xf32>
    %114 = tpu.matmul %113, %3, %cst_87 {dimension_numbers = #tpu.dot_dimension_numbers<[1], [0], [0], [1], [0, 0, 1, 1], [], []>} : vector<2x32xf32>, vector<32x20xf32>, vector<2x20xf32> -> vector<2x20xf32>
    %c4_88 = arith.constant 4 : index
    %c0_89 = arith.constant 0 : index
    %c0_90 = arith.constant 0 : index
    %115 = vector.load %arg6[%c4_88, %c0_89, %c0_90] : memref<9x50x20xf32, #tpu.memory_space<vmem>>, vector<1x50x20xf32>
    %116 = vector.shape_cast %115 : vector<1x50x20xf32> to vector<50x20xf32>
    %cst_91 = arith.constant dense<0.000000e+00> : vector<2x20xf32>
    %117 = tpu.matmul %4, %116, %cst_91 {dimension_numbers = #tpu.dot_dimension_numbers<[1], [0], [0], [1], [0, 0, 1, 1], [], []>} : vector<2x50xf32>, vector<50x20xf32>, vector<2x20xf32> -> vector<2x20xf32>
    %118 = math.tanh %117 : vector<2x20xf32>
    %119 = arith.subf %114, %118 : vector<2x20xf32>
    %120 = arith.mulf %118, %118 : vector<2x20xf32>
    %cst_92 = arith.constant 1.000000e+00 : f32
    %121 = vector.broadcast %cst_92 : f32 to vector<2x20xf32>
    %122 = arith.subf %121, %120 : vector<2x20xf32>
    %123 = arith.mulf %119, %122 : vector<2x20xf32>
    %c4_93 = arith.constant 4 : index
    %c0_94 = arith.constant 0 : index
    %c0_95 = arith.constant 0 : index
    %124 = vector.load %arg7[%c4_93, %c0_94, %c0_95] : memref<9x20x50xf32, #tpu.memory_space<vmem>>, vector<1x20x50xf32>
    %125 = vector.shape_cast %124 : vector<1x20x50xf32> to vector<20x50xf32>
    %cst_96 = arith.constant dense<0.000000e+00> : vector<2x50xf32>
    %126 = tpu.matmul %123, %125, %cst_96 {dimension_numbers = #tpu.dot_dimension_numbers<[1], [0], [0], [1], [0, 0, 1, 1], [], []>} : vector<2x20xf32>, vector<20x50xf32>, vector<2x50xf32> -> vector<2x50xf32>
    %cst_97 = arith.constant -2.000000e-01 : f32
    %127 = vector.broadcast %cst_97 : f32 to vector<2x50xf32>
    %128 = arith.mulf %127, %126 : vector<2x50xf32>
    %129 = arith.addf %107, %128 : vector<2x50xf32>
    %c4_98 = arith.constant 4 : index
    %c0_99 = arith.constant 0 : index
    %c0_100 = arith.constant 0 : index
    %130 = vector.load %arg9[%c4_98, %c0_99, %c0_100] : memref<9x32x2xf32, #tpu.memory_space<vmem>>, vector<1x32x2xf32>
    %131 = vector.shape_cast %130 : vector<1x32x2xf32> to vector<32x2xf32>
    %cst_101 = arith.constant dense<0.000000e+00> : vector<32x20xf32>
    %132 = tpu.matmul %131, %119, %cst_101 {dimension_numbers = #tpu.dot_dimension_numbers<[1], [0], [0], [1], [0, 0, 1, 1], [], []>} : vector<32x2xf32>, vector<2x20xf32>, vector<32x20xf32> -> vector<32x20xf32>
    %133 = arith.addf %111, %132 : vector<32x20xf32>
    %c5 = arith.constant 5 : index
    %c0_102 = arith.constant 0 : index
    %c0_103 = arith.constant 0 : index
    %134 = vector.load %arg8[%c5, %c0_102, %c0_103] : memref<9x2x32xf32, #tpu.memory_space<vmem>>, vector<1x2x32xf32>
    %135 = vector.shape_cast %134 : vector<1x2x32xf32> to vector<2x32xf32>
    %cst_104 = arith.constant dense<0.000000e+00> : vector<2x20xf32>
    %136 = tpu.matmul %135, %3, %cst_104 {dimension_numbers = #tpu.dot_dimension_numbers<[1], [0], [0], [1], [0, 0, 1, 1], [], []>} : vector<2x32xf32>, vector<32x20xf32>, vector<2x20xf32> -> vector<2x20xf32>
    %c5_105 = arith.constant 5 : index
    %c0_106 = arith.constant 0 : index
    %c0_107 = arith.constant 0 : index
    %137 = vector.load %arg6[%c5_105, %c0_106, %c0_107] : memref<9x50x20xf32, #tpu.memory_space<vmem>>, vector<1x50x20xf32>
    %138 = vector.shape_cast %137 : vector<1x50x20xf32> to vector<50x20xf32>
    %cst_108 = arith.constant dense<0.000000e+00> : vector<2x20xf32>
    %139 = tpu.matmul %4, %138, %cst_108 {dimension_numbers = #tpu.dot_dimension_numbers<[1], [0], [0], [1], [0, 0, 1, 1], [], []>} : vector<2x50xf32>, vector<50x20xf32>, vector<2x20xf32> -> vector<2x20xf32>
    %140 = math.tanh %139 : vector<2x20xf32>
    %141 = arith.subf %136, %140 : vector<2x20xf32>
    %142 = arith.mulf %140, %140 : vector<2x20xf32>
    %cst_109 = arith.constant 1.000000e+00 : f32
    %143 = vector.broadcast %cst_109 : f32 to vector<2x20xf32>
    %144 = arith.subf %143, %142 : vector<2x20xf32>
    %145 = arith.mulf %141, %144 : vector<2x20xf32>
    %c5_110 = arith.constant 5 : index
    %c0_111 = arith.constant 0 : index
    %c0_112 = arith.constant 0 : index
    %146 = vector.load %arg7[%c5_110, %c0_111, %c0_112] : memref<9x20x50xf32, #tpu.memory_space<vmem>>, vector<1x20x50xf32>
    %147 = vector.shape_cast %146 : vector<1x20x50xf32> to vector<20x50xf32>
    %cst_113 = arith.constant dense<0.000000e+00> : vector<2x50xf32>
    %148 = tpu.matmul %145, %147, %cst_113 {dimension_numbers = #tpu.dot_dimension_numbers<[1], [0], [0], [1], [0, 0, 1, 1], [], []>} : vector<2x20xf32>, vector<20x50xf32>, vector<2x50xf32> -> vector<2x50xf32>
    %cst_114 = arith.constant -2.000000e-01 : f32
    %149 = vector.broadcast %cst_114 : f32 to vector<2x50xf32>
    %150 = arith.mulf %149, %148 : vector<2x50xf32>
    %151 = arith.addf %129, %150 : vector<2x50xf32>
    %c5_115 = arith.constant 5 : index
    %c0_116 = arith.constant 0 : index
    %c0_117 = arith.constant 0 : index
    %152 = vector.load %arg9[%c5_115, %c0_116, %c0_117] : memref<9x32x2xf32, #tpu.memory_space<vmem>>, vector<1x32x2xf32>
    %153 = vector.shape_cast %152 : vector<1x32x2xf32> to vector<32x2xf32>
    %cst_118 = arith.constant dense<0.000000e+00> : vector<32x20xf32>
    %154 = tpu.matmul %153, %141, %cst_118 {dimension_numbers = #tpu.dot_dimension_numbers<[1], [0], [0], [1], [0, 0, 1, 1], [], []>} : vector<32x2xf32>, vector<2x20xf32>, vector<32x20xf32> -> vector<32x20xf32>
    %155 = arith.addf %133, %154 : vector<32x20xf32>
    %c6 = arith.constant 6 : index
    %c0_119 = arith.constant 0 : index
    %c0_120 = arith.constant 0 : index
    %156 = vector.load %arg8[%c6, %c0_119, %c0_120] : memref<9x2x32xf32, #tpu.memory_space<vmem>>, vector<1x2x32xf32>
    %157 = vector.shape_cast %156 : vector<1x2x32xf32> to vector<2x32xf32>
    %cst_121 = arith.constant dense<0.000000e+00> : vector<2x20xf32>
    %158 = tpu.matmul %157, %3, %cst_121 {dimension_numbers = #tpu.dot_dimension_numbers<[1], [0], [0], [1], [0, 0, 1, 1], [], []>} : vector<2x32xf32>, vector<32x20xf32>, vector<2x20xf32> -> vector<2x20xf32>
    %c6_122 = arith.constant 6 : index
    %c0_123 = arith.constant 0 : index
    %c0_124 = arith.constant 0 : index
    %159 = vector.load %arg6[%c6_122, %c0_123, %c0_124] : memref<9x50x20xf32, #tpu.memory_space<vmem>>, vector<1x50x20xf32>
    %160 = vector.shape_cast %159 : vector<1x50x20xf32> to vector<50x20xf32>
    %cst_125 = arith.constant dense<0.000000e+00> : vector<2x20xf32>
    %161 = tpu.matmul %4, %160, %cst_125 {dimension_numbers = #tpu.dot_dimension_numbers<[1], [0], [0], [1], [0, 0, 1, 1], [], []>} : vector<2x50xf32>, vector<50x20xf32>, vector<2x20xf32> -> vector<2x20xf32>
    %162 = math.tanh %161 : vector<2x20xf32>
    %163 = arith.subf %158, %162 : vector<2x20xf32>
    %164 = arith.mulf %162, %162 : vector<2x20xf32>
    %cst_126 = arith.constant 1.000000e+00 : f32
    %165 = vector.broadcast %cst_126 : f32 to vector<2x20xf32>
    %166 = arith.subf %165, %164 : vector<2x20xf32>
    %167 = arith.mulf %163, %166 : vector<2x20xf32>
    %c6_127 = arith.constant 6 : index
    %c0_128 = arith.constant 0 : index
    %c0_129 = arith.constant 0 : index
    %168 = vector.load %arg7[%c6_127, %c0_128, %c0_129] : memref<9x20x50xf32, #tpu.memory_space<vmem>>, vector<1x20x50xf32>
    %169 = vector.shape_cast %168 : vector<1x20x50xf32> to vector<20x50xf32>
    %cst_130 = arith.constant dense<0.000000e+00> : vector<2x50xf32>
    %170 = tpu.matmul %167, %169, %cst_130 {dimension_numbers = #tpu.dot_dimension_numbers<[1], [0], [0], [1], [0, 0, 1, 1], [], []>} : vector<2x20xf32>, vector<20x50xf32>, vector<2x50xf32> -> vector<2x50xf32>
    %cst_131 = arith.constant -2.000000e-01 : f32
    %171 = vector.broadcast %cst_131 : f32 to vector<2x50xf32>
    %172 = arith.mulf %171, %170 : vector<2x50xf32>
    %173 = arith.addf %151, %172 : vector<2x50xf32>
    %c6_132 = arith.constant 6 : index
    %c0_133 = arith.constant 0 : index
    %c0_134 = arith.constant 0 : index
    %174 = vector.load %arg9[%c6_132, %c0_133, %c0_134] : memref<9x32x2xf32, #tpu.memory_space<vmem>>, vector<1x32x2xf32>
    %175 = vector.shape_cast %174 : vector<1x32x2xf32> to vector<32x2xf32>
    %cst_135 = arith.constant dense<0.000000e+00> : vector<32x20xf32>
    %176 = tpu.matmul %175, %163, %cst_135 {dimension_numbers = #tpu.dot_dimension_numbers<[1], [0], [0], [1], [0, 0, 1, 1], [], []>} : vector<32x2xf32>, vector<2x20xf32>, vector<32x20xf32> -> vector<32x20xf32>
    %177 = arith.addf %155, %176 : vector<32x20xf32>
    %c7 = arith.constant 7 : index
    %c0_136 = arith.constant 0 : index
    %c0_137 = arith.constant 0 : index
    %178 = vector.load %arg8[%c7, %c0_136, %c0_137] : memref<9x2x32xf32, #tpu.memory_space<vmem>>, vector<1x2x32xf32>
    %179 = vector.shape_cast %178 : vector<1x2x32xf32> to vector<2x32xf32>
    %cst_138 = arith.constant dense<0.000000e+00> : vector<2x20xf32>
    %180 = tpu.matmul %179, %3, %cst_138 {dimension_numbers = #tpu.dot_dimension_numbers<[1], [0], [0], [1], [0, 0, 1, 1], [], []>} : vector<2x32xf32>, vector<32x20xf32>, vector<2x20xf32> -> vector<2x20xf32>
    %c7_139 = arith.constant 7 : index
    %c0_140 = arith.constant 0 : index
    %c0_141 = arith.constant 0 : index
    %181 = vector.load %arg6[%c7_139, %c0_140, %c0_141] : memref<9x50x20xf32, #tpu.memory_space<vmem>>, vector<1x50x20xf32>
    %182 = vector.shape_cast %181 : vector<1x50x20xf32> to vector<50x20xf32>
    %cst_142 = arith.constant dense<0.000000e+00> : vector<2x20xf32>
    %183 = tpu.matmul %4, %182, %cst_142 {dimension_numbers = #tpu.dot_dimension_numbers<[1], [0], [0], [1], [0, 0, 1, 1], [], []>} : vector<2x50xf32>, vector<50x20xf32>, vector<2x20xf32> -> vector<2x20xf32>
    %184 = math.tanh %183 : vector<2x20xf32>
    %185 = arith.subf %180, %184 : vector<2x20xf32>
    %186 = arith.mulf %184, %184 : vector<2x20xf32>
    %cst_143 = arith.constant 1.000000e+00 : f32
    %187 = vector.broadcast %cst_143 : f32 to vector<2x20xf32>
    %188 = arith.subf %187, %186 : vector<2x20xf32>
    %189 = arith.mulf %185, %188 : vector<2x20xf32>
    %c7_144 = arith.constant 7 : index
    %c0_145 = arith.constant 0 : index
    %c0_146 = arith.constant 0 : index
    %190 = vector.load %arg7[%c7_144, %c0_145, %c0_146] : memref<9x20x50xf32, #tpu.memory_space<vmem>>, vector<1x20x50xf32>
    %191 = vector.shape_cast %190 : vector<1x20x50xf32> to vector<20x50xf32>
    %cst_147 = arith.constant dense<0.000000e+00> : vector<2x50xf32>
    %192 = tpu.matmul %189, %191, %cst_147 {dimension_numbers = #tpu.dot_dimension_numbers<[1], [0], [0], [1], [0, 0, 1, 1], [], []>} : vector<2x20xf32>, vector<20x50xf32>, vector<2x50xf32> -> vector<2x50xf32>
    %cst_148 = arith.constant -2.000000e-01 : f32
    %193 = vector.broadcast %cst_148 : f32 to vector<2x50xf32>
    %194 = arith.mulf %193, %192 : vector<2x50xf32>
    %195 = arith.addf %173, %194 : vector<2x50xf32>
    %c7_149 = arith.constant 7 : index
    %c0_150 = arith.constant 0 : index
    %c0_151 = arith.constant 0 : index
    %196 = vector.load %arg9[%c7_149, %c0_150, %c0_151] : memref<9x32x2xf32, #tpu.memory_space<vmem>>, vector<1x32x2xf32>
    %197 = vector.shape_cast %196 : vector<1x32x2xf32> to vector<32x2xf32>
    %cst_152 = arith.constant dense<0.000000e+00> : vector<32x20xf32>
    %198 = tpu.matmul %197, %185, %cst_152 {dimension_numbers = #tpu.dot_dimension_numbers<[1], [0], [0], [1], [0, 0, 1, 1], [], []>} : vector<32x2xf32>, vector<2x20xf32>, vector<32x20xf32> -> vector<32x20xf32>
    %199 = arith.addf %177, %198 : vector<32x20xf32>
    %c8 = arith.constant 8 : index
    %c0_153 = arith.constant 0 : index
    %c0_154 = arith.constant 0 : index
    %200 = vector.load %arg8[%c8, %c0_153, %c0_154] : memref<9x2x32xf32, #tpu.memory_space<vmem>>, vector<1x2x32xf32>
    %201 = vector.shape_cast %200 : vector<1x2x32xf32> to vector<2x32xf32>
    %cst_155 = arith.constant dense<0.000000e+00> : vector<2x20xf32>
    %202 = tpu.matmul %201, %3, %cst_155 {dimension_numbers = #tpu.dot_dimension_numbers<[1], [0], [0], [1], [0, 0, 1, 1], [], []>} : vector<2x32xf32>, vector<32x20xf32>, vector<2x20xf32> -> vector<2x20xf32>
    %c8_156 = arith.constant 8 : index
    %c0_157 = arith.constant 0 : index
    %c0_158 = arith.constant 0 : index
    %203 = vector.load %arg6[%c8_156, %c0_157, %c0_158] : memref<9x50x20xf32, #tpu.memory_space<vmem>>, vector<1x50x20xf32>
    %204 = vector.shape_cast %203 : vector<1x50x20xf32> to vector<50x20xf32>
    %cst_159 = arith.constant dense<0.000000e+00> : vector<2x20xf32>
    %205 = tpu.matmul %4, %204, %cst_159 {dimension_numbers = #tpu.dot_dimension_numbers<[1], [0], [0], [1], [0, 0, 1, 1], [], []>} : vector<2x50xf32>, vector<50x20xf32>, vector<2x20xf32> -> vector<2x20xf32>
    %206 = math.tanh %205 : vector<2x20xf32>
    %207 = arith.subf %202, %206 : vector<2x20xf32>
    %208 = arith.mulf %206, %206 : vector<2x20xf32>
    %cst_160 = arith.constant 1.000000e+00 : f32
    %209 = vector.broadcast %cst_160 : f32 to vector<2x20xf32>
    %210 = arith.subf %209, %208 : vector<2x20xf32>
    %211 = arith.mulf %207, %210 : vector<2x20xf32>
    %c8_161 = arith.constant 8 : index
    %c0_162 = arith.constant 0 : index
    %c0_163 = arith.constant 0 : index
    %212 = vector.load %arg7[%c8_161, %c0_162, %c0_163] : memref<9x20x50xf32, #tpu.memory_space<vmem>>, vector<1x20x50xf32>
    %213 = vector.shape_cast %212 : vector<1x20x50xf32> to vector<20x50xf32>
    %cst_164 = arith.constant dense<0.000000e+00> : vector<2x50xf32>
    %214 = tpu.matmul %211, %213, %cst_164 {dimension_numbers = #tpu.dot_dimension_numbers<[1], [0], [0], [1], [0, 0, 1, 1], [], []>} : vector<2x20xf32>, vector<20x50xf32>, vector<2x50xf32> -> vector<2x50xf32>
    %cst_165 = arith.constant -2.000000e-01 : f32
    %215 = vector.broadcast %cst_165 : f32 to vector<2x50xf32>
    %216 = arith.mulf %215, %214 : vector<2x50xf32>
    %217 = arith.addf %195, %216 : vector<2x50xf32>
    %c8_166 = arith.constant 8 : index
    %c0_167 = arith.constant 0 : index
    %c0_168 = arith.constant 0 : index
    %218 = vector.load %arg9[%c8_166, %c0_167, %c0_168] : memref<9x32x2xf32, #tpu.memory_space<vmem>>, vector<1x32x2xf32>
    %219 = vector.shape_cast %218 : vector<1x32x2xf32> to vector<32x2xf32>
    %cst_169 = arith.constant dense<0.000000e+00> : vector<32x20xf32>
    %220 = tpu.matmul %219, %207, %cst_169 {dimension_numbers = #tpu.dot_dimension_numbers<[1], [0], [0], [1], [0, 0, 1, 1], [], []>} : vector<32x2xf32>, vector<2x20xf32>, vector<32x20xf32> -> vector<32x20xf32>
    %221 = arith.addf %199, %220 : vector<32x20xf32>
    %cst_170 = arith.constant 2.000000e-01 : f32
    %222 = vector.broadcast %cst_170 : f32 to vector<32x20xf32>
    %223 = arith.mulf %222, %221 : vector<32x20xf32>
    %224 = arith.addf %20, %223 : vector<32x20xf32>
    %cst_171 = arith.constant 2.500000e-03 : f32
    %225 = vector.broadcast %cst_171 : f32 to vector<32x20xf32>
    %226 = arith.mulf %225, %224 : vector<32x20xf32>
    %227 = arith.subf %3, %226 : vector<32x20xf32>
    %c0_172 = arith.constant 0 : index
    %c0_173 = arith.constant 0 : index
    %228 = vector.load %arg10[%c0_172, %c0_173] : memref<32x20xf32, #tpu.memory_space<vmem>>, vector<32x20xf32>
    tpu.vector_store %arg10[%c0_172, %c0_173], %227 {strides = array<i32>} : memref<32x20xf32, #tpu.memory_space<vmem>>, vector<32x20xf32>,
    %cst_174 = arith.constant 2.500000e-03 : f32
    %229 = vector.broadcast %cst_174 : f32 to vector<2x50xf32>
    %230 = arith.mulf %229, %217 : vector<2x50xf32>
    %231 = arith.subf %4, %230 : vector<2x50xf32>
    %c0_175 = arith.constant 0 : index
    %c0_176 = arith.constant 0 : index
    %232 = vector.load %arg11[%c0_175, %c0_176] : memref<2x50xf32, #tpu.memory_space<vmem>>, vector<2x50xf32>
    tpu.vector_store %arg11[%c0_175, %c0_176], %231 {strides = array<i32>} : memref<2x50xf32, #tpu.memory_space<vmem>>, vector<2x50xf32>,
    return
  }
  func.func @transform_0(%arg0: i32) -> (i32, i32) {
    %c0_i32 = arith.constant 0 : i32
    %c0_i32_0 = arith.constant 0 : i32
    %c0_i32_1 = arith.constant 0 : i32
    return %c0_i32, %c0_i32_0 : i32, i32
  }
  func.func @transform_1(%arg0: i32) -> (i32, i32) {
    %c0_i32 = arith.constant 0 : i32
    %c0_i32_0 = arith.constant 0 : i32
    %c0_i32_1 = arith.constant 0 : i32
    return %c0_i32, %c0_i32_0 : i32, i32
  }
  func.func @transform_2(%arg0: i32) -> (i32, i32) {
    %c0_i32 = arith.constant 0 : i32
    %c0_i32_0 = arith.constant 0 : i32
    %c0_i32_1 = arith.constant 0 : i32
    return %c0_i32, %c0_i32_0 : i32, i32
  }
  func.func @transform_3(%arg0: i32) -> (i32, i32) {
    %c0_i32 = arith.constant 0 : i32
    %c0_i32_0 = arith.constant 0 : i32
    %c0_i32_1 = arith.constant 0 : i32
    return %c0_i32, %c0_i32_0 : i32, i32
  }
  func.func @transform_4(%arg0: i32) -> (i32, i32) {
    %c0_i32 = arith.constant 0 : i32
    %c0_i32_0 = arith.constant 0 : i32
    %c0_i32_1 = arith.constant 0 : i32
    return %c0_i32, %c0_i32_0 : i32, i32
  }
  func.func @transform_5(%arg0: i32) -> (i32, i32, i32) {
    %c0_i32 = arith.constant 0 : i32
    %c0_i32_0 = arith.constant 0 : i32
    %c0_i32_1 = arith.constant 0 : i32
    %c0_i32_2 = arith.constant 0 : i32
    return %c0_i32, %c0_i32_0, %c0_i32_1 : i32, i32, i32
  }
  func.func @transform_6(%arg0: i32) -> (i32, i32, i32) {
    %c0_i32 = arith.constant 0 : i32
    %c0_i32_0 = arith.constant 0 : i32
    %c0_i32_1 = arith.constant 0 : i32
    %c0_i32_2 = arith.constant 0 : i32
    return %c0_i32, %c0_i32_0, %c0_i32_1 : i32, i32, i32
  }
  func.func @transform_7(%arg0: i32) -> (i32, i32, i32) {
    %c0_i32 = arith.constant 0 : i32
    %c0_i32_0 = arith.constant 0 : i32
    %c0_i32_1 = arith.constant 0 : i32
    %c0_i32_2 = arith.constant 0 : i32
    return %c0_i32, %c0_i32_0, %c0_i32_1 : i32, i32, i32
  }
  func.func @transform_8(%arg0: i32) -> (i32, i32, i32) {
    %c0_i32 = arith.constant 0 : i32
    %c0_i32_0 = arith.constant 0 : i32
    %c0_i32_1 = arith.constant 0 : i32
    %c0_i32_2 = arith.constant 0 : i32
    return %c0_i32, %c0_i32_0, %c0_i32_1 : i32, i32, i32
  }
  func.func @transform_9(%arg0: i32) -> (i32, i32) {
    %c0_i32 = arith.constant 0 : i32
    %c0_i32_0 = arith.constant 0 : i32
    %c0_i32_1 = arith.constant 0 : i32
    return %c0_i32, %c0_i32_0 : i32, i32
  }
  func.func @transform_10(%arg0: i32) -> (i32, i32) {
    %c0_i32 = arith.constant 0 : i32
    %c0_i32_0 = arith.constant 0 : i32
    %c0_i32_1 = arith.constant 0 : i32
    return %c0_i32, %c0_i32_0 : i32, i32
  }
}

</mosaic_0001>

<llo_original>
// kernel: run.1
$region0: #{run.1}
  #allocation0 [shape = 'u32[]', space=smem, size = 0x4, offset = 0x4, fixed_abs, tag = 'smem constant byte address 0x4 - core index']
  #allocation1 [shape = 'u32[144,128]{1,0:T(1,128)}', space=vmem, size = 0x12000, scoped, tag = 'internal scratch']
  %s0 = inlined_call_operand.vmem [shape: f32[32,75], index: 0, kind: input, shape index: {}]
  %s1 = inlined_call_operand.vmem [shape: f32[32,20], index: 1, kind: input, shape index: {}]
  %s2 = inlined_call_operand.vmem [shape: f32[20,75], index: 2, kind: input, shape index: {}]
  %s3 = inlined_call_operand.vmem [shape: f32[75,20], index: 3, kind: input, shape index: {}]
  %s4 = inlined_call_operand.vmem [shape: f32[2,50], index: 4, kind: input, shape index: {}]
  %s5 = inlined_call_operand.vmem [shape: f32[9,50,20], index: 5, kind: input, shape index: {}]
  %s6 = inlined_call_operand.vmem [shape: f32[9,20,50], index: 6, kind: input, shape index: {}]
  %s7 = inlined_call_operand.vmem [shape: f32[9,2,32], index: 7, kind: input, shape index: {}]
  %s8 = inlined_call_operand.vmem [shape: f32[9,32,2], index: 8, kind: input, shape index: {}]
  %s9 = inlined_call_operand.vmem [shape: f32[32,20], index: 9, kind: output, shape index: {0}]
  %s10 = inlined_call_operand.hbm [shape: f32[2,50], index: 10, kind: output, shape index: {1}]
  %11 = xla_tuple %s9, %s10
  %s12 = sld [smem:[#allocation0]]
  $region81: #{run.1} parent=0
    _
  %s14 = ssub.s32 1, %s12
  %s15 = scalar_select 0, %s14, %s12
  $region1: #{run.1} parent=0
    #allocation2 [shape = 'u8[1024]{0}', space=vmem, size = 0x400, scoped, tag = 'output window, operand 1, single buffered']
    #allocation3 [shape = 's32[2]{0}', space=sflag, size = 0x8, scoped, tag = 'scoped memory for run.1']
    %16 = vsyncpa [#allocation3], 0
    loop: start=0, step=1, limit=7
    $region2: #{run.1} parent=1 // loop_pre_header
      _
    $region3: #{run.1} parent=1 // loop_header
      %s18 = sphi 0, %s22
      %p19 = scmp.ge.s32.totalorder %s18, 7
      %s26 = sphi 0, %s26
      %s28 = sphi 0, %s26
      %s29 = sphi 0, %s28
      %s43 = sphi 0, %s29
      %s47 = sphi 0, %s47
      %s49 = sphi 0, %s47
      %s50 = sphi 0, %s49
      %s64 = sphi 0, %s50
      %s68 = sphi 0, %s68
      %s70 = sphi 0, %s68
      %s71 = sphi 0, %s70
      %s85 = sphi 0, %s71
      %s89 = sphi 0, %s89
      %s91 = sphi 0, %s89
      %s92 = sphi 0, %s91
      %s106 = sphi 0, %s92
      %s110 = sphi 0, %s110
      %s112 = sphi 0, %s110
      %s113 = sphi 0, %s112
      %s127 = sphi 0, %s113
      %s131 = sphi 0, %s131
      %s133 = sphi 0, %s131
      %s134 = sphi 0, %s133
      %s148 = sphi 0, %s134
      %s152 = sphi 0, %s152
      %s154 = sphi 0, %s152
      %s155 = sphi 0, %s154
      %s169 = sphi 0, %s155
      %s173 = sphi 0, %s173
      %s175 = sphi 0, %s173
      %s176 = sphi 0, %s175
      %s190 = sphi 0, %s176
      %s194 = sphi 0, %s194
      %s196 = sphi 0, %s194
      %s197 = sphi 0, %s196
      %s211 = sphi 0, %s197
      %s215 = sphi 0, %s215
      %s217 = sphi 0, %s215
      %s218 = sphi 0, %s217
      %s232 = sphi 0, %s218
      %s236 = sphi 0, %s236
      %s238 = sphi 0, %s236
      %s239 = sphi 0, %s238
      %s253 = sphi 0, %s239
    $region4: #{run.1} parent=1 // loop_header_branch
      %21 = sbr.rel (%p19) target = $region8
    $region5: #{run.1} parent=1 // loop_body
      %s23 = ssub.s32 %s18, 1
      %s24 = ssub.s32 %s18, 2
      %s25 = sadd.s32 %s18, 1
      %s27 = sadd.s32 %s26, 1
      %p30 = scmp.eq.s32.totalorder %s18, 4
      %p31 = scmp.ne.s32.totalorder %s26, %s28
      %p32 = scmp.eq.s32.totalorder %s18, 0
      %p33 = por %p31, %p32
      %p34 = scmp.ne.s32.totalorder %s26, %s28
      %p35 = scmp.eq.s32.totalorder %s23, 4
      %p36 = por %p34, %p35
      %p37 = scmp.ne.s32.totalorder %s28, %s29
      %p38 = scmp.eq.s32.totalorder %s23, 0
      %p39 = por %p37, %p38
      %p40 = scmp.ne.s32.totalorder %s28, %s29
      %p41 = scmp.eq.s32.totalorder %s24, 4
      %p42 = por %p40, %p41
      %p44 = scmp.ne.s32.totalorder %s29, %s43
      %p45 = scmp.eq.s32.totalorder %s24, 0
      %p46 = por %p44, %p45
      %s48 = sadd.s32 %s47, 1
      %p51 = scmp.eq.s32.totalorder %s18, 4
      %p52 = scmp.ne.s32.totalorder %s47, %s49
      %p53 = scmp.eq.s32.totalorder %s18, 0
      %p54 = por %p52, %p53
      %p55 = scmp.ne.s32.totalorder %s47, %s49
      %p56 = scmp.eq.s32.totalorder %s23, 4
      %p57 = por %p55, %p56
      %p58 = scmp.ne.s32.totalorder %s49, %s50
      %p59 = scmp.eq.s32.totalorder %s23, 0
      %p60 = por %p58, %p59
      %p61 = scmp.ne.s32.totalorder %s49, %s50
      %p62 = scmp.eq.s32.totalorder %s24, 4
      %p63 = por %p61, %p62
      %p65 = scmp.ne.s32.totalorder %s50, %s64
      %p66 = scmp.eq.s32.totalorder %s24, 0
      %p67 = por %p65, %p66
      %s69 = sadd.s32 %s68, 1
      %p72 = scmp.eq.s32.totalorder %s18, 4
      %p73 = scmp.ne.s32.totalorder %s68, %s70
      %p74 = scmp.eq.s32.totalorder %s18, 0
      %p75 = por %p73, %p74
      %p76 = scmp.ne.s32.totalorder %s68, %s70
      %p77 = scmp.eq.s32.totalorder %s23, 4
      %p78 = por %p76, %p77
      %p79 = scmp.ne.s32.totalorder %s70, %s71
      %p80 = scmp.eq.s32.totalorder %s23, 0
      %p81 = por %p79, %p80
      %p82 = scmp.ne.s32.totalorder %s70, %s71
      %p83 = scmp.eq.s32.totalorder %s24, 4
      %p84 = por %p82, %p83
      %p86 = scmp.ne.s32.totalorder %s71, %s85
      %p87 = scmp.eq.s32.totalorder %s24, 0
      %p88 = por %p86, %p87
      %s90 = sadd.s32 %s89, 1
      %p93 = scmp.eq.s32.totalorder %s18, 4
      %p94 = scmp.ne.s32.totalorder %s89, %s91
      %p95 = scmp.eq.s32.totalorder %s18, 0
      %p96 = por %p94, %p95
      %p97 = scmp.ne.s32.totalorder %s89, %s91
      %p98 = scmp.eq.s32.totalorder %s23, 4
      %p99 = por %p97, %p98
      %p100 = scmp.ne.s32.totalorder %s91, %s92
      %p101 = scmp.eq.s32.totalorder %s23, 0
      %p102 = por %p100, %p101
      %p103 = scmp.ne.s32.totalorder %s91, %s92
      %p104 = scmp.eq.s32.totalorder %s24, 4
      %p105 = por %p103, %p104
      %p107 = scmp.ne.s32.totalorder %s92, %s106
      %p108 = scmp.eq.s32.totalorder %s24, 0
      %p109 = por %p107, %p108
      %s111 = sadd.s32 %s110, 1
      %p114 = scmp.eq.s32.totalorder %s18, 4
      %p115 = scmp.ne.s32.totalorder %s110, %s112
      %p116 = scmp.eq.s32.totalorder %s18, 0
      %p117 = por %p115, %p116
      %p118 = scmp.ne.s32.totalorder %s110, %s112
      %p119 = scmp.eq.s32.totalorder %s23, 4
      %p120 = por %p118, %p119
      %p121 = scmp.ne.s32.totalorder %s112, %s113
      %p122 = scmp.eq.s32.totalorder %s23, 0
      %p123 = por %p121, %p122
      %p124 = scmp.ne.s32.totalorder %s112, %s113
      %p125 = scmp.eq.s32.totalorder %s24, 4
      %p126 = por %p124, %p125
      %p128 = scmp.ne.s32.totalorder %s113, %s127
      %p129 = scmp.eq.s32.totalorder %s24, 0
      %p130 = por %p128, %p129
      %s132 = sadd.s32 %s131, 1
      %p135 = scmp.eq.s32.totalorder %s18, 4
      %p136 = scmp.ne.s32.totalorder %s131, %s133
      %p137 = scmp.eq.s32.totalorder %s18, 0
      %p138 = por %p136, %p137
      %p139 = scmp.ne.s32.totalorder %s131, %s133
      %p140 = scmp.eq.s32.totalorder %s23, 4
      %p141 = por %p139, %p140
      %p142 = scmp.ne.s32.totalorder %s133, %s134
      %p143 = scmp.eq.s32.totalorder %s23, 0
      %p144 = por %p142, %p143
      %p145 = scmp.ne.s32.totalorder %s133, %s134
      %p146 = scmp.eq.s32.totalorder %s24, 4
      %p147 = por %p145, %p146
      %p149 = scmp.ne.s32.totalorder %s134, %s148
      %p150 = scmp.eq.s32.totalorder %s24, 0
      %p151 = por %p149, %p150
      %s153 = sadd.s32 %s152, 1
      %p156 = scmp.eq.s32.totalorder %s18, 4
      %p157 = scmp.ne.s32.totalorder %s152, %s154
      %p158 = scmp.eq.s32.totalorder %s18, 0
      %p159 = por %p157, %p158
      %p160 = scmp.ne.s32.totalorder %s152, %s154
      %p161 = scmp.eq.s32.totalorder %s23, 4
      %p162 = por %p160, %p161
      %p163 = scmp.ne.s32.totalorder %s154, %s155
      %p164 = scmp.eq.s32.totalorder %s23, 0
      %p165 = por %p163, %p164
      %p166 = scmp.ne.s32.totalorder %s154, %s155
      %p167 = scmp.eq.s32.totalorder %s24, 4
      %p168 = por %p166, %p167
      %p170 = scmp.ne.s32.totalorder %s155, %s169
      %p171 = scmp.eq.s32.totalorder %s24, 0
      %p172 = por %p170, %p171
      %s174 = sadd.s32 %s173, 1
      %p177 = scmp.eq.s32.totalorder %s18, 4
      %p178 = scmp.ne.s32.totalorder %s173, %s175
      %p179 = scmp.eq.s32.totalorder %s18, 0
      %p180 = por %p178, %p179
      %p181 = scmp.ne.s32.totalorder %s173, %s175
      %p182 = scmp.eq.s32.totalorder %s23, 4
      %p183 = por %p181, %p182
      %p184 = scmp.ne.s32.totalorder %s175, %s176
      %p185 = scmp.eq.s32.totalorder %s23, 0
      %p186 = por %p184, %p185
      %p187 = scmp.ne.s32.totalorder %s175, %s176
      %p188 = scmp.eq.s32.totalorder %s24, 4
      %p189 = por %p187, %p188
      %p191 = scmp.ne.s32.totalorder %s176, %s190
      %p192 = scmp.eq.s32.totalorder %s24, 0
      %p193 = por %p191, %p192
      %s195 = sadd.s32 %s194, 1
      %p198 = scmp.eq.s32.totalorder %s18, 4
      %p199 = scmp.ne.s32.totalorder %s194, %s196
      %p200 = scmp.eq.s32.totalorder %s18, 0
      %p201 = por %p199, %p200
      %p202 = scmp.ne.s32.totalorder %s194, %s196
      %p203 = scmp.eq.s32.totalorder %s23, 4
      %p204 = por %p202, %p203
      %p205 = scmp.ne.s32.totalorder %s196, %s197
      %p206 = scmp.eq.s32.totalorder %s23, 0
      %p207 = por %p205, %p206
      %p208 = scmp.ne.s32.totalorder %s196, %s197
      %p209 = scmp.eq.s32.totalorder %s24, 4
      %p210 = por %p208, %p209
      %p212 = scmp.ne.s32.totalorder %s197, %s211
      %p213 = scmp.eq.s32.totalorder %s24, 0
      %p214 = por %p212, %p213
      %s216 = sadd.s32 %s215, 1
      %p219 = scmp.eq.s32.totalorder %s18, 4
      %p220 = scmp.ne.s32.totalorder %s215, %s217
      %p221 = scmp.eq.s32.totalorder %s18, 0
      %p222 = por %p220, %p221
      %p223 = scmp.ne.s32.totalorder %s215, %s217
      %p224 = scmp.eq.s32.totalorder %s23, 4
      %p225 = por %p223, %p224
      %p226 = scmp.ne.s32.totalorder %s217, %s218
      %p227 = scmp.eq.s32.totalorder %s23, 0
      %p228 = por %p226, %p227
      %p229 = scmp.ne.s32.totalorder %s217, %s218
      %p230 = scmp.eq.s32.totalorder %s24, 4
      %p231 = por %p229, %p230
      %p233 = scmp.ne.s32.totalorder %s218, %s232
      %p234 = scmp.eq.s32.totalorder %s24, 0
      %p235 = por %p233, %p234
      %s237 = sadd.s32 %s236, 1
      %p240 = scmp.eq.s32.totalorder %s18, 4
      %p241 = scmp.ne.s32.totalorder %s236, %s238
      %p242 = scmp.eq.s32.totalorder %s18, 0
      %p243 = por %p241, %p242
      %p244 = scmp.ne.s32.totalorder %s236, %s238
      %p245 = scmp.eq.s32.totalorder %s23, 4
      %p246 = por %p244, %p245
      %p247 = scmp.ne.s32.totalorder %s238, %s239
      %p248 = scmp.eq.s32.totalorder %s23, 0
      %p249 = por %p247, %p248
      %p250 = scmp.ne.s32.totalorder %s238, %s239
      %p251 = scmp.eq.s32.totalorder %s24, 4
      %p252 = por %p250, %p251
      %p254 = scmp.ne.s32.totalorder %s239, %s253
      %p255 = scmp.eq.s32.totalorder %s24, 0
      %p256 = por %p254, %p255
      %p257 = scmp.le.s32.totalorder 1, %s18
      %p258 = scmp.lt.s32.totalorder %s18, 6
      %p259 = pnand %p257, %p258
      %p260 = pneg %p259
      // Predicated region
      $region9: #{run.1} parent=5 // pred_check
        _
      $region10: #{run.1} parent=5 // pred_check_branch
        %262 = sbr.rel (%p259) target = $region12
      $region11: #{run.1} parent=5 // pred_region
        %s263 = ssub.s32 %s18, 1
        // Predicated region
        $region13: #{run.1} parent=11 // pred_check
          %p264 = pneg %p39
        $region14: #{run.1} parent=11 // pred_check_branch
          %266 = sbr.rel (%p264) target = $region16
        $region15: #{run.1} parent=11 // pred_region
          _
        $region16: #{run.1} parent=11 // pred_fallthru
          _
        // Predicated region
        $region17: #{run.1} parent=11 // pred_check
          %p267 = pneg %p60
        $region18: #{run.1} parent=11 // pred_check_branch
          %269 = sbr.rel (%p267) target = $region20
        $region19: #{run.1} parent=11 // pred_region
          _
        $region20: #{run.1} parent=11 // pred_fallthru
          _
        // Predicated region
        $region21: #{run.1} parent=11 // pred_check
          %p270 = pneg %p81
        $region22: #{run.1} parent=11 // pred_check_branch
          %272 = sbr.rel (%p270) target = $region24
        $region23: #{run.1} parent=11 // pred_region
          _
        $region24: #{run.1} parent=11 // pred_fallthru
          _
        // Predicated region
        $region25: #{run.1} parent=11 // pred_check
          %p273 = pneg %p102
        $region26: #{run.1} parent=11 // pred_check_branch
          %275 = sbr.rel (%p273) target = $region28
        $region27: #{run.1} parent=11 // pred_region
          _
        $region28: #{run.1} parent=11 // pred_fallthru
          _
        // Predicated region
        $region29: #{run.1} parent=11 // pred_check
          %p276 = pneg %p123
        $region30: #{run.1} parent=11 // pred_check_branch
          %278 = sbr.rel (%p276) target = $region32
        $region31: #{run.1} parent=11 // pred_region
          _
        $region32: #{run.1} parent=11 // pred_fallthru
          _
        // Predicated region
        $region33: #{run.1} parent=11 // pred_check
          %p279 = pneg %p144
        $region34: #{run.1} parent=11 // pred_check_branch
          %281 = sbr.rel (%p279) target = $region36
        $region35: #{run.1} parent=11 // pred_region
          _
        $region36: #{run.1} parent=11 // pred_fallthru
          _
        // Predicated region
        $region37: #{run.1} parent=11 // pred_check
          %p282 = pneg %p165
        $region38: #{run.1} parent=11 // pred_check_branch
          %284 = sbr.rel (%p282) target = $region40
        $region39: #{run.1} parent=11 // pred_region
          _
        $region40: #{run.1} parent=11 // pred_fallthru
          _
        // Predicated region
        $region41: #{run.1} parent=11 // pred_check
          %p285 = pneg %p186
        $region42: #{run.1} parent=11 // pred_check_branch
          %287 = sbr.rel (%p285) target = $region44
        $region43: #{run.1} parent=11 // pred_region
          _
        $region44: #{run.1} parent=11 // pred_fallthru
          _
        // Predicated region
        $region45: #{run.1} parent=11 // pred_check
          %p288 = pneg %p207
        $region46: #{run.1} parent=11 // pred_check_branch
          %290 = sbr.rel (%p288) target = $region48
        $region47: #{run.1} parent=11 // pred_region
          _
        $region48: #{run.1} parent=11 // pred_fallthru
          _
      $region12: #{run.1} parent=5 // pred_fallthru
        _
      %p291 = scmp.lt.s32.totalorder %s18, 5
      // Predicated region
      $region49: #{run.1} parent=5 // pred_check
        %p292 = pneg %p291
      $region50: #{run.1} parent=5 // pred_check_branch
        %294 = sbr.rel (%p292) target = $region52
      $region51: #{run.1} parent=5 // pred_region
        _
      $region52: #{run.1} parent=5 // pred_fallthru
        _
      %p295 = scmp.le.s32.totalorder 1, %s18
      %p296 = scmp.lt.s32.totalorder %s18, 6
      %p297 = pnand %p295, %p296
      %p298 = pneg %p297
      // Predicated region
      $region53: #{run.1} parent=5 // pred_check
        _
      $region54: #{run.1} parent=5 // pred_check_branch
        %300 = sbr.rel (%p297) target = $region56
      $region55: #{run.1} parent=5 // pred_region
        %s301 = ssub.s32 %s18, 1
        %p302 = pneg %p39
        %p303 = pneg %p36
        %p304 = pneg %p60
        %p305 = pneg %p57
        %p306 = pneg %p81
        %p307 = pneg %p78
        %p308 = pneg %p102
        %p309 = pneg %p99
        %p310 = pneg %p123
        %p311 = pneg %p120
        %p312 = pneg %p144
        %p313 = pneg %p141
        %p314 = pneg %p165
        %p315 = pneg %p162
        %p316 = pneg %p186
        %p317 = pneg %p183
        %p318 = pneg %p207
        %p319 = pneg %p204
        %p320 = pneg %p228
        %p321 = pneg %p225
        %p322 = pneg %p249
        %p323 = pneg %p246
        %p324 = scmp.eq.s32.totalorder %s23, 0
        // Predicated region
        $region57: #{run.1} parent=55 // pred_check
          %p325 = pneg %p324
        $region58: #{run.1} parent=55 // pred_check_branch
          %327 = sbr.rel (%p325) target = $region60
        $region59: #{run.1} parent=55 // pred_region
          %v328 = vld [vmem:[%s1] sm:$0xff]
          %v329 = vld [vmem:[%s1 + $0x8] sm:$0xff]
          %v330 = vld [vmem:[%s1 + $0x10] sm:$0xff]
          %v331 = vld [vmem:[%s1 + $0x18] sm:$0xff]
          %vm332 = vcmask 162816
          %333 = vst.msk [vmem:[%s9] sm:$0xff] %vm332, %v328
          %334 = vst.msk [vmem:[%s9 + $0x8] sm:$0xff] %vm332, %v329
          %335 = vst.msk [vmem:[%s9 + $0x10] sm:$0xff] %vm332, %v330
          %336 = vst.msk [vmem:[%s9 + $0x18] sm:$0xff] %vm332, %v331
          %v337 = vld [vmem:[%s4] sm:$0x3]
          %vm338 = vcmask 402432
          %339 = vst.msk [vmem:[#allocation2] sm:$0x3] %vm338, %v337
        $region60: #{run.1} parent=55 // pred_fallthru
          _
        %v340 = vld [vmem:[%s9] sm:$0xff]
        %v341 = vld [vmem:[%s9 + $0x8] sm:$0xff]
        %v342 = vld [vmem:[%s9 + $0x10] sm:$0xff]
        %v343 = vld [vmem:[%s9 + $0x18] sm:$0xff]
        %v344 = vld [vmem:[#allocation2] sm:$0x3]
        %v345 = vld [vmem:[%s2] sm:$0xff]
        %v346 = vld [vmem:[%s2 + $0x8] sm:$0xff]
        %v347 = vld [vmem:[%s2 + $0x10] sm:$0xf]
        %vm348 = vcmask 162816
        %v350 = vsel %vm348, %v340, 0
        %v353 = vsel %vm348, %v341, 0
        %v356 = vsel %vm348, %v342, 0
        %v359 = vsel %vm348, %v343, 0
        %vm361 = vcmask 1043456
        %v363 = vsel %vm361, %v347, 0
        %365 = vmatprep.subr.mxu0 0.0
        %366 = vmatpush1.msra.mxu0 %v345
        %367 = vmatprep.subr.mxu0 0.0
        %368 = vmatpush1.msra.mxu0 %v346
        %369 = vmatprep.subr.mxu0 0.0
        %370 = vmatpush1.msra.mxu0 %v363
        %371 = vmatprep.subr.mxu0 0.0
        %372 = vmatpush1.msra.mxu0 0.0
        %373 = vmatprep.subr.mxu0 0.0
        %374 = vmatpush1.msra.mxu0 0.0
        %375 = vmatprep.subr.mxu0 0.0
        %376 = vmatpush1.msra.mxu0 0.0
        %377 = vmatprep.subr.mxu0 0.0
        %378 = vmatpush1.msra.mxu0 0.0
        %379 = vmatprep.subr.mxu0 0.0
        %380 = vmatpush1.msra.mxu0 0.0
        %381 = vmatprep.subr.mxu0 0.0
        %382 = vmatpush1.msra.mxu0 0.0
        %383 = vmatprep.subr.mxu0 0.0
        %384 = vmatpush1.msra.mxu0 0.0
        %385 = vmatprep.subr.mxu0 0.0
        %386 = vmatpush1.msra.mxu0 0.0
        %387 = vmatprep.subr.mxu0 0.0
        %388 = vmatpush1.msra.mxu0 0.0
        %389 = vmatprep.subr.mxu0 0.0
        %390 = vmatpush1.msra.mxu0 0.0
        %391 = vmatprep.subr.mxu0 0.0
        %392 = vmatpush1.msra.mxu0 0.0
        %393 = vmatprep.subr.mxu0 0.0
        %394 = vmatpush1.msra.mxu0 0.0
        %395 = vmatprep.subr.mxu0 0.0
        %396 = vmatpush1.msra.mxu0 0.0
        %397 = vmatprep.subr.mxu0 0.0
        %398 = vmatpush1.msra.mxu0 0.0
        %399 = vmatprep.subr.mxu0 0.0
        %400 = vmatpush1.msra.mxu0 0.0
        %401 = vmatprep.subr.mxu0 0.0
        %402 = vmatpush1.msra.mxu0 0.0
        %403 = vmatprep.subr.mxu0 0.0
        %404 = vmatpush1.msra.mxu0 0.0
        %405 = vmatprep.subr.mxu0 0.0
        %406 = vmatpush1.msra.mxu0 0.0
        %407 = vmatprep.subr.mxu0 0.0
        %408 = vmatpush1.msra.mxu0 0.0
        %409 = vmatprep.subr.mxu0 0.0
        %410 = vmatpush1.msra.mxu0 0.0
        %411 = vmatprep.subr.mxu0 0.0
        %412 = vmatpush1.msra.mxu0 0.0
        %413 = vmatprep.subr.mxu0 0.0
        %414 = vmatpush1.msra.mxu0 0.0
        %415 = vmatprep.subr.mxu0 0.0
        %416 = vmatpush1.msra.mxu0 0.0
        %417 = vmatprep.subr.mxu0 0.0
        %418 = vmatpush1.msra.mxu0 0.0
        %419 = vmatprep.subr.mxu0 0.0
        %420 = vmatpush1.msra.mxu0 0.0
        %421 = vmatprep.subr.mxu0 0.0
        %422 = vmatpush1.msra.mxu0 0.0
        %423 = vmatprep.subr.mxu0 0.0
        %424 = vmatpush1.msra.mxu0 0.0
        %425 = vmatprep.subr.mxu0 0.0
        %426 = vmatpush1.msra.mxu0 0.0
        %427 = vmatprep.subr.mxu0 0.0
        %428 = vmatpush1.msra.mxu0 0.0
        %429 = vmatprep.mubr.f32.mxu0 0.0
        %430 = vmatmul.mubr.f32.gmra.mrb[0].mxu0 %v350
        %v431 = vpop.f32.mrb[0].mxu0
        %v432 = vadd.f32 0.0, %v431
        %v433 = vpop.f32.mrb[0].mxu0
        %434 = vmatprep.mubr.f32.mxu0 0.0
        %435 = vmatmul.mubr.f32.gmra.mrb[0].mxu0 %v353
        %v436 = vpop.f32.mrb[0].mxu0
        %v437 = vadd.f32 0.0, %v436
        %v438 = vpop.f32.mrb[0].mxu0
        %439 = vmatprep.mubr.f32.mxu0 0.0
        %440 = vmatmul.mubr.f32.gmra.mrb[0].mxu0 %v356
        %v441 = vpop.f32.mrb[0].mxu0
        %v442 = vadd.f32 0.0, %v441
        %v443 = vpop.f32.mrb[0].mxu0
        %444 = vmatprep.mubr.f32.mxu0 0.0
        %445 = vmatmul.mubr.f32.gmra.mrb[0].mxu0 %v359
        %v446 = vpop.f32.mrb[0].mxu0
        %v447 = vadd.f32 0.0, %v446
        %v448 = vpop.f32.mrb[0].mxu0
        %449 = vdwg.mxu0
        %v450 = vtanh.pop %v432
        %v451 = vtanh.pop %v437
        %v452 = vtanh.pop %v442
        %v453 = vtanh.pop %v447
        %v454 = vld [vmem:[%s0] sm:$0xff]
        %v455 = vld [vmem:[%s0 + $0x8] sm:$0xff]
        %v456 = vld [vmem:[%s0 + $0x10] sm:$0xff]
        %v457 = vld [vmem:[%s0 + $0x18] sm:$0xff]
        %v458 = vsub.f32 %v454, %v450
        %v459 = vsub.f32 %v455, %v451
        %v460 = vsub.f32 %v456, %v452
        %v461 = vsub.f32 %v457, %v453
        %v462 = vmul.f32 %v450, %v450
        %v463 = vmul.f32 %v451, %v451
        %v464 = vmul.f32 %v452, %v452
        %v465 = vmul.f32 %v453, %v453
        %v466 = vsub.f32 1.0, %v462
        %v467 = vsub.f32 1.0, %v463
        %v468 = vsub.f32 1.0, %v464
        %v469 = vsub.f32 1.0, %v465
        %v470 = vmul.f32 %v458, %v466
        %v471 = vmul.f32 %v459, %v467
        %v472 = vmul.f32 %v460, %v468
        %v473 = vmul.f32 %v461, %v469
        %v474 = vld [vmem:[%s3] sm:$0xff]
        %v475 = vld [vmem:[%s3 + $0x8] sm:$0xff]
        %v476 = vld [vmem:[%s3 + $0x10] sm:$0xff]
        %v477 = vld [vmem:[%s3 + $0x18] sm:$0xff]
        %v478 = vld [vmem:[%s3 + $0x20] sm:$0xff]
        %v479 = vld [vmem:[%s3 + $0x28] sm:$0xff]
        %v480 = vld [vmem:[%s3 + $0x30] sm:$0xff]
        %v481 = vld [vmem:[%s3 + $0x38] sm:$0xff]
        %v482 = vld [vmem:[%s3 + $0x40] sm:$0xff]
        %v483 = vld [vmem:[%s3 + $0x48] sm:$0x7]
        %vm484 = vcmask 613376
        %v486 = vsel %vm484, %v470, 0
        %v489 = vsel %vm484, %v471, 0
        %v492 = vsel %vm484, %v472, 0
        %v495 = vsel %vm484, %v473, 0
        %vm497 = vcmask 1042432
        %v499 = vsel %vm497, %v483, 0
        %501 = vmatprep.subr.mxu0 0.0
        %502 = vmatpush1.msra.mxu0 %v474
        %503 = vmatprep.subr.mxu0 0.0
        %504 = vmatpush1.msra.mxu0 %v475
        %505 = vmatprep.subr.mxu0 0.0
        %506 = vmatpush1.msra.mxu0 %v476
        %507 = vmatprep.subr.mxu0 0.0
        %508 = vmatpush1.msra.mxu0 %v477
        %509 = vmatprep.subr.mxu0 0.0
        %510 = vmatpush1.msra.mxu0 %v478
        %511 = vmatprep.subr.mxu0 0.0
        %512 = vmatpush1.msra.mxu0 %v479
        %513 = vmatprep.subr.mxu0 0.0
        %514 = vmatpush1.msra.mxu0 %v480
        %515 = vmatprep.subr.mxu0 0.0
        %516 = vmatpush1.msra.mxu0 %v481
        %517 = vmatprep.subr.mxu0 0.0
        %518 = vmatpush1.msra.mxu0 %v482
        %519 = vmatprep.subr.mxu0 0.0
        %520 = vmatpush1.msra.mxu0 %v499
        %521 = vmatprep.subr.mxu0 0.0
        %522 = vmatpush1.msra.mxu0 0.0
        %523 = vmatprep.subr.mxu0 0.0
        %524 = vmatpush1.msra.mxu0 0.0
        %525 = vmatprep.subr.mxu0 0.0
        %526 = vmatpush1.msra.mxu0 0.0
        %527 = vmatprep.subr.mxu0 0.0
        %528 = vmatpush1.msra.mxu0 0.0
        %529 = vmatprep.subr.mxu0 0.0
        %530 = vmatpush1.msra.mxu0 0.0
        %531 = vmatprep.subr.mxu0 0.0
        %532 = vmatpush1.msra.mxu0 0.0
        %533 = vmatprep.subr.mxu0 0.0
        %534 = vmatpush1.msra.mxu0 0.0
        %535 = vmatprep.subr.mxu0 0.0
        %536 = vmatpush1.msra.mxu0 0.0
        %537 = vmatprep.subr.mxu0 0.0
        %538 = vmatpush1.msra.mxu0 0.0
        %539 = vmatprep.subr.mxu0 0.0
        %540 = vmatpush1.msra.mxu0 0.0
        %541 = vmatprep.subr.mxu0 0.0
        %542 = vmatpush1.msra.mxu0 0.0
        %543 = vmatprep.subr.mxu0 0.0
        %544 = vmatpush1.msra.mxu0 0.0
        %545 = vmatprep.subr.mxu0 0.0
        %546 = vmatpush1.msra.mxu0 0.0
        %547 = vmatprep.subr.mxu0 0.0
        %548 = vmatpush1.msra.mxu0 0.0
        %549 = vmatprep.subr.mxu0 0.0
        %550 = vmatpush1.msra.mxu0 0.0
        %551 = vmatprep.subr.mxu0 0.0
        %552 = vmatpush1.msra.mxu0 0.0
        %553 = vmatprep.subr.mxu0 0.0
        %554 = vmatpush1.msra.mxu0 0.0
        %555 = vmatprep.subr.mxu0 0.0
        %556 = vmatpush1.msra.mxu0 0.0
        %557 = vmatprep.subr.mxu0 0.0
        %558 = vmatpush1.msra.mxu0 0.0
        %559 = vmatprep.subr.mxu0 0.0
        %560 = vmatpush1.msra.mxu0 0.0
        %561 = vmatprep.subr.mxu0 0.0
        %562 = vmatpush1.msra.mxu0 0.0
        %563 = vmatprep.subr.mxu0 0.0
        %564 = vmatpush1.msra.mxu0 0.0
        %565 = vmatprep.mubr.f32.mxu0 0.0
        %566 = vmatmul.mubr.f32.gmra.mrb[0].mxu0 %v486
        %v567 = vpop.f32.mrb[0].mxu0
        %v568 = vadd.f32 0.0, %v567
        %v569 = vpop.f32.mrb[0].mxu0
        %570 = vmatprep.mubr.f32.mxu0 0.0
        %571 = vmatmul.mubr.f32.gmra.mrb[0].mxu0 %v489
        %v572 = vpop.f32.mrb[0].mxu0
        %v573 = vadd.f32 0.0, %v572
        %v574 = vpop.f32.mrb[0].mxu0
        %575 = vmatprep.mubr.f32.mxu0 0.0
        %576 = vmatmul.mubr.f32.gmra.mrb[0].mxu0 %v492
        %v577 = vpop.f32.mrb[0].mxu0
        %v578 = vadd.f32 0.0, %v577
        %v579 = vpop.f32.mrb[0].mxu0
        %580 = vmatprep.mubr.f32.mxu0 0.0
        %581 = vmatmul.mubr.f32.gmra.mrb[0].mxu0 %v495
        %v582 = vpop.f32.mrb[0].mxu0
        %v583 = vadd.f32 0.0, %v582
        %v584 = vpop.f32.mrb[0].mxu0
        %585 = vdwg.mxu0
        %v586 = vmul.f32 %v568, -0.2
        %v587 = vmul.f32 %v573, -0.2
        %v588 = vmul.f32 %v578, -0.2
        %v589 = vmul.f32 %v583, -0.2
        %v590 = vmul.f32 %v340, 0.0003125
        %v591 = vmul.f32 %v341, 0.0003125
        %v592 = vmul.f32 %v342, 0.0003125
        %v593 = vmul.f32 %v343, 0.0003125
        %v594 = vadd.f32 %v586, %v590
        %v595 = vadd.f32 %v587, %v591
        %v596 = vadd.f32 %v588, %v592
        %v597 = vadd.f32 %v589, %v593
        %v598 = vmul.f32 %v344, 0.002
        %v599 = vld [vmem:[%s7] sm:$0x3]
        %vm600 = vcmask 261120
        %v602 = vsel %vm600, %v599, 0
        %604 = vmatprep.subr.mxu0 0.0
        %605 = vmatpush1.msra.mxu0 %v340
        %606 = vmatprep.subr.mxu0 0.0
        %607 = vmatpush1.msra.mxu0 %v341
        %608 = vmatprep.subr.mxu0 0.0
        %609 = vmatpush1.msra.mxu0 %v342
        %610 = vmatprep.subr.mxu0 0.0
        %611 = vmatpush1.msra.mxu0 %v343
        %612 = vmatprep.subr.mxu0 0.0
        %613 = vmatpush1.msra.mxu0 0.0
        %614 = vmatprep.subr.mxu0 0.0
        %615 = vmatpush1.msra.mxu0 0.0
        %616 = vmatprep.subr.mxu0 0.0
        %617 = vmatpush1.msra.mxu0 0.0
        %618 = vmatprep.subr.mxu0 0.0
        %619 = vmatpush1.msra.mxu0 0.0
        %620 = vmatprep.subr.mxu0 0.0
        %621 = vmatpush1.msra.mxu0 0.0
        %622 = vmatprep.subr.mxu0 0.0
        %623 = vmatpush1.msra.mxu0 0.0
        %624 = vmatprep.subr.mxu0 0.0
        %625 = vmatpush1.msra.mxu0 0.0
        %626 = vmatprep.subr.mxu0 0.0
        %627 = vmatpush1.msra.mxu0 0.0
        %628 = vmatprep.subr.mxu0 0.0
        %629 = vmatpush1.msra.mxu0 0.0
        %630 = vmatprep.subr.mxu0 0.0
        %631 = vmatpush1.msra.mxu0 0.0
        %632 = vmatprep.subr.mxu0 0.0
        %633 = vmatpush1.msra.mxu0 0.0
        %634 = vmatprep.subr.mxu0 0.0
        %635 = vmatpush1.msra.mxu0 0.0
        %636 = vmatprep.subr.mxu0 0.0
        %637 = vmatpush1.msra.mxu0 0.0
        %638 = vmatprep.subr.mxu0 0.0
        %639 = vmatpush1.msra.mxu0 0.0
        %640 = vmatprep.subr.mxu0 0.0
        %641 = vmatpush1.msra.mxu0 0.0
        %642 = vmatprep.subr.mxu0 0.0
        %643 = vmatpush1.msra.mxu0 0.0
        %644 = vmatprep.subr.mxu0 0.0
        %645 = vmatpush1.msra.mxu0 0.0
        %646 = vmatprep.subr.mxu0 0.0
        %647 = vmatpush1.msra.mxu0 0.0
        %648 = vmatprep.subr.mxu0 0.0
        %649 = vmatpush1.msra.mxu0 0.0
        %650 = vmatprep.subr.mxu0 0.0
        %651 = vmatpush1.msra.mxu0 0.0
        %652 = vmatprep.subr.mxu0 0.0
        %653 = vmatpush1.msra.mxu0 0.0
        %654 = vmatprep.subr.mxu0 0.0
        %655 = vmatpush1.msra.mxu0 0.0
        %656 = vmatprep.subr.mxu0 0.0
        %657 = vmatpush1.msra.mxu0 0.0
        %658 = vmatprep.subr.mxu0 0.0
        %659 = vmatpush1.msra.mxu0 0.0
        %660 = vmatprep.subr.mxu0 0.0
        %661 = vmatpush1.msra.mxu0 0.0
        %662 = vmatprep.subr.mxu0 0.0
        %663 = vmatpush1.msra.mxu0 0.0
        %664 = vmatprep.subr.mxu0 0.0
        %665 = vmatpush1.msra.mxu0 0.0
        %666 = vmatprep.subr.mxu0 0.0
        %667 = vmatpush1.msra.mxu0 0.0
        %668 = vmatprep.mubr.f32.mxu0 0.0
        %669 = vmatmul.mubr.f32.gmra.mrb[0].mxu0 %v602
        %v670 = vpop.f32.mrb[0].mxu0
        %v671 = vadd.f32 0.0, %v670
        %v672 = vpop.f32.mrb[0].mxu0
        %673 = vdwg.mxu0
        %v674 = vld [vmem:[%s5] sm:$0xff]
        %v675 = vld [vmem:[%s5 + $0x8] sm:$0xff]
        %v676 = vld [vmem:[%s5 + $0x10] sm:$0xff]
        %v677 = vld [vmem:[%s5 + $0x18] sm:$0xff]
        %v678 = vld [vmem:[%s5 + $0x20] sm:$0xff]
        %v679 = vld [vmem:[%s5 + $0x28] sm:$0xff]
        %v680 = vld [vmem:[%s5 + $0x30] sm:$0x3]
        %vm681 = vcmask 408576
        %v683 = vsel %vm681, %v344, 0
        %vm685 = vcmask 1041408
        %v687 = vsel %vm685, %v680, 0
        %689 = vmatprep.subr.mxu0 0.0
        %690 = vmatpush1.msra.mxu0 %v674
        %691 = vmatprep.subr.mxu0 0.0
        %692 = vmatpush1.msra.mxu0 %v675
        %693 = vmatprep.subr.mxu0 0.0
        %694 = vmatpush1.msra.mxu0 %v676
        %695 = vmatprep.subr.mxu0 0.0
        %696 = vmatpush1.msra.mxu0 %v677
        %697 = vmatprep.subr.mxu0 0.0
        %698 = vmatpush1.msra.mxu0 %v678
        %699 = vmatprep.subr.mxu0 0.0
        %700 = vmatpush1.msra.mxu0 %v679
        %701 = vmatprep.subr.mxu0 0.0
        %702 = vmatpush1.msra.mxu0 %v687
        %703 = vmatprep.subr.mxu0 0.0
        %704 = vmatpush1.msra.mxu0 0.0
        %705 = vmatprep.subr.mxu0 0.0
        %706 = vmatpush1.msra.mxu0 0.0
        %707 = vmatprep.subr.mxu0 0.0
        %708 = vmatpush1.msra.mxu0 0.0
        %709 = vmatprep.subr.mxu0 0.0
        %710 = vmatpush1.msra.mxu0 0.0
        %711 = vmatprep.subr.mxu0 0.0
        %712 = vmatpush1.msra.mxu0 0.0
        %713 = vmatprep.subr.mxu0 0.0
        %714 = vmatpush1.msra.mxu0 0.0
        %715 = vmatprep.subr.mxu0 0.0
        %716 = vmatpush1.msra.mxu0 0.0
        %717 = vmatprep.subr.mxu0 0.0
        %718 = vmatpush1.msra.mxu0 0.0
        %719 = vmatprep.subr.mxu0 0.0
        %720 = vmatpush1.msra.mxu0 0.0
        %721 = vmatprep.subr.mxu0 0.0
        %722 = vmatpush1.msra.mxu0 0.0
        %723 = vmatprep.subr.mxu0 0.0
        %724 = vmatpush1.msra.mxu0 0.0
        %725 = vmatprep.subr.mxu0 0.0
        %726 = vmatpush1.msra.mxu0 0.0
        %727 = vmatprep.subr.mxu0 0.0
        %728 = vmatpush1.msra.mxu0 0.0
        %729 = vmatprep.subr.mxu0 0.0
        %730 = vmatpush1.msra.mxu0 0.0
        %731 = vmatprep.subr.mxu0 0.0
        %732 = vmatpush1.msra.mxu0 0.0
        %733 = vmatprep.subr.mxu0 0.0
        %734 = vmatpush1.msra.mxu0 0.0
        %735 = vmatprep.subr.mxu0 0.0
        %736 = vmatpush1.msra.mxu0 0.0
        %737 = vmatprep.subr.mxu0 0.0
        %738 = vmatpush1.msra.mxu0 0.0
        %739 = vmatprep.subr.mxu0 0.0
        %740 = vmatpush1.msra.mxu0 0.0
        %741 = vmatprep.subr.mxu0 0.0
        %742 = vmatpush1.msra.mxu0 0.0
        %743 = vmatprep.subr.mxu0 0.0
        %744 = vmatpush1.msra.mxu0 0.0
        %745 = vmatprep.subr.mxu0 0.0
        %746 = vmatpush1.msra.mxu0 0.0
        %747 = vmatprep.subr.mxu0 0.0
        %748 = vmatpush1.msra.mxu0 0.0
        %749 = vmatprep.subr.mxu0 0.0
        %750 = vmatpush1.msra.mxu0 0.0
        %751 = vmatprep.subr.mxu0 0.0
        %752 = vmatpush1.msra.mxu0 0.0
        %753 = vmatprep.mubr.f32.mxu0 0.0
        %754 = vmatmul.mubr.f32.gmra.mrb[0].mxu0 %v683
        %v755 = vpop.f32.mrb[0].mxu0
        %v756 = vadd.f32 0.0, %v755
        %v757 = vpop.f32.mrb[0].mxu0
        %758 = vdwg.mxu0
        %v759 = vtanh.pop %v756
        %v760 = vsub.f32 %v671, %v759
        %v761 = vmul.f32 %v759, %v759
        %v762 = vsub.f32 1.0, %v761
        %v763 = vmul.f32 %v760, %v762
        %v764 = vld [vmem:[%s6] sm:$0xff]
        %v765 = vld [vmem:[%s6 + $0x8] sm:$0xff]
        %v766 = vld [vmem:[%s6 + $0x10] sm:$0xf]
        %v768 = vsel %vm348, %v763, 0
        %v771 = vsel %vm361, %v766, 0
        %773 = vmatprep.subr.mxu0 0.0
        %774 = vmatpush1.msra.mxu0 %v764
        %775 = vmatprep.subr.mxu0 0.0
        %776 = vmatpush1.msra.mxu0 %v765
        %777 = vmatprep.subr.mxu0 0.0
        %778 = vmatpush1.msra.mxu0 %v771
        %779 = vmatprep.subr.mxu0 0.0
        %780 = vmatpush1.msra.mxu0 0.0
        %781 = vmatprep.subr.mxu0 0.0
        %782 = vmatpush1.msra.mxu0 0.0
        %783 = vmatprep.subr.mxu0 0.0
        %784 = vmatpush1.msra.mxu0 0.0
        %785 = vmatprep.subr.mxu0 0.0
        %786 = vmatpush1.msra.mxu0 0.0
        %787 = vmatprep.subr.mxu0 0.0
        %788 = vmatpush1.msra.mxu0 0.0
        %789 = vmatprep.subr.mxu0 0.0
        %790 = vmatpush1.msra.mxu0 0.0
        %791 = vmatprep.subr.mxu0 0.0
        %792 = vmatpush1.msra.mxu0 0.0
        %793 = vmatprep.subr.mxu0 0.0
        %794 = vmatpush1.msra.mxu0 0.0
        %795 = vmatprep.subr.mxu0 0.0
        %796 = vmatpush1.msra.mxu0 0.0
        %797 = vmatprep.subr.mxu0 0.0
        %798 = vmatpush1.msra.mxu0 0.0
        %799 = vmatprep.subr.mxu0 0.0
        %800 = vmatpush1.msra.mxu0 0.0
        %801 = vmatprep.subr.mxu0 0.0
        %802 = vmatpush1.msra.mxu0 0.0
        %803 = vmatprep.subr.mxu0 0.0
        %804 = vmatpush1.msra.mxu0 0.0
        %805 = vmatprep.subr.mxu0 0.0
        %806 = vmatpush1.msra.mxu0 0.0
        %807 = vmatprep.subr.mxu0 0.0
        %808 = vmatpush1.msra.mxu0 0.0
        %809 = vmatprep.subr.mxu0 0.0
        %810 = vmatpush1.msra.mxu0 0.0
        %811 = vmatprep.subr.mxu0 0.0
        %812 = vmatpush1.msra.mxu0 0.0
        %813 = vmatprep.subr.mxu0 0.0
        %814 = vmatpush1.msra.mxu0 0.0
        %815 = vmatprep.subr.mxu0 0.0
        %816 = vmatpush1.msra.mxu0 0.0
        %817 = vmatprep.subr.mxu0 0.0
        %818 = vmatpush1.msra.mxu0 0.0
        %819 = vmatprep.subr.mxu0 0.0
        %820 = vmatpush1.msra.mxu0 0.0
        %821 = vmatprep.subr.mxu0 0.0
        %822 = vmatpush1.msra.mxu0 0.0
        %823 = vmatprep.subr.mxu0 0.0
        %824 = vmatpush1.msra.mxu0 0.0
        %825 = vmatprep.subr.mxu0 0.0
        %826 = vmatpush1.msra.mxu0 0.0
        %827 = vmatprep.subr.mxu0 0.0
        %828 = vmatpush1.msra.mxu0 0.0
        %829 = vmatprep.subr.mxu0 0.0
        %830 = vmatpush1.msra.mxu0 0.0
        %831 = vmatprep.subr.mxu0 0.0
        %832 = vmatpush1.msra.mxu0 0.0
        %833 = vmatprep.subr.mxu0 0.0
        %834 = vmatpush1.msra.mxu0 0.0
        %835 = vmatprep.subr.mxu0 0.0
        %836 = vmatpush1.msra.mxu0 0.0
        %837 = vmatprep.mubr.f32.mxu0 0.0
        %838 = vmatmul.mubr.f32.gmra.mrb[0].mxu0 %v768
        %v839 = vpop.f32.mrb[0].mxu0
        %v840 = vadd.f32 0.0, %v839
        %v841 = vpop.f32.mrb[0].mxu0
        %842 = vdwg.mxu0
        %v843 = vmul.f32 %v840, -0.2
        %v844 = vadd.f32 %v598, %v843
        %v845 = vld [vmem:[%s8] sm:$0xff]
        %v846 = vld [vmem:[%s8 + $0x8] sm:$0xff]
        %v847 = vld [vmem:[%s8 + $0x10] sm:$0xff]
        %v848 = vld [vmem:[%s8 + $0x18] sm:$0xff]
        %s849 = scalar_lea.vmem %s7, 2
        %v850 = vld [vmem:[%s849] sm:$0x3]
        %v852 = vsel %vm600, %v850, 0
        %854 = vmatprep.subr.mxu0 0.0
        %855 = vmatpush1.msra.mxu0 %v340
        %856 = vmatprep.subr.mxu0 0.0
        %857 = vmatpush1.msra.mxu0 %v341
        %858 = vmatprep.subr.mxu0 0.0
        %859 = vmatpush1.msra.mxu0 %v342
        %860 = vmatprep.subr.mxu0 0.0
        %861 = vmatpush1.msra.mxu0 %v343
        %862 = vmatprep.subr.mxu0 0.0
        %863 = vmatpush1.msra.mxu0 0.0
        %864 = vmatprep.subr.mxu0 0.0
        %865 = vmatpush1.msra.mxu0 0.0
        %866 = vmatprep.subr.mxu0 0.0
        %867 = vmatpush1.msra.mxu0 0.0
        %868 = vmatprep.subr.mxu0 0.0
        %869 = vmatpush1.msra.mxu0 0.0
        %870 = vmatprep.subr.mxu0 0.0
        %871 = vmatpush1.msra.mxu0 0.0
        %872 = vmatprep.subr.mxu0 0.0
        %873 = vmatpush1.msra.mxu0 0.0
        %874 = vmatprep.subr.mxu0 0.0
        %875 = vmatpush1.msra.mxu0 0.0
        %876 = vmatprep.subr.mxu0 0.0
        %877 = vmatpush1.msra.mxu0 0.0
        %878 = vmatprep.subr.mxu0 0.0
        %879 = vmatpush1.msra.mxu0 0.0
        %880 = vmatprep.subr.mxu0 0.0
        %881 = vmatpush1.msra.mxu0 0.0
        %882 = vmatprep.subr.mxu0 0.0
        %883 = vmatpush1.msra.mxu0 0.0
        %884 = vmatprep.subr.mxu0 0.0
        %885 = vmatpush1.msra.mxu0 0.0
        %886 = vmatprep.subr.mxu0 0.0
        %887 = vmatpush1.msra.mxu0 0.0
        %888 = vmatprep.subr.mxu0 0.0
        %889 = vmatpush1.msra.mxu0 0.0
        %890 = vmatprep.subr.mxu0 0.0
        %891 = vmatpush1.msra.mxu0 0.0
        %892 = vmatprep.subr.mxu0 0.0
        %893 = vmatpush1.msra.mxu0 0.0
        %894 = vmatprep.subr.mxu0 0.0
        %895 = vmatpush1.msra.mxu0 0.0
        %896 = vmatprep.subr.mxu0 0.0
        %897 = vmatpush1.msra.mxu0 0.0
        %898 = vmatprep.subr.mxu0 0.0
        %899 = vmatpush1.msra.mxu0 0.0
        %900 = vmatprep.subr.mxu0 0.0
        %901 = vmatpush1.msra.mxu0 0.0
        %902 = vmatprep.subr.mxu0 0.0
        %903 = vmatpush1.msra.mxu0 0.0
        %904 = vmatprep.subr.mxu0 0.0
        %905 = vmatpush1.msra.mxu0 0.0
        %906 = vmatprep.subr.mxu0 0.0
        %907 = vmatpush1.msra.mxu0 0.0
        %908 = vmatprep.subr.mxu0 0.0
        %909 = vmatpush1.msra.mxu0 0.0
        %910 = vmatprep.subr.mxu0 0.0
        %911 = vmatpush1.msra.mxu0 0.0
        %912 = vmatprep.subr.mxu0 0.0
        %913 = vmatpush1.msra.mxu0 0.0
        %914 = vmatprep.subr.mxu0 0.0
        %915 = vmatpush1.msra.mxu0 0.0
        %916 = vmatprep.subr.mxu0 0.0
        %917 = vmatpush1.msra.mxu0 0.0
        %918 = vmatprep.mubr.f32.mxu0 0.0
        %919 = vmatmul.mubr.f32.gmra.mrb[0].mxu0 %v852
        %v920 = vpop.f32.mrb[0].mxu0
        %v921 = vadd.f32 0.0, %v920
        %v922 = vpop.f32.mrb[0].mxu0
        %923 = vdwg.mxu0
        %s924 = scalar_lea.vmem %s5, 56
        %v925 = vld [vmem:[%s924] sm:$0xff]
        %v926 = vld [vmem:[%s924 + $0x8] sm:$0xff]
        %v927 = vld [vmem:[%s924 + $0x10] sm:$0xff]
        %v928 = vld [vmem:[%s924 + $0x18] sm:$0xff]
        %v929 = vld [vmem:[%s924 + $0x20] sm:$0xff]
        %v930 = vld [vmem:[%s924 + $0x28] sm:$0xff]
        %v931 = vld [vmem:[%s924 + $0x30] sm:$0x3]
        %v933 = vsel %vm685, %v931, 0
        %935 = vmatprep.subr.mxu0 0.0
        %936 = vmatpush1.msra.mxu0 %v925
        %937 = vmatprep.subr.mxu0 0.0
        %938 = vmatpush1.msra.mxu0 %v926
        %939 = vmatprep.subr.mxu0 0.0
        %940 = vmatpush1.msra.mxu0 %v927
        %941 = vmatprep.subr.mxu0 0.0
        %942 = vmatpush1.msra.mxu0 %v928
        %943 = vmatprep.subr.mxu0 0.0
        %944 = vmatpush1.msra.mxu0 %v929
        %945 = vmatprep.subr.mxu0 0.0
        %946 = vmatpush1.msra.mxu0 %v930
        %947 = vmatprep.subr.mxu0 0.0
        %948 = vmatpush1.msra.mxu0 %v933
        %949 = vmatprep.subr.mxu0 0.0
        %950 = vmatpush1.msra.mxu0 0.0
        %951 = vmatprep.subr.mxu0 0.0
        %952 = vmatpush1.msra.mxu0 0.0
        %953 = vmatprep.subr.mxu0 0.0
        %954 = vmatpush1.msra.mxu0 0.0
        %955 = vmatprep.subr.mxu0 0.0
        %956 = vmatpush1.msra.mxu0 0.0
        %957 = vmatprep.subr.mxu0 0.0
        %958 = vmatpush1.msra.mxu0 0.0
        %959 = vmatprep.subr.mxu0 0.0
        %960 = vmatpush1.msra.mxu0 0.0
        %961 = vmatprep.subr.mxu0 0.0
        %962 = vmatpush1.msra.mxu0 0.0
        %963 = vmatprep.subr.mxu0 0.0
        %964 = vmatpush1.msra.mxu0 0.0
        %965 = vmatprep.subr.mxu0 0.0
        %966 = vmatpush1.msra.mxu0 0.0
        %967 = vmatprep.subr.mxu0 0.0
        %968 = vmatpush1.msra.mxu0 0.0
        %969 = vmatprep.subr.mxu0 0.0
        %970 = vmatpush1.msra.mxu0 0.0
        %971 = vmatprep.subr.mxu0 0.0
        %972 = vmatpush1.msra.mxu0 0.0
        %973 = vmatprep.subr.mxu0 0.0
        %974 = vmatpush1.msra.mxu0 0.0
        %975 = vmatprep.subr.mxu0 0.0
        %976 = vmatpush1.msra.mxu0 0.0
        %977 = vmatprep.subr.mxu0 0.0
        %978 = vmatpush1.msra.mxu0 0.0
        %979 = vmatprep.subr.mxu0 0.0
        %980 = vmatpush1.msra.mxu0 0.0
        %981 = vmatprep.subr.mxu0 0.0
        %982 = vmatpush1.msra.mxu0 0.0
        %983 = vmatprep.subr.mxu0 0.0
        %984 = vmatpush1.msra.mxu0 0.0
        %985 = vmatprep.subr.mxu0 0.0
        %986 = vmatpush1.msra.mxu0 0.0
        %987 = vmatprep.subr.mxu0 0.0
        %988 = vmatpush1.msra.mxu0 0.0
        %989 = vmatprep.subr.mxu0 0.0
        %990 = vmatpush1.msra.mxu0 0.0
        %991 = vmatprep.subr.mxu0 0.0
        %992 = vmatpush1.msra.mxu0 0.0
        %993 = vmatprep.subr.mxu0 0.0
        %994 = vmatpush1.msra.mxu0 0.0
        %995 = vmatprep.subr.mxu0 0.0
        %996 = vmatpush1.msra.mxu0 0.0
        %997 = vmatprep.subr.mxu0 0.0
        %998 = vmatpush1.msra.mxu0 0.0
        %999 = vmatprep.mubr.f32.mxu0 0.0
        %1000 = vmatmul.mubr.f32.gmra.mrb[0].mxu0 %v683
        %v1001 = vpop.f32.mrb[0].mxu0
        %v1002 = vadd.f32 0.0, %v1001
        %v1003 = vpop.f32.mrb[0].mxu0
        %1004 = vdwg.mxu0
        %v1005 = vtanh.pop %v1002
        %v1006 = vsub.f32 %v921, %v1005
        %v1007 = vmul.f32 %v1005, %v1005
        %v1008 = vsub.f32 1.0, %v1007
        %v1009 = vmul.f32 %v1006, %v1008
        %s1010 = scalar_lea.vmem %s6, 24
        %v1011 = vld [vmem:[%s1010] sm:$0xff]
        %v1012 = vld [vmem:[%s1010 + $0x8] sm:$0xff]
        %v1013 = vld [vmem:[%s1010 + $0x10] sm:$0xf]
        %v1015 = vsel %vm348, %v1009, 0
        %v1018 = vsel %vm361, %v1013, 0
        %1020 = vmatprep.subr.mxu0 0.0
        %1021 = vmatpush1.msra.mxu0 %v1011
        %1022 = vmatprep.subr.mxu0 0.0
        %1023 = vmatpush1.msra.mxu0 %v1012
        %1024 = vmatprep.subr.mxu0 0.0
        %1025 = vmatpush1.msra.mxu0 %v1018
        %1026 = vmatprep.subr.mxu0 0.0
        %1027 = vmatpush1.msra.mxu0 0.0
        %1028 = vmatprep.subr.mxu0 0.0
        %1029 = vmatpush1.msra.mxu0 0.0
        %1030 = vmatprep.subr.mxu0 0.0
        %1031 = vmatpush1.msra.mxu0 0.0
        %1032 = vmatprep.subr.mxu0 0.0
        %1033 = vmatpush1.msra.mxu0 0.0
        %1034 = vmatprep.subr.mxu0 0.0
        %1035 = vmatpush1.msra.mxu0 0.0
        %1036 = vmatprep.subr.mxu0 0.0
        %1037 = vmatpush1.msra.mxu0 0.0
        %1038 = vmatprep.subr.mxu0 0.0
        %1039 = vmatpush1.msra.mxu0 0.0
        %1040 = vmatprep.subr.mxu0 0.0
        %1041 = vmatpush1.msra.mxu0 0.0
        %1042 = vmatprep.subr.mxu0 0.0
        %1043 = vmatpush1.msra.mxu0 0.0
        %1044 = vmatprep.subr.mxu0 0.0
        %1045 = vmatpush1.msra.mxu0 0.0
        %1046 = vmatprep.subr.mxu0 0.0
        %1047 = vmatpush1.msra.mxu0 0.0
        %1048 = vmatprep.subr.mxu0 0.0
        %1049 = vmatpush1.msra.mxu0 0.0
        %1050 = vmatprep.subr.mxu0 0.0
        %1051 = vmatpush1.msra.mxu0 0.0
        %1052 = vmatprep.subr.mxu0 0.0
        %1053 = vmatpush1.msra.mxu0 0.0
        %1054 = vmatprep.subr.mxu0 0.0
        %1055 = vmatpush1.msra.mxu0 0.0
        %1056 = vmatprep.subr.mxu0 0.0
        %1057 = vmatpush1.msra.mxu0 0.0
        %1058 = vmatprep.subr.mxu0 0.0
        %1059 = vmatpush1.msra.mxu0 0.0
        %1060 = vmatprep.subr.mxu0 0.0
        %1061 = vmatpush1.msra.mxu0 0.0
        %1062 = vmatprep.subr.mxu0 0.0
        %1063 = vmatpush1.msra.mxu0 0.0
        %1064 = vmatprep.subr.mxu0 0.0
        %1065 = vmatpush1.msra.mxu0 0.0
        %1066 = vmatprep.subr.mxu0 0.0
        %1067 = vmatpush1.msra.mxu0 0.0
        %1068 = vmatprep.subr.mxu0 0.0
        %1069 = vmatpush1.msra.mxu0 0.0
        %1070 = vmatprep.subr.mxu0 0.0
        %1071 = vmatpush1.msra.mxu0 0.0
        %1072 = vmatprep.subr.mxu0 0.0
        %1073 = vmatpush1.msra.mxu0 0.0
        %1074 = vmatprep.subr.mxu0 0.0
        %1075 = vmatpush1.msra.mxu0 0.0
        %1076 = vmatprep.subr.mxu0 0.0
        %1077 = vmatpush1.msra.mxu0 0.0
        %1078 = vmatprep.subr.mxu0 0.0
        %1079 = vmatpush1.msra.mxu0 0.0
        %1080 = vmatprep.subr.mxu0 0.0
        %1081 = vmatpush1.msra.mxu0 0.0
        %1082 = vmatprep.subr.mxu0 0.0
        %1083 = vmatpush1.msra.mxu0 0.0
        %1084 = vmatprep.mubr.f32.mxu0 0.0
        %1085 = vmatmul.mubr.f32.gmra.mrb[0].mxu0 %v1015
        %v1086 = vpop.f32.mrb[0].mxu0
        %v1087 = vadd.f32 0.0, %v1086
        %v1088 = vpop.f32.mrb[0].mxu0
        %1089 = vdwg.mxu0
        %v1090 = vmul.f32 %v1087, -0.2
        %v1091 = vadd.f32 %v844, %v1090
        %s1092 = scalar_lea.vmem %s8, 32
        %v1093 = vld [vmem:[%s1092] sm:$0xff]
        %v1094 = vld [vmem:[%s1092 + $0x8] sm:$0xff]
        %v1095 = vld [vmem:[%s1092 + $0x10] sm:$0xff]
        %v1096 = vld [vmem:[%s1092 + $0x18] sm:$0xff]
        %vm1097 = vcmask 15360
        %v1099 = vsel %vm1097, %v1093, 0
        %v1102 = vsel %vm1097, %v1094, 0
        %v1105 = vsel %vm1097, %v1095, 0
        %v1108 = vsel %vm1097, %v1096, 0
        %v1111 = vsel %vm685, %v1006, 0
        %1113 = vmatprep.subr.mxu0 0.0
        %1114 = vmatpush1.msra.mxu0 %v1111
        %1115 = vmatprep.subr.mxu0 0.0
        %1116 = vmatpush1.msra.mxu0 0.0
        %1117 = vmatprep.subr.mxu0 0.0
        %1118 = vmatpush1.msra.mxu0 0.0
        %1119 = vmatprep.subr.mxu0 0.0
        %1120 = vmatpush1.msra.mxu0 0.0
        %1121 = vmatprep.subr.mxu0 0.0
        %1122 = vmatpush1.msra.mxu0 0.0
        %1123 = vmatprep.subr.mxu0 0.0
        %1124 = vmatpush1.msra.mxu0 0.0
        %1125 = vmatprep.subr.mxu0 0.0
        %1126 = vmatpush1.msra.mxu0 0.0
        %1127 = vmatprep.subr.mxu0 0.0
        %1128 = vmatpush1.msra.mxu0 0.0
        %1129 = vmatprep.subr.mxu0 0.0
        %1130 = vmatpush1.msra.mxu0 0.0
        %1131 = vmatprep.subr.mxu0 0.0
        %1132 = vmatpush1.msra.mxu0 0.0
        %1133 = vmatprep.subr.mxu0 0.0
        %1134 = vmatpush1.msra.mxu0 0.0
        %1135 = vmatprep.subr.mxu0 0.0
        %1136 = vmatpush1.msra.mxu0 0.0
        %1137 = vmatprep.subr.mxu0 0.0
        %1138 = vmatpush1.msra.mxu0 0.0
        %1139 = vmatprep.subr.mxu0 0.0
        %1140 = vmatpush1.msra.mxu0 0.0
        %1141 = vmatprep.subr.mxu0 0.0
        %1142 = vmatpush1.msra.mxu0 0.0
        %1143 = vmatprep.subr.mxu0 0.0
        %1144 = vmatpush1.msra.mxu0 0.0
        %1145 = vmatprep.subr.mxu0 0.0
        %1146 = vmatpush1.msra.mxu0 0.0
        %1147 = vmatprep.subr.mxu0 0.0
        %1148 = vmatpush1.msra.mxu0 0.0
        %1149 = vmatprep.subr.mxu0 0.0
        %1150 = vmatpush1.msra.mxu0 0.0
        %1151 = vmatprep.subr.mxu0 0.0
        %1152 = vmatpush1.msra.mxu0 0.0
        %1153 = vmatprep.subr.mxu0 0.0
        %1154 = vmatpush1.msra.mxu0 0.0
        %1155 = vmatprep.subr.mxu0 0.0
        %1156 = vmatpush1.msra.mxu0 0.0
        %1157 = vmatprep.subr.mxu0 0.0
        %1158 = vmatpush1.msra.mxu0 0.0
        %1159 = vmatprep.subr.mxu0 0.0
        %1160 = vmatpush1.msra.mxu0 0.0
        %1161 = vmatprep.subr.mxu0 0.0
        %1162 = vmatpush1.msra.mxu0 0.0
        %1163 = vmatprep.subr.mxu0 0.0
        %1164 = vmatpush1.msra.mxu0 0.0
        %1165 = vmatprep.subr.mxu0 0.0
        %1166 = vmatpush1.msra.mxu0 0.0
        %1167 = vmatprep.subr.mxu0 0.0
        %1168 = vmatpush1.msra.mxu0 0.0
        %1169 = vmatprep.subr.mxu0 0.0
        %1170 = vmatpush1.msra.mxu0 0.0
        %1171 = vmatprep.subr.mxu0 0.0
        %1172 = vmatpush1.msra.mxu0 0.0
        %1173 = vmatprep.subr.mxu0 0.0
        %1174 = vmatpush1.msra.mxu0 0.0
        %1175 = vmatprep.subr.mxu0 0.0
        %1176 = vmatpush1.msra.mxu0 0.0
        %1177 = vmatprep.mubr.f32.mxu0 0.0
        %1178 = vmatmul.mubr.f32.gmra.mrb[0].mxu0 %v1099
        %v1179 = vpop.f32.mrb[0].mxu0
        %v1180 = vadd.f32 0.0, %v1179
        %v1181 = vpop.f32.mrb[0].mxu0
        %1182 = vmatprep.mubr.f32.mxu0 0.0
        %1183 = vmatmul.mubr.f32.gmra.mrb[0].mxu0 %v1102
        %v1184 = vpop.f32.mrb[0].mxu0
        %v1185 = vadd.f32 0.0, %v1184
        %v1186 = vpop.f32.mrb[0].mxu0
        %1187 = vmatprep.mubr.f32.mxu0 0.0
        %1188 = vmatmul.mubr.f32.gmra.mrb[0].mxu0 %v1105
        %v1189 = vpop.f32.mrb[0].mxu0
        %v1190 = vadd.f32 0.0, %v1189
        %v1191 = vpop.f32.mrb[0].mxu0
        %1192 = vmatprep.mubr.f32.mxu0 0.0
        %1193 = vmatmul.mubr.f32.gmra.mrb[0].mxu0 %v1108
        %v1194 = vpop.f32.mrb[0].mxu0
        %v1195 = vadd.f32 0.0, %v1194
        %v1196 = vpop.f32.mrb[0].mxu0
        %1197 = vdwg.mxu0
        %v1199 = vsel %vm1097, %v845, 0
        %v1202 = vsel %vm1097, %v846, 0
        %v1205 = vsel %vm1097, %v847, 0
        %v1208 = vsel %vm1097, %v848, 0
        %v1211 = vsel %vm685, %v760, 0
        %1213 = vmatprep.subr.mxu0 0.0
        %1214 = vmatpush1.msra.mxu0 %v1211
        %1215 = vmatprep.subr.mxu0 0.0
        %1216 = vmatpush1.msra.mxu0 0.0
        %1217 = vmatprep.subr.mxu0 0.0
        %1218 = vmatpush1.msra.mxu0 0.0
        %1219 = vmatprep.subr.mxu0 0.0
        %1220 = vmatpush1.msra.mxu0 0.0
        %1221 = vmatprep.subr.mxu0 0.0
        %1222 = vmatpush1.msra.mxu0 0.0
        %1223 = vmatprep.subr.mxu0 0.0
        %1224 = vmatpush1.msra.mxu0 0.0
        %1225 = vmatprep.subr.mxu0 0.0
        %1226 = vmatpush1.msra.mxu0 0.0
        %1227 = vmatprep.subr.mxu0 0.0
        %1228 = vmatpush1.msra.mxu0 0.0
        %1229 = vmatprep.subr.mxu0 0.0
        %1230 = vmatpush1.msra.mxu0 0.0
        %1231 = vmatprep.subr.mxu0 0.0
        %1232 = vmatpush1.msra.mxu0 0.0
        %1233 = vmatprep.subr.mxu0 0.0
        %1234 = vmatpush1.msra.mxu0 0.0
        %1235 = vmatprep.subr.mxu0 0.0
        %1236 = vmatpush1.msra.mxu0 0.0
        %1237 = vmatprep.subr.mxu0 0.0
        %1238 = vmatpush1.msra.mxu0 0.0
        %1239 = vmatprep.subr.mxu0 0.0
        %1240 = vmatpush1.msra.mxu0 0.0
        %1241 = vmatprep.subr.mxu0 0.0
        %1242 = vmatpush1.msra.mxu0 0.0
        %1243 = vmatprep.subr.mxu0 0.0
        %1244 = vmatpush1.msra.mxu0 0.0
        %1245 = vmatprep.subr.mxu0 0.0
        %1246 = vmatpush1.msra.mxu0 0.0
        %1247 = vmatprep.subr.mxu0 0.0
        %1248 = vmatpush1.msra.mxu0 0.0
        %1249 = vmatprep.subr.mxu0 0.0
        %1250 = vmatpush1.msra.mxu0 0.0
        %1251 = vmatprep.subr.mxu0 0.0
        %1252 = vmatpush1.msra.mxu0 0.0
        %1253 = vmatprep.subr.mxu0 0.0
        %1254 = vmatpush1.msra.mxu0 0.0
        %1255 = vmatprep.subr.mxu0 0.0
        %1256 = vmatpush1.msra.mxu0 0.0
        %1257 = vmatprep.subr.mxu0 0.0
        %1258 = vmatpush1.msra.mxu0 0.0
        %1259 = vmatprep.subr.mxu0 0.0
        %1260 = vmatpush1.msra.mxu0 0.0
        %1261 = vmatprep.subr.mxu0 0.0
        %1262 = vmatpush1.msra.mxu0 0.0
        %1263 = vmatprep.subr.mxu0 0.0
        %1264 = vmatpush1.msra.mxu0 0.0
        %1265 = vmatprep.subr.mxu0 0.0
        %1266 = vmatpush1.msra.mxu0 0.0
        %1267 = vmatprep.subr.mxu0 0.0
        %1268 = vmatpush1.msra.mxu0 0.0
        %1269 = vmatprep.subr.mxu0 0.0
        %1270 = vmatpush1.msra.mxu0 0.0
        %1271 = vmatprep.subr.mxu0 0.0
        %1272 = vmatpush1.msra.mxu0 0.0
        %1273 = vmatprep.subr.mxu0 0.0
        %1274 = vmatpush1.msra.mxu0 0.0
        %1275 = vmatprep.subr.mxu0 0.0
        %1276 = vmatpush1.msra.mxu0 0.0
        %1277 = vmatprep.mubr.f32.mxu0 0.0
        %1278 = vmatmul.mubr.f32.gmra.mrb[0].mxu0 %v1199
        %v1279 = vpop.f32.mrb[0].mxu0
        %v1280 = vadd.f32 %v1180, %v1279
        %v1281 = vpop.f32.mrb[0].mxu0
        %1282 = vmatprep.mubr.f32.mxu0 0.0
        %1283 = vmatmul.mubr.f32.gmra.mrb[0].mxu0 %v1202
        %v1284 = vpop.f32.mrb[0].mxu0
        %v1285 = vadd.f32 %v1185, %v1284
        %v1286 = vpop.f32.mrb[0].mxu0
        %1287 = vmatprep.mubr.f32.mxu0 0.0
        %1288 = vmatmul.mubr.f32.gmra.mrb[0].mxu0 %v1205
        %v1289 = vpop.f32.mrb[0].mxu0
        %v1290 = vadd.f32 %v1190, %v1289
        %v1291 = vpop.f32.mrb[0].mxu0
        %1292 = vmatprep.mubr.f32.mxu0 0.0
        %1293 = vmatmul.mubr.f32.gmra.mrb[0].mxu0 %v1208
        %v1294 = vpop.f32.mrb[0].mxu0
        %v1295 = vadd.f32 %v1195, %v1294
        %v1296 = vpop.f32.mrb[0].mxu0
        %1297 = vdwg.mxu0
        %s1298 = scalar_lea.vmem %s7, 4
        %v1299 = vld [vmem:[%s1298] sm:$0x3]
        %v1301 = vsel %vm600, %v1299, 0
        %1303 = vmatprep.subr.mxu0 0.0
        %1304 = vmatpush1.msra.mxu0 %v340
        %1305 = vmatprep.subr.mxu0 0.0
        %1306 = vmatpush1.msra.mxu0 %v341
        %1307 = vmatprep.subr.mxu0 0.0
        %1308 = vmatpush1.msra.mxu0 %v342
        %1309 = vmatprep.subr.mxu0 0.0
        %1310 = vmatpush1.msra.mxu0 %v343
        %1311 = vmatprep.subr.mxu0 0.0
        %1312 = vmatpush1.msra.mxu0 0.0
        %1313 = vmatprep.subr.mxu0 0.0
        %1314 = vmatpush1.msra.mxu0 0.0
        %1315 = vmatprep.subr.mxu0 0.0
        %1316 = vmatpush1.msra.mxu0 0.0
        %1317 = vmatprep.subr.mxu0 0.0
        %1318 = vmatpush1.msra.mxu0 0.0
        %1319 = vmatprep.subr.mxu0 0.0
        %1320 = vmatpush1.msra.mxu0 0.0
        %1321 = vmatprep.subr.mxu0 0.0
        %1322 = vmatpush1.msra.mxu0 0.0
        %1323 = vmatprep.subr.mxu0 0.0
        %1324 = vmatpush1.msra.mxu0 0.0
        %1325 = vmatprep.subr.mxu0 0.0
        %1326 = vmatpush1.msra.mxu0 0.0
        %1327 = vmatprep.subr.mxu0 0.0
        %1328 = vmatpush1.msra.mxu0 0.0
        %1329 = vmatprep.subr.mxu0 0.0
        %1330 = vmatpush1.msra.mxu0 0.0
        %1331 = vmatprep.subr.mxu0 0.0
        %1332 = vmatpush1.msra.mxu0 0.0
        %1333 = vmatprep.subr.mxu0 0.0
        %1334 = vmatpush1.msra.mxu0 0.0
        %1335 = vmatprep.subr.mxu0 0.0
        %1336 = vmatpush1.msra.mxu0 0.0
        %1337 = vmatprep.subr.mxu0 0.0
        %1338 = vmatpush1.msra.mxu0 0.0
        %1339 = vmatprep.subr.mxu0 0.0
        %1340 = vmatpush1.msra.mxu0 0.0
        %1341 = vmatprep.subr.mxu0 0.0
        %1342 = vmatpush1.msra.mxu0 0.0
        %1343 = vmatprep.subr.mxu0 0.0
        %1344 = vmatpush1.msra.mxu0 0.0
        %1345 = vmatprep.subr.mxu0 0.0
        %1346 = vmatpush1.msra.mxu0 0.0
        %1347 = vmatprep.subr.mxu0 0.0
        %1348 = vmatpush1.msra.mxu0 0.0
        %1349 = vmatprep.subr.mxu0 0.0
        %1350 = vmatpush1.msra.mxu0 0.0
        %1351 = vmatprep.subr.mxu0 0.0
        %1352 = vmatpush1.msra.mxu0 0.0
        %1353 = vmatprep.subr.mxu0 0.0
        %1354 = vmatpush1.msra.mxu0 0.0
        %1355 = vmatprep.subr.mxu0 0.0
        %1356 = vmatpush1.msra.mxu0 0.0
        %1357 = vmatprep.subr.mxu0 0.0
        %1358 = vmatpush1.msra.mxu0 0.0
        %1359 = vmatprep.subr.mxu0 0.0
        %1360 = vmatpush1.msra.mxu0 0.0
        %1361 = vmatprep.subr.mxu0 0.0
        %1362 = vmatpush1.msra.mxu0 0.0
        %1363 = vmatprep.subr.mxu0 0.0
        %1364 = vmatpush1.msra.mxu0 0.0
        %1365 = vmatprep.subr.mxu0 0.0
        %1366 = vmatpush1.msra.mxu0 0.0
        %1367 = vmatprep.mubr.f32.mxu0 0.0
        %1368 = vmatmul.mubr.f32.gmra.mrb[0].mxu0 %v1301
        %v1369 = vpop.f32.mrb[0].mxu0
        %v1370 = vadd.f32 0.0, %v1369
        %v1371 = vpop.f32.mrb[0].mxu0
        %1372 = vdwg.mxu0
        %s1373 = scalar_lea.vmem %s5, 112
        %v1374 = vld [vmem:[%s1373] sm:$0xff]
        %v1375 = vld [vmem:[%s1373 + $0x8] sm:$0xff]
        %v1376 = vld [vmem:[%s1373 + $0x10] sm:$0xff]
        %v1377 = vld [vmem:[%s1373 + $0x18] sm:$0xff]
        %v1378 = vld [vmem:[%s1373 + $0x20] sm:$0xff]
        %v1379 = vld [vmem:[%s1373 + $0x28] sm:$0xff]
        %v1380 = vld [vmem:[%s1373 + $0x30] sm:$0x3]
        %v1382 = vsel %vm685, %v1380, 0
        %1384 = vmatprep.subr.mxu0 0.0
        %1385 = vmatpush1.msra.mxu0 %v1374
        %1386 = vmatprep.subr.mxu0 0.0
        %1387 = vmatpush1.msra.mxu0 %v1375
        %1388 = vmatprep.subr.mxu0 0.0
        %1389 = vmatpush1.msra.mxu0 %v1376
        %1390 = vmatprep.subr.mxu0 0.0
        %1391 = vmatpush1.msra.mxu0 %v1377
        %1392 = vmatprep.subr.mxu0 0.0
        %1393 = vmatpush1.msra.mxu0 %v1378
        %1394 = vmatprep.subr.mxu0 0.0
        %1395 = vmatpush1.msra.mxu0 %v1379
        %1396 = vmatprep.subr.mxu0 0.0
        %1397 = vmatpush1.msra.mxu0 %v1382
        %1398 = vmatprep.subr.mxu0 0.0
        %1399 = vmatpush1.msra.mxu0 0.0
        %1400 = vmatprep.subr.mxu0 0.0
        %1401 = vmatpush1.msra.mxu0 0.0
        %1402 = vmatprep.subr.mxu0 0.0
        %1403 = vmatpush1.msra.mxu0 0.0
        %1404 = vmatprep.subr.mxu0 0.0
        %1405 = vmatpush1.msra.mxu0 0.0
        %1406 = vmatprep.subr.mxu0 0.0
        %1407 = vmatpush1.msra.mxu0 0.0
        %1408 = vmatprep.subr.mxu0 0.0
        %1409 = vmatpush1.msra.mxu0 0.0
        %1410 = vmatprep.subr.mxu0 0.0
        %1411 = vmatpush1.msra.mxu0 0.0
        %1412 = vmatprep.subr.mxu0 0.0
        %1413 = vmatpush1.msra.mxu0 0.0
        %1414 = vmatprep.subr.mxu0 0.0
        %1415 = vmatpush1.msra.mxu0 0.0
        %1416 = vmatprep.subr.mxu0 0.0
        %1417 = vmatpush1.msra.mxu0 0.0
        %1418 = vmatprep.subr.mxu0 0.0
        %1419 = vmatpush1.msra.mxu0 0.0
        %1420 = vmatprep.subr.mxu0 0.0
        %1421 = vmatpush1.msra.mxu0 0.0
        %1422 = vmatprep.subr.mxu0 0.0
        %1423 = vmatpush1.msra.mxu0 0.0
        %1424 = vmatprep.subr.mxu0 0.0
        %1425 = vmatpush1.msra.mxu0 0.0
        %1426 = vmatprep.subr.mxu0 0.0
        %1427 = vmatpush1.msra.mxu0 0.0
        %1428 = vmatprep.subr.mxu0 0.0
        %1429 = vmatpush1.msra.mxu0 0.0
        %1430 = vmatprep.subr.mxu0 0.0
        %1431 = vmatpush1.msra.mxu0 0.0
        %1432 = vmatprep.subr.mxu0 0.0
        %1433 = vmatpush1.msra.mxu0 0.0
        %1434 = vmatprep.subr.mxu0 0.0
        %1435 = vmatpush1.msra.mxu0 0.0
        %1436 = vmatprep.subr.mxu0 0.0
        %1437 = vmatpush1.msra.mxu0 0.0
        %1438 = vmatprep.subr.mxu0 0.0
        %1439 = vmatpush1.msra.mxu0 0.0
        %1440 = vmatprep.subr.mxu0 0.0
        %1441 = vmatpush1.msra.mxu0 0.0
        %1442 = vmatprep.subr.mxu0 0.0
        %1443 = vmatpush1.msra.mxu0 0.0
        %1444 = vmatprep.subr.mxu0 0.0
        %1445 = vmatpush1.msra.mxu0 0.0
        %1446 = vmatprep.subr.mxu0 0.0
        %1447 = vmatpush1.msra.mxu0 0.0
        %1448 = vmatprep.mubr.f32.mxu0 0.0
        %1449 = vmatmul.mubr.f32.gmra.mrb[0].mxu0 %v683
        %v1450 = vpop.f32.mrb[0].mxu0
        %v1451 = vadd.f32 0.0, %v1450
        %v1452 = vpop.f32.mrb[0].mxu0
        %1453 = vdwg.mxu0
        %v1454 = vtanh.pop %v1451
        %v1455 = vsub.f32 %v1370, %v1454
        %v1456 = vmul.f32 %v1454, %v1454
        %v1457 = vsub.f32 1.0, %v1456
        %v1458 = vmul.f32 %v1455, %v1457
        %s1459 = scalar_lea.vmem %s6, 48
        %v1460 = vld [vmem:[%s1459] sm:$0xff]
        %v1461 = vld [vmem:[%s1459 + $0x8] sm:$0xff]
        %v1462 = vld [vmem:[%s1459 + $0x10] sm:$0xf]
        %v1464 = vsel %vm348, %v1458, 0
        %v1467 = vsel %vm361, %v1462, 0
        %1469 = vmatprep.subr.mxu0 0.0
        %1470 = vmatpush1.msra.mxu0 %v1460
        %1471 = vmatprep.subr.mxu0 0.0
        %1472 = vmatpush1.msra.mxu0 %v1461
        %1473 = vmatprep.subr.mxu0 0.0
        %1474 = vmatpush1.msra.mxu0 %v1467
        %1475 = vmatprep.subr.mxu0 0.0
        %1476 = vmatpush1.msra.mxu0 0.0
        %1477 = vmatprep.subr.mxu0 0.0
        %1478 = vmatpush1.msra.mxu0 0.0
        %1479 = vmatprep.subr.mxu0 0.0
        %1480 = vmatpush1.msra.mxu0 0.0
        %1481 = vmatprep.subr.mxu0 0.0
        %1482 = vmatpush1.msra.mxu0 0.0
        %1483 = vmatprep.subr.mxu0 0.0
        %1484 = vmatpush1.msra.mxu0 0.0
        %1485 = vmatprep.subr.mxu0 0.0
        %1486 = vmatpush1.msra.mxu0 0.0
        %1487 = vmatprep.subr.mxu0 0.0
        %1488 = vmatpush1.msra.mxu0 0.0
        %1489 = vmatprep.subr.mxu0 0.0
        %1490 = vmatpush1.msra.mxu0 0.0
        %1491 = vmatprep.subr.mxu0 0.0
        %1492 = vmatpush1.msra.mxu0 0.0
        %1493 = vmatprep.subr.mxu0 0.0
        %1494 = vmatpush1.msra.mxu0 0.0
        %1495 = vmatprep.subr.mxu0 0.0
        %1496 = vmatpush1.msra.mxu0 0.0
        %1497 = vmatprep.subr.mxu0 0.0
        %1498 = vmatpush1.msra.mxu0 0.0
        %1499 = vmatprep.subr.mxu0 0.0
        %1500 = vmatpush1.msra.mxu0 0.0
        %1501 = vmatprep.subr.mxu0 0.0
        %1502 = vmatpush1.msra.mxu0 0.0
        %1503 = vmatprep.subr.mxu0 0.0
        %1504 = vmatpush1.msra.mxu0 0.0
        %1505 = vmatprep.subr.mxu0 0.0
        %1506 = vmatpush1.msra.mxu0 0.0
        %1507 = vmatprep.subr.mxu0 0.0
        %1508 = vmatpush1.msra.mxu0 0.0
        %1509 = vmatprep.subr.mxu0 0.0
        %1510 = vmatpush1.msra.mxu0 0.0
        %1511 = vmatprep.subr.mxu0 0.0
        %1512 = vmatpush1.msra.mxu0 0.0
        %1513 = vmatprep.subr.mxu0 0.0
        %1514 = vmatpush1.msra.mxu0 0.0
        %1515 = vmatprep.subr.mxu0 0.0
        %1516 = vmatpush1.msra.mxu0 0.0
        %1517 = vmatprep.subr.mxu0 0.0
        %1518 = vmatpush1.msra.mxu0 0.0
        %1519 = vmatprep.subr.mxu0 0.0
        %1520 = vmatpush1.msra.mxu0 0.0
        %1521 = vmatprep.subr.mxu0 0.0
        %1522 = vmatpush1.msra.mxu0 0.0
        %1523 = vmatprep.subr.mxu0 0.0
        %1524 = vmatpush1.msra.mxu0 0.0
        %1525 = vmatprep.subr.mxu0 0.0
        %1526 = vmatpush1.msra.mxu0 0.0
        %1527 = vmatprep.subr.mxu0 0.0
        %1528 = vmatpush1.msra.mxu0 0.0
        %1529 = vmatprep.subr.mxu0 0.0
        %1530 = vmatpush1.msra.mxu0 0.0
        %1531 = vmatprep.subr.mxu0 0.0
        %1532 = vmatpush1.msra.mxu0 0.0
        %1533 = vmatprep.mubr.f32.mxu0 0.0
        %1534 = vmatmul.mubr.f32.gmra.mrb[0].mxu0 %v1464
        %v1535 = vpop.f32.mrb[0].mxu0
        %v1536 = vadd.f32 0.0, %v1535
        %v1537 = vpop.f32.mrb[0].mxu0
        %1538 = vdwg.mxu0
        %v1539 = vmul.f32 %v1536, -0.2
        %v1540 = vadd.f32 %v1091, %v1539
        %s1541 = scalar_lea.vmem %s8, 64
        %v1542 = vld [vmem:[%s1541] sm:$0xff]
        %v1543 = vld [vmem:[%s1541 + $0x8] sm:$0xff]
        %v1544 = vld [vmem:[%s1541 + $0x10] sm:$0xff]
        %v1545 = vld [vmem:[%s1541 + $0x18] sm:$0xff]
        %v1547 = vsel %vm1097, %v1542, 0
        %v1550 = vsel %vm1097, %v1543, 0
        %v1553 = vsel %vm1097, %v1544, 0
        %v1556 = vsel %vm1097, %v1545, 0
        %v1559 = vsel %vm685, %v1455, 0
        %1561 = vmatprep.subr.mxu0 0.0
        %1562 = vmatpush1.msra.mxu0 %v1559
        %1563 = vmatprep.subr.mxu0 0.0
        %1564 = vmatpush1.msra.mxu0 0.0
        %1565 = vmatprep.subr.mxu0 0.0
        %1566 = vmatpush1.msra.mxu0 0.0
        %1567 = vmatprep.subr.mxu0 0.0
        %1568 = vmatpush1.msra.mxu0 0.0
        %1569 = vmatprep.subr.mxu0 0.0
        %1570 = vmatpush1.msra.mxu0 0.0
        %1571 = vmatprep.subr.mxu0 0.0
        %1572 = vmatpush1.msra.mxu0 0.0
        %1573 = vmatprep.subr.mxu0 0.0
        %1574 = vmatpush1.msra.mxu0 0.0
        %1575 = vmatprep.subr.mxu0 0.0
        %1576 = vmatpush1.msra.mxu0 0.0
        %1577 = vmatprep.subr.mxu0 0.0
        %1578 = vmatpush1.msra.mxu0 0.0
        %1579 = vmatprep.subr.mxu0 0.0
        %1580 = vmatpush1.msra.mxu0 0.0
        %1581 = vmatprep.subr.mxu0 0.0
        %1582 = vmatpush1.msra.mxu0 0.0
        %1583 = vmatprep.subr.mxu0 0.0
        %1584 = vmatpush1.msra.mxu0 0.0
        %1585 = vmatprep.subr.mxu0 0.0
        %1586 = vmatpush1.msra.mxu0 0.0
        %1587 = vmatprep.subr.mxu0 0.0
        %1588 = vmatpush1.msra.mxu0 0.0
        %1589 = vmatprep.subr.mxu0 0.0
        %1590 = vmatpush1.msra.mxu0 0.0
        %1591 = vmatprep.subr.mxu0 0.0
        %1592 = vmatpush1.msra.mxu0 0.0
        %1593 = vmatprep.subr.mxu0 0.0
        %1594 = vmatpush1.msra.mxu0 0.0
        %1595 = vmatprep.subr.mxu0 0.0
        %1596 = vmatpush1.msra.mxu0 0.0
        %1597 = vmatprep.subr.mxu0 0.0
        %1598 = vmatpush1.msra.mxu0 0.0
        %1599 = vmatprep.subr.mxu0 0.0
        %1600 = vmatpush1.msra.mxu0 0.0
        %1601 = vmatprep.subr.mxu0 0.0
        %1602 = vmatpush1.msra.mxu0 0.0
        %1603 = vmatprep.subr.mxu0 0.0
        %1604 = vmatpush1.msra.mxu0 0.0
        %1605 = vmatprep.subr.mxu0 0.0
        %1606 = vmatpush1.msra.mxu0 0.0
        %1607 = vmatprep.subr.mxu0 0.0
        %1608 = vmatpush1.msra.mxu0 0.0
        %1609 = vmatprep.subr.mxu0 0.0
        %1610 = vmatpush1.msra.mxu0 0.0
        %1611 = vmatprep.subr.mxu0 0.0
        %1612 = vmatpush1.msra.mxu0 0.0
        %1613 = vmatprep.subr.mxu0 0.0
        %1614 = vmatpush1.msra.mxu0 0.0
        %1615 = vmatprep.subr.mxu0 0.0
        %1616 = vmatpush1.msra.mxu0 0.0
        %1617 = vmatprep.subr.mxu0 0.0
        %1618 = vmatpush1.msra.mxu0 0.0
        %1619 = vmatprep.subr.mxu0 0.0
        %1620 = vmatpush1.msra.mxu0 0.0
        %1621 = vmatprep.subr.mxu0 0.0
        %1622 = vmatpush1.msra.mxu0 0.0
        %1623 = vmatprep.subr.mxu0 0.0
        %1624 = vmatpush1.msra.mxu0 0.0
        %1625 = vmatprep.mubr.f32.mxu0 0.0
        %1626 = vmatmul.mubr.f32.gmra.mrb[0].mxu0 %v1547
        %v1627 = vpop.f32.mrb[0].mxu0
        %v1628 = vadd.f32 0.0, %v1627
        %v1629 = vpop.f32.mrb[0].mxu0
        %1630 = vmatprep.mubr.f32.mxu0 0.0
        %1631 = vmatmul.mubr.f32.gmra.mrb[0].mxu0 %v1550
        %v1632 = vpop.f32.mrb[0].mxu0
        %v1633 = vadd.f32 0.0, %v1632
        %v1634 = vpop.f32.mrb[0].mxu0
        %1635 = vmatprep.mubr.f32.mxu0 0.0
        %1636 = vmatmul.mubr.f32.gmra.mrb[0].mxu0 %v1553
        %v1637 = vpop.f32.mrb[0].mxu0
        %v1638 = vadd.f32 0.0, %v1637
        %v1639 = vpop.f32.mrb[0].mxu0
        %1640 = vmatprep.mubr.f32.mxu0 0.0
        %1641 = vmatmul.mubr.f32.gmra.mrb[0].mxu0 %v1556
        %v1642 = vpop.f32.mrb[0].mxu0
        %v1643 = vadd.f32 0.0, %v1642
        %v1644 = vpop.f32.mrb[0].mxu0
        %1645 = vdwg.mxu0
        %v1646 = vadd.f32 %v1280, %v1628
        %v1647 = vadd.f32 %v1285, %v1633
        %v1648 = vadd.f32 %v1290, %v1638
        %v1649 = vadd.f32 %v1295, %v1643
        %s1650 = scalar_lea.vmem %s7, 6
        %v1651 = vld [vmem:[%s1650] sm:$0x3]
        %v1653 = vsel %vm600, %v1651, 0
        %1655 = vmatprep.subr.mxu0 0.0
        %1656 = vmatpush1.msra.mxu0 %v340
        %1657 = vmatprep.subr.mxu0 0.0
        %1658 = vmatpush1.msra.mxu0 %v341
        %1659 = vmatprep.subr.mxu0 0.0
        %1660 = vmatpush1.msra.mxu0 %v342
        %1661 = vmatprep.subr.mxu0 0.0
        %1662 = vmatpush1.msra.mxu0 %v343
        %1663 = vmatprep.subr.mxu0 0.0
        %1664 = vmatpush1.msra.mxu0 0.0
        %1665 = vmatprep.subr.mxu0 0.0
        %1666 = vmatpush1.msra.mxu0 0.0
        %1667 = vmatprep.subr.mxu0 0.0
        %1668 = vmatpush1.msra.mxu0 0.0
        %1669 = vmatprep.subr.mxu0 0.0
        %1670 = vmatpush1.msra.mxu0 0.0
        %1671 = vmatprep.subr.mxu0 0.0
        %1672 = vmatpush1.msra.mxu0 0.0
        %1673 = vmatprep.subr.mxu0 0.0
        %1674 = vmatpush1.msra.mxu0 0.0
        %1675 = vmatprep.subr.mxu0 0.0
        %1676 = vmatpush1.msra.mxu0 0.0
        %1677 = vmatprep.subr.mxu0 0.0
        %1678 = vmatpush1.msra.mxu0 0.0
        %1679 = vmatprep.subr.mxu0 0.0
        %1680 = vmatpush1.msra.mxu0 0.0
        %1681 = vmatprep.subr.mxu0 0.0
        %1682 = vmatpush1.msra.mxu0 0.0
        %1683 = vmatprep.subr.mxu0 0.0
        %1684 = vmatpush1.msra.mxu0 0.0
        %1685 = vmatprep.subr.mxu0 0.0
        %1686 = vmatpush1.msra.mxu0 0.0
        %1687 = vmatprep.subr.mxu0 0.0
        %1688 = vmatpush1.msra.mxu0 0.0
        %1689 = vmatprep.subr.mxu0 0.0
        %1690 = vmatpush1.msra.mxu0 0.0
        %1691 = vmatprep.subr.mxu0 0.0
        %1692 = vmatpush1.msra.mxu0 0.0
        %1693 = vmatprep.subr.mxu0 0.0
        %1694 = vmatpush1.msra.mxu0 0.0
        %1695 = vmatprep.subr.mxu0 0.0
        %1696 = vmatpush1.msra.mxu0 0.0
        %1697 = vmatprep.subr.mxu0 0.0
        %1698 = vmatpush1.msra.mxu0 0.0
        %1699 = vmatprep.subr.mxu0 0.0
        %1700 = vmatpush1.msra.mxu0 0.0
        %1701 = vmatprep.subr.mxu0 0.0
        %1702 = vmatpush1.msra.mxu0 0.0
        %1703 = vmatprep.subr.mxu0 0.0
        %1704 = vmatpush1.msra.mxu0 0.0
        %1705 = vmatprep.subr.mxu0 0.0
        %1706 = vmatpush1.msra.mxu0 0.0
        %1707 = vmatprep.subr.mxu0 0.0
        %1708 = vmatpush1.msra.mxu0 0.0
        %1709 = vmatprep.subr.mxu0 0.0
        %1710 = vmatpush1.msra.mxu0 0.0
        %1711 = vmatprep.subr.mxu0 0.0
        %1712 = vmatpush1.msra.mxu0 0.0
        %1713 = vmatprep.subr.mxu0 0.0
        %1714 = vmatpush1.msra.mxu0 0.0
        %1715 = vmatprep.subr.mxu0 0.0
        %1716 = vmatpush1.msra.mxu0 0.0
        %1717 = vmatprep.subr.mxu0 0.0
        %1718 = vmatpush1.msra.mxu0 0.0
        %1719 = vmatprep.mubr.f32.mxu0 0.0
        %1720 = vmatmul.mubr.f32.gmra.mrb[0].mxu0 %v1653
        %v1721 = vpop.f32.mrb[0].mxu0
        %v1722 = vadd.f32 0.0, %v1721
        %v1723 = vpop.f32.mrb[0].mxu0
        %1724 = vdwg.mxu0
        %s1725 = scalar_lea.vmem %s5, 168
        %v1726 = vld [vmem:[%s1725] sm:$0xff]
        %v1727 = vld [vmem:[%s1725 + $0x8] sm:$0xff]
        %v1728 = vld [vmem:[%s1725 + $0x10] sm:$0xff]
        %v1729 = vld [vmem:[%s1725 + $0x18] sm:$0xff]
        %v1730 = vld [vmem:[%s1725 + $0x20] sm:$0xff]
        %v1731 = vld [vmem:[%s1725 + $0x28] sm:$0xff]
        %v1732 = vld [vmem:[%s1725 + $0x30] sm:$0x3]
        %v1734 = vsel %vm685, %v1732, 0
        %1736 = vmatprep.subr.mxu0 0.0
        %1737 = vmatpush1.msra.mxu0 %v1726
        %1738 = vmatprep.subr.mxu0 0.0
        %1739 = vmatpush1.msra.mxu0 %v1727
        %1740 = vmatprep.subr.mxu0 0.0
        %1741 = vmatpush1.msra.mxu0 %v1728
        %1742 = vmatprep.subr.mxu0 0.0
        %1743 = vmatpush1.msra.mxu0 %v1729
        %1744 = vmatprep.subr.mxu0 0.0
        %1745 = vmatpush1.msra.mxu0 %v1730
        %1746 = vmatprep.subr.mxu0 0.0
        %1747 = vmatpush1.msra.mxu0 %v1731
        %1748 = vmatprep.subr.mxu0 0.0
        %1749 = vmatpush1.msra.mxu0 %v1734
        %1750 = vmatprep.subr.mxu0 0.0
        %1751 = vmatpush1.msra.mxu0 0.0
        %1752 = vmatprep.subr.mxu0 0.0
        %1753 = vmatpush1.msra.mxu0 0.0
        %1754 = vmatprep.subr.mxu0 0.0
        %1755 = vmatpush1.msra.mxu0 0.0
        %1756 = vmatprep.subr.mxu0 0.0
        %1757 = vmatpush1.msra.mxu0 0.0
        %1758 = vmatprep.subr.mxu0 0.0
        %1759 = vmatpush1.msra.mxu0 0.0
        %1760 = vmatprep.subr.mxu0 0.0
        %1761 = vmatpush1.msra.mxu0 0.0
        %1762 = vmatprep.subr.mxu0 0.0
        %1763 = vmatpush1.msra.mxu0 0.0
        %1764 = vmatprep.subr.mxu0 0.0
        %1765 = vmatpush1.msra.mxu0 0.0
        %1766 = vmatprep.subr.mxu0 0.0
        %1767 = vmatpush1.msra.mxu0 0.0
        %1768 = vmatprep.subr.mxu0 0.0
        %1769 = vmatpush1.msra.mxu0 0.0
        %1770 = vmatprep.subr.mxu0 0.0
        %1771 = vmatpush1.msra.mxu0 0.0
        %1772 = vmatprep.subr.mxu0 0.0
        %1773 = vmatpush1.msra.mxu0 0.0
        %1774 = vmatprep.subr.mxu0 0.0
        %1775 = vmatpush1.msra.mxu0 0.0
        %1776 = vmatprep.subr.mxu0 0.0
        %1777 = vmatpush1.msra.mxu0 0.0
        %1778 = vmatprep.subr.mxu0 0.0
        %1779 = vmatpush1.msra.mxu0 0.0
        %1780 = vmatprep.subr.mxu0 0.0
        %1781 = vmatpush1.msra.mxu0 0.0
        %1782 = vmatprep.subr.mxu0 0.0
        %1783 = vmatpush1.msra.mxu0 0.0
        %1784 = vmatprep.subr.mxu0 0.0
        %1785 = vmatpush1.msra.mxu0 0.0
        %1786 = vmatprep.subr.mxu0 0.0
        %1787 = vmatpush1.msra.mxu0 0.0
        %1788 = vmatprep.subr.mxu0 0.0
        %1789 = vmatpush1.msra.mxu0 0.0
        %1790 = vmatprep.subr.mxu0 0.0
        %1791 = vmatpush1.msra.mxu0 0.0
        %1792 = vmatprep.subr.mxu0 0.0
        %1793 = vmatpush1.msra.mxu0 0.0
        %1794 = vmatprep.subr.mxu0 0.0
        %1795 = vmatpush1.msra.mxu0 0.0
        %1796 = vmatprep.subr.mxu0 0.0
        %1797 = vmatpush1.msra.mxu0 0.0
        %1798 = vmatprep.subr.mxu0 0.0
        %1799 = vmatpush1.msra.mxu0 0.0
        %1800 = vmatprep.mubr.f32.mxu0 0.0
        %1801 = vmatmul.mubr.f32.gmra.mrb[0].mxu0 %v683
        %v1802 = vpop.f32.mrb[0].mxu0
        %v1803 = vadd.f32 0.0, %v1802
        %v1804 = vpop.f32.mrb[0].mxu0
        %1805 = vdwg.mxu0
        %v1806 = vtanh.pop %v1803
        %v1807 = vsub.f32 %v1722, %v1806
        %v1808 = vmul.f32 %v1806, %v1806
        %v1809 = vsub.f32 1.0, %v1808
        %v1810 = vmul.f32 %v1807, %v1809
        %s1811 = scalar_lea.vmem %s6, 72
        %v1812 = vld [vmem:[%s1811] sm:$0xff]
        %v1813 = vld [vmem:[%s1811 + $0x8] sm:$0xff]
        %v1814 = vld [vmem:[%s1811 + $0x10] sm:$0xf]
        %v1816 = vsel %vm348, %v1810, 0
        %v1819 = vsel %vm361, %v1814, 0
        %1821 = vmatprep.subr.mxu0 0.0
        %1822 = vmatpush1.msra.mxu0 %v1812
        %1823 = vmatprep.subr.mxu0 0.0
        %1824 = vmatpush1.msra.mxu0 %v1813
        %1825 = vmatprep.subr.mxu0 0.0
        %1826 = vmatpush1.msra.mxu0 %v1819
        %1827 = vmatprep.subr.mxu0 0.0
        %1828 = vmatpush1.msra.mxu0 0.0
        %1829 = vmatprep.subr.mxu0 0.0
        %1830 = vmatpush1.msra.mxu0 0.0
        %1831 = vmatprep.subr.mxu0 0.0
        %1832 = vmatpush1.msra.mxu0 0.0
        %1833 = vmatprep.subr.mxu0 0.0
        %1834 = vmatpush1.msra.mxu0 0.0
        %1835 = vmatprep.subr.mxu0 0.0
        %1836 = vmatpush1.msra.mxu0 0.0
        %1837 = vmatprep.subr.mxu0 0.0
        %1838 = vmatpush1.msra.mxu0 0.0
        %1839 = vmatprep.subr.mxu0 0.0
        %1840 = vmatpush1.msra.mxu0 0.0
        %1841 = vmatprep.subr.mxu0 0.0
        %1842 = vmatpush1.msra.mxu0 0.0
        %1843 = vmatprep.subr.mxu0 0.0
        %1844 = vmatpush1.msra.mxu0 0.0
        %1845 = vmatprep.subr.mxu0 0.0
        %1846 = vmatpush1.msra.mxu0 0.0
        %1847 = vmatprep.subr.mxu0 0.0
        %1848 = vmatpush1.msra.mxu0 0.0
        %1849 = vmatprep.subr.mxu0 0.0
        %1850 = vmatpush1.msra.mxu0 0.0
        %1851 = vmatprep.subr.mxu0 0.0
        %1852 = vmatpush1.msra.mxu0 0.0
        %1853 = vmatprep.subr.mxu0 0.0
        %1854 = vmatpush1.msra.mxu0 0.0
        %1855 = vmatprep.subr.mxu0 0.0
        %1856 = vmatpush1.msra.mxu0 0.0
        %1857 = vmatprep.subr.mxu0 0.0
        %1858 = vmatpush1.msra.mxu0 0.0
        %1859 = vmatprep.subr.mxu0 0.0
        %1860 = vmatpush1.msra.mxu0 0.0
        %1861 = vmatprep.subr.mxu0 0.0
        %1862 = vmatpush1.msra.mxu0 0.0
        %1863 = vmatprep.subr.mxu0 0.0
        %1864 = vmatpush1.msra.mxu0 0.0
        %1865 = vmatprep.subr.mxu0 0.0
        %1866 = vmatpush1.msra.mxu0 0.0
        %1867 = vmatprep.subr.mxu0 0.0
        %1868 = vmatpush1.msra.mxu0 0.0
        %1869 = vmatprep.subr.mxu0 0.0
        %1870 = vmatpush1.msra.mxu0 0.0
        %1871 = vmatprep.subr.mxu0 0.0
        %1872 = vmatpush1.msra.mxu0 0.0
        %1873 = vmatprep.subr.mxu0 0.0
        %1874 = vmatpush1.msra.mxu0 0.0
        %1875 = vmatprep.subr.mxu0 0.0
        %1876 = vmatpush1.msra.mxu0 0.0
        %1877 = vmatprep.subr.mxu0 0.0
        %1878 = vmatpush1.msra.mxu0 0.0
        %1879 = vmatprep.subr.mxu0 0.0
        %1880 = vmatpush1.msra.mxu0 0.0
        %1881 = vmatprep.subr.mxu0 0.0
        %1882 = vmatpush1.msra.mxu0 0.0
        %1883 = vmatprep.subr.mxu0 0.0
        %1884 = vmatpush1.msra.mxu0 0.0
        %1885 = vmatprep.mubr.f32.mxu0 0.0
        %1886 = vmatmul.mubr.f32.gmra.mrb[0].mxu0 %v1816
        %v1887 = vpop.f32.mrb[0].mxu0
        %v1888 = vadd.f32 0.0, %v1887
        %v1889 = vpop.f32.mrb[0].mxu0
        %1890 = vdwg.mxu0
        %v1891 = vmul.f32 %v1888, -0.2
        %v1892 = vadd.f32 %v1540, %v1891
        %s1893 = scalar_lea.vmem %s8, 96
        %v1894 = vld [vmem:[%s1893] sm:$0xff]
        %v1895 = vld [vmem:[%s1893 + $0x8] sm:$0xff]
        %v1896 = vld [vmem:[%s1893 + $0x10] sm:$0xff]
        %v1897 = vld [vmem:[%s1893 + $0x18] sm:$0xff]
        %v1899 = vsel %vm1097, %v1894, 0
        %v1902 = vsel %vm1097, %v1895, 0
        %v1905 = vsel %vm1097, %v1896, 0
        %v1908 = vsel %vm1097, %v1897, 0
        %v1911 = vsel %vm685, %v1807, 0
        %1913 = vmatprep.subr.mxu0 0.0
        %1914 = vmatpush1.msra.mxu0 %v1911
        %1915 = vmatprep.subr.mxu0 0.0
        %1916 = vmatpush1.msra.mxu0 0.0
        %1917 = vmatprep.subr.mxu0 0.0
        %1918 = vmatpush1.msra.mxu0 0.0
        %1919 = vmatprep.subr.mxu0 0.0
        %1920 = vmatpush1.msra.mxu0 0.0
        %1921 = vmatprep.subr.mxu0 0.0
        %1922 = vmatpush1.msra.mxu0 0.0
        %1923 = vmatprep.subr.mxu0 0.0
        %1924 = vmatpush1.msra.mxu0 0.0
        %1925 = vmatprep.subr.mxu0 0.0
        %1926 = vmatpush1.msra.mxu0 0.0
        %1927 = vmatprep.subr.mxu0 0.0
        %1928 = vmatpush1.msra.mxu0 0.0
        %1929 = vmatprep.subr.mxu0 0.0
        %1930 = vmatpush1.msra.mxu0 0.0
        %1931 = vmatprep.subr.mxu0 0.0
        %1932 = vmatpush1.msra.mxu0 0.0
        %1933 = vmatprep.subr.mxu0 0.0
        %1934 = vmatpush1.msra.mxu0 0.0
        %1935 = vmatprep.subr.mxu0 0.0
        %1936 = vmatpush1.msra.mxu0 0.0
        %1937 = vmatprep.subr.mxu0 0.0
        %1938 = vmatpush1.msra.mxu0 0.0
        %1939 = vmatprep.subr.mxu0 0.0
        %1940 = vmatpush1.msra.mxu0 0.0
        %1941 = vmatprep.subr.mxu0 0.0
        %1942 = vmatpush1.msra.mxu0 0.0
        %1943 = vmatprep.subr.mxu0 0.0
        %1944 = vmatpush1.msra.mxu0 0.0
        %1945 = vmatprep.subr.mxu0 0.0
        %1946 = vmatpush1.msra.mxu0 0.0
        %1947 = vmatprep.subr.mxu0 0.0
        %1948 = vmatpush1.msra.mxu0 0.0
        %1949 = vmatprep.subr.mxu0 0.0
        %1950 = vmatpush1.msra.mxu0 0.0
        %1951 = vmatprep.subr.mxu0 0.0
        %1952 = vmatpush1.msra.mxu0 0.0
        %1953 = vmatprep.subr.mxu0 0.0
        %1954 = vmatpush1.msra.mxu0 0.0
        %1955 = vmatprep.subr.mxu0 0.0
        %1956 = vmatpush1.msra.mxu0 0.0
        %1957 = vmatprep.subr.mxu0 0.0
        %1958 = vmatpush1.msra.mxu0 0.0
        %1959 = vmatprep.subr.mxu0 0.0
        %1960 = vmatpush1.msra.mxu0 0.0
        %1961 = vmatprep.subr.mxu0 0.0
        %1962 = vmatpush1.msra.mxu0 0.0
        %1963 = vmatprep.subr.mxu0 0.0
        %1964 = vmatpush1.msra.mxu0 0.0
        %1965 = vmatprep.subr.mxu0 0.0
        %1966 = vmatpush1.msra.mxu0 0.0
        %1967 = vmatprep.subr.mxu0 0.0
        %1968 = vmatpush1.msra.mxu0 0.0
        %1969 = vmatprep.subr.mxu0 0.0
        %1970 = vmatpush1.msra.mxu0 0.0
        %1971 = vmatprep.subr.mxu0 0.0
        %1972 = vmatpush1.msra.mxu0 0.0
        %1973 = vmatprep.subr.mxu0 0.0
        %1974 = vmatpush1.msra.mxu0 0.0
        %1975 = vmatprep.subr.mxu0 0.0
        %1976 = vmatpush1.msra.mxu0 0.0
        %1977 = vmatprep.mubr.f32.mxu0 0.0
        %1978 = vmatmul.mubr.f32.gmra.mrb[0].mxu0 %v1899
        %v1979 = vpop.f32.mrb[0].mxu0
        %v1980 = vadd.f32 0.0, %v1979
        %v1981 = vpop.f32.mrb[0].mxu0
        %1982 = vmatprep.mubr.f32.mxu0 0.0
        %1983 = vmatmul.mubr.f32.gmra.mrb[0].mxu0 %v1902
        %v1984 = vpop.f32.mrb[0].mxu0
        %v1985 = vadd.f32 0.0, %v1984
        %v1986 = vpop.f32.mrb[0].mxu0
        %1987 = vmatprep.mubr.f32.mxu0 0.0
        %1988 = vmatmul.mubr.f32.gmra.mrb[0].mxu0 %v1905
        %v1989 = vpop.f32.mrb[0].mxu0
        %v1990 = vadd.f32 0.0, %v1989
        %v1991 = vpop.f32.mrb[0].mxu0
        %1992 = vmatprep.mubr.f32.mxu0 0.0
        %1993 = vmatmul.mubr.f32.gmra.mrb[0].mxu0 %v1908
        %v1994 = vpop.f32.mrb[0].mxu0
        %v1995 = vadd.f32 0.0, %v1994
        %v1996 = vpop.f32.mrb[0].mxu0
        %1997 = vdwg.mxu0
        %v1998 = vadd.f32 %v1646, %v1980
        %v1999 = vadd.f32 %v1647, %v1985
        %v2000 = vadd.f32 %v1648, %v1990
        %v2001 = vadd.f32 %v1649, %v1995
        %s2002 = scalar_lea.vmem %s7, 8
        %v2003 = vld [vmem:[%s2002] sm:$0x3]
        %v2005 = vsel %vm600, %v2003, 0
        %2007 = vmatprep.subr.mxu0 0.0
        %2008 = vmatpush1.msra.mxu0 %v340
        %2009 = vmatprep.subr.mxu0 0.0
        %2010 = vmatpush1.msra.mxu0 %v341
        %2011 = vmatprep.subr.mxu0 0.0
        %2012 = vmatpush1.msra.mxu0 %v342
        %2013 = vmatprep.subr.mxu0 0.0
        %2014 = vmatpush1.msra.mxu0 %v343
        %2015 = vmatprep.subr.mxu0 0.0
        %2016 = vmatpush1.msra.mxu0 0.0
        %2017 = vmatprep.subr.mxu0 0.0
        %2018 = vmatpush1.msra.mxu0 0.0
        %2019 = vmatprep.subr.mxu0 0.0
        %2020 = vmatpush1.msra.mxu0 0.0
        %2021 = vmatprep.subr.mxu0 0.0
        %2022 = vmatpush1.msra.mxu0 0.0
        %2023 = vmatprep.subr.mxu0 0.0
        %2024 = vmatpush1.msra.mxu0 0.0
        %2025 = vmatprep.subr.mxu0 0.0
        %2026 = vmatpush1.msra.mxu0 0.0
        %2027 = vmatprep.subr.mxu0 0.0
        %2028 = vmatpush1.msra.mxu0 0.0
        %2029 = vmatprep.subr.mxu0 0.0
        %2030 = vmatpush1.msra.mxu0 0.0
        %2031 = vmatprep.subr.mxu0 0.0
        %2032 = vmatpush1.msra.mxu0 0.0
        %2033 = vmatprep.subr.mxu0 0.0
        %2034 = vmatpush1.msra.mxu0 0.0
        %2035 = vmatprep.subr.mxu0 0.0
        %2036 = vmatpush1.msra.mxu0 0.0
        %2037 = vmatprep.subr.mxu0 0.0
        %2038 = vmatpush1.msra.mxu0 0.0
        %2039 = vmatprep.subr.mxu0 0.0
        %2040 = vmatpush1.msra.mxu0 0.0
        %2041 = vmatprep.subr.mxu0 0.0
        %2042 = vmatpush1.msra.mxu0 0.0
        %2043 = vmatprep.subr.mxu0 0.0
        %2044 = vmatpush1.msra.mxu0 0.0
        %2045 = vmatprep.subr.mxu0 0.0
        %2046 = vmatpush1.msra.mxu0 0.0
        %2047 = vmatprep.subr.mxu0 0.0
        %2048 = vmatpush1.msra.mxu0 0.0
        %2049 = vmatprep.subr.mxu0 0.0
        %2050 = vmatpush1.msra.mxu0 0.0
        %2051 = vmatprep.subr.mxu0 0.0
        %2052 = vmatpush1.msra.mxu0 0.0
        %2053 = vmatprep.subr.mxu0 0.0
        %2054 = vmatpush1.msra.mxu0 0.0
        %2055 = vmatprep.subr.mxu0 0.0
        %2056 = vmatpush1.msra.mxu0 0.0
        %2057 = vmatprep.subr.mxu0 0.0
        %2058 = vmatpush1.msra.mxu0 0.0
        %2059 = vmatprep.subr.mxu0 0.0
        %2060 = vmatpush1.msra.mxu0 0.0
        %2061 = vmatprep.subr.mxu0 0.0
        %2062 = vmatpush1.msra.mxu0 0.0
        %2063 = vmatprep.subr.mxu0 0.0
        %2064 = vmatpush1.msra.mxu0 0.0
        %2065 = vmatprep.subr.mxu0 0.0
        %2066 = vmatpush1.msra.mxu0 0.0
        %2067 = vmatprep.subr.mxu0 0.0
        %2068 = vmatpush1.msra.mxu0 0.0
        %2069 = vmatprep.subr.mxu0 0.0
        %2070 = vmatpush1.msra.mxu0 0.0
        %2071 = vmatprep.mubr.f32.mxu0 0.0
        %2072 = vmatmul.mubr.f32.gmra.mrb[0].mxu0 %v2005
        %v2073 = vpop.f32.mrb[0].mxu0
        %v2074 = vadd.f32 0.0, %v2073
        %v2075 = vpop.f32.mrb[0].mxu0
        %2076 = vdwg.mxu0
        %s2077 = scalar_lea.vmem %s5, 224
        %v2078 = vld [vmem:[%s2077] sm:$0xff]
        %v2079 = vld [vmem:[%s2077 + $0x8] sm:$0xff]
        %v2080 = vld [vmem:[%s2077 + $0x10] sm:$0xff]
        %v2081 = vld [vmem:[%s2077 + $0x18] sm:$0xff]
        %v2082 = vld [vmem:[%s2077 + $0x20] sm:$0xff]
        %v2083 = vld [vmem:[%s2077 + $0x28] sm:$0xff]
        %v2084 = vld [vmem:[%s2077 + $0x30] sm:$0x3]
        %v2086 = vsel %vm685, %v2084, 0
        %2088 = vmatprep.subr.mxu0 0.0
        %2089 = vmatpush1.msra.mxu0 %v2078
        %2090 = vmatprep.subr.mxu0 0.0
        %2091 = vmatpush1.msra.mxu0 %v2079
        %2092 = vmatprep.subr.mxu0 0.0
        %2093 = vmatpush1.msra.mxu0 %v2080
        %2094 = vmatprep.subr.mxu0 0.0
        %2095 = vmatpush1.msra.mxu0 %v2081
        %2096 = vmatprep.subr.mxu0 0.0
        %2097 = vmatpush1.msra.mxu0 %v2082
        %2098 = vmatprep.subr.mxu0 0.0
        %2099 = vmatpush1.msra.mxu0 %v2083
        %2100 = vmatprep.subr.mxu0 0.0
        %2101 = vmatpush1.msra.mxu0 %v2086
        %2102 = vmatprep.subr.mxu0 0.0
        %2103 = vmatpush1.msra.mxu0 0.0
        %2104 = vmatprep.subr.mxu0 0.0
        %2105 = vmatpush1.msra.mxu0 0.0
        %2106 = vmatprep.subr.mxu0 0.0
        %2107 = vmatpush1.msra.mxu0 0.0
        %2108 = vmatprep.subr.mxu0 0.0
        %2109 = vmatpush1.msra.mxu0 0.0
        %2110 = vmatprep.subr.mxu0 0.0
        %2111 = vmatpush1.msra.mxu0 0.0
        %2112 = vmatprep.subr.mxu0 0.0
        %2113 = vmatpush1.msra.mxu0 0.0
        %2114 = vmatprep.subr.mxu0 0.0
        %2115 = vmatpush1.msra.mxu0 0.0
        %2116 = vmatprep.subr.mxu0 0.0
        %2117 = vmatpush1.msra.mxu0 0.0
        %2118 = vmatprep.subr.mxu0 0.0
        %2119 = vmatpush1.msra.mxu0 0.0
        %2120 = vmatprep.subr.mxu0 0.0
        %2121 = vmatpush1.msra.mxu0 0.0
        %2122 = vmatprep.subr.mxu0 0.0
        %2123 = vmatpush1.msra.mxu0 0.0
        %2124 = vmatprep.subr.mxu0 0.0
        %2125 = vmatpush1.msra.mxu0 0.0
        %2126 = vmatprep.subr.mxu0 0.0
        %2127 = vmatpush1.msra.mxu0 0.0
        %2128 = vmatprep.subr.mxu0 0.0
        %2129 = vmatpush1.msra.mxu0 0.0
        %2130 = vmatprep.subr.mxu0 0.0
        %2131 = vmatpush1.msra.mxu0 0.0
        %2132 = vmatprep.subr.mxu0 0.0
        %2133 = vmatpush1.msra.mxu0 0.0
        %2134 = vmatprep.subr.mxu0 0.0
        %2135 = vmatpush1.msra.mxu0 0.0
        %2136 = vmatprep.subr.mxu0 0.0
        %2137 = vmatpush1.msra.mxu0 0.0
        %2138 = vmatprep.subr.mxu0 0.0
        %2139 = vmatpush1.msra.mxu0 0.0
        %2140 = vmatprep.subr.mxu0 0.0
        %2141 = vmatpush1.msra.mxu0 0.0
        %2142 = vmatprep.subr.mxu0 0.0
        %2143 = vmatpush1.msra.mxu0 0.0
        %2144 = vmatprep.subr.mxu0 0.0
        %2145 = vmatpush1.msra.mxu0 0.0
        %2146 = vmatprep.subr.mxu0 0.0
        %2147 = vmatpush1.msra.mxu0 0.0
        %2148 = vmatprep.subr.mxu0 0.0
        %2149 = vmatpush1.msra.mxu0 0.0
        %2150 = vmatprep.subr.mxu0 0.0
        %2151 = vmatpush1.msra.mxu0 0.0
        %2152 = vmatprep.mubr.f32.mxu0 0.0
        %2153 = vmatmul.mubr.f32.gmra.mrb[0].mxu0 %v683
        %v2154 = vpop.f32.mrb[0].mxu0
        %v2155 = vadd.f32 0.0, %v2154
        %v2156 = vpop.f32.mrb[0].mxu0
        %2157 = vdwg.mxu0
        %v2158 = vtanh.pop %v2155
        %v2159 = vsub.f32 %v2074, %v2158
        %v2160 = vmul.f32 %v2158, %v2158
        %v2161 = vsub.f32 1.0, %v2160
        %v2162 = vmul.f32 %v2159, %v2161
        %s2163 = scalar_lea.vmem %s6, 96
        %v2164 = vld [vmem:[%s2163] sm:$0xff]
        %v2165 = vld [vmem:[%s2163 + $0x8] sm:$0xff]
        %v2166 = vld [vmem:[%s2163 + $0x10] sm:$0xf]
        %v2168 = vsel %vm348, %v2162, 0
        %v2171 = vsel %vm361, %v2166, 0
        %2173 = vmatprep.subr.mxu0 0.0
        %2174 = vmatpush1.msra.mxu0 %v2164
        %2175 = vmatprep.subr.mxu0 0.0
        %2176 = vmatpush1.msra.mxu0 %v2165
        %2177 = vmatprep.subr.mxu0 0.0
        %2178 = vmatpush1.msra.mxu0 %v2171
        %2179 = vmatprep.subr.mxu0 0.0
        %2180 = vmatpush1.msra.mxu0 0.0
        %2181 = vmatprep.subr.mxu0 0.0
        %2182 = vmatpush1.msra.mxu0 0.0
        %2183 = vmatprep.subr.mxu0 0.0
        %2184 = vmatpush1.msra.mxu0 0.0
        %2185 = vmatprep.subr.mxu0 0.0
        %2186 = vmatpush1.msra.mxu0 0.0
        %2187 = vmatprep.subr.mxu0 0.0
        %2188 = vmatpush1.msra.mxu0 0.0
        %2189 = vmatprep.subr.mxu0 0.0
        %2190 = vmatpush1.msra.mxu0 0.0
        %2191 = vmatprep.subr.mxu0 0.0
        %2192 = vmatpush1.msra.mxu0 0.0
        %2193 = vmatprep.subr.mxu0 0.0
        %2194 = vmatpush1.msra.mxu0 0.0
        %2195 = vmatprep.subr.mxu0 0.0
        %2196 = vmatpush1.msra.mxu0 0.0
        %2197 = vmatprep.subr.mxu0 0.0
        %2198 = vmatpush1.msra.mxu0 0.0
        %2199 = vmatprep.subr.mxu0 0.0
        %2200 = vmatpush1.msra.mxu0 0.0
        %2201 = vmatprep.subr.mxu0 0.0
        %2202 = vmatpush1.msra.mxu0 0.0
        %2203 = vmatprep.subr.mxu0 0.0
        %2204 = vmatpush1.msra.mxu0 0.0
        %2205 = vmatprep.subr.mxu0 0.0
        %2206 = vmatpush1.msra.mxu0 0.0
        %2207 = vmatprep.subr.mxu0 0.0
        %2208 = vmatpush1.msra.mxu0 0.0
        %2209 = vmatprep.subr.mxu0 0.0
        %2210 = vmatpush1.msra.mxu0 0.0
        %2211 = vmatprep.subr.mxu0 0.0
        %2212 = vmatpush1.msra.mxu0 0.0
        %2213 = vmatprep.subr.mxu0 0.0
        %2214 = vmatpush1.msra.mxu0 0.0
        %2215 = vmatprep.subr.mxu0 0.0
        %2216 = vmatpush1.msra.mxu0 0.0
        %2217 = vmatprep.subr.mxu0 0.0
        %2218 = vmatpush1.msra.mxu0 0.0
        %2219 = vmatprep.subr.mxu0 0.0
        %2220 = vmatpush1.msra.mxu0 0.0
        %2221 = vmatprep.subr.mxu0 0.0
        %2222 = vmatpush1.msra.mxu0 0.0
        %2223 = vmatprep.subr.mxu0 0.0
        %2224 = vmatpush1.msra.mxu0 0.0
        %2225 = vmatprep.subr.mxu0 0.0
        %2226 = vmatpush1.msra.mxu0 0.0
        %2227 = vmatprep.subr.mxu0 0.0
        %2228 = vmatpush1.msra.mxu0 0.0
        %2229 = vmatprep.subr.mxu0 0.0
        %2230 = vmatpush1.msra.mxu0 0.0
        %2231 = vmatprep.subr.mxu0 0.0
        %2232 = vmatpush1.msra.mxu0 0.0
        %2233 = vmatprep.subr.mxu0 0.0
        %2234 = vmatpush1.msra.mxu0 0.0
        %2235 = vmatprep.subr.mxu0 0.0
        %2236 = vmatpush1.msra.mxu0 0.0
        %2237 = vmatprep.mubr.f32.mxu0 0.0
        %2238 = vmatmul.mubr.f32.gmra.mrb[0].mxu0 %v2168
        %v2239 = vpop.f32.mrb[0].mxu0
        %v2240 = vadd.f32 0.0, %v2239
        %v2241 = vpop.f32.mrb[0].mxu0
        %2242 = vdwg.mxu0
        %v2243 = vmul.f32 %v2240, -0.2
        %v2244 = vadd.f32 %v1892, %v2243
        %s2245 = scalar_lea.vmem %s8, 128
        %v2246 = vld [vmem:[%s2245] sm:$0xff]
        %v2247 = vld [vmem:[%s2245 + $0x8] sm:$0xff]
        %v2248 = vld [vmem:[%s2245 + $0x10] sm:$0xff]
        %v2249 = vld [vmem:[%s2245 + $0x18] sm:$0xff]
        %v2251 = vsel %vm1097, %v2246, 0
        %v2254 = vsel %vm1097, %v2247, 0
        %v2257 = vsel %vm1097, %v2248, 0
        %v2260 = vsel %vm1097, %v2249, 0
        %v2263 = vsel %vm685, %v2159, 0
        %2265 = vmatprep.subr.mxu0 0.0
        %2266 = vmatpush1.msra.mxu0 %v2263
        %2267 = vmatprep.subr.mxu0 0.0
        %2268 = vmatpush1.msra.mxu0 0.0
        %2269 = vmatprep.subr.mxu0 0.0
        %2270 = vmatpush1.msra.mxu0 0.0
        %2271 = vmatprep.subr.mxu0 0.0
        %2272 = vmatpush1.msra.mxu0 0.0
        %2273 = vmatprep.subr.mxu0 0.0
        %2274 = vmatpush1.msra.mxu0 0.0
        %2275 = vmatprep.subr.mxu0 0.0
        %2276 = vmatpush1.msra.mxu0 0.0
        %2277 = vmatprep.subr.mxu0 0.0
        %2278 = vmatpush1.msra.mxu0 0.0
        %2279 = vmatprep.subr.mxu0 0.0
        %2280 = vmatpush1.msra.mxu0 0.0
        %2281 = vmatprep.subr.mxu0 0.0
        %2282 = vmatpush1.msra.mxu0 0.0
        %2283 = vmatprep.subr.mxu0 0.0
        %2284 = vmatpush1.msra.mxu0 0.0
        %2285 = vmatprep.subr.mxu0 0.0
        %2286 = vmatpush1.msra.mxu0 0.0
        %2287 = vmatprep.subr.mxu0 0.0
        %2288 = vmatpush1.msra.mxu0 0.0
        %2289 = vmatprep.subr.mxu0 0.0
        %2290 = vmatpush1.msra.mxu0 0.0
        %2291 = vmatprep.subr.mxu0 0.0
        %2292 = vmatpush1.msra.mxu0 0.0
        %2293 = vmatprep.subr.mxu0 0.0
        %2294 = vmatpush1.msra.mxu0 0.0
        %2295 = vmatprep.subr.mxu0 0.0
        %2296 = vmatpush1.msra.mxu0 0.0
        %2297 = vmatprep.subr.mxu0 0.0
        %2298 = vmatpush1.msra.mxu0 0.0
        %2299 = vmatprep.subr.mxu0 0.0
        %2300 = vmatpush1.msra.mxu0 0.0
        %2301 = vmatprep.subr.mxu0 0.0
        %2302 = vmatpush1.msra.mxu0 0.0
        %2303 = vmatprep.subr.mxu0 0.0
        %2304 = vmatpush1.msra.mxu0 0.0
        %2305 = vmatprep.subr.mxu0 0.0
        %2306 = vmatpush1.msra.mxu0 0.0
        %2307 = vmatprep.subr.mxu0 0.0
        %2308 = vmatpush1.msra.mxu0 0.0
        %2309 = vmatprep.subr.mxu0 0.0
        %2310 = vmatpush1.msra.mxu0 0.0
        %2311 = vmatprep.subr.mxu0 0.0
        %2312 = vmatpush1.msra.mxu0 0.0
        %2313 = vmatprep.subr.mxu0 0.0
        %2314 = vmatpush1.msra.mxu0 0.0
        %2315 = vmatprep.subr.mxu0 0.0
        %2316 = vmatpush1.msra.mxu0 0.0
        %2317 = vmatprep.subr.mxu0 0.0
        %2318 = vmatpush1.msra.mxu0 0.0
        %2319 = vmatprep.subr.mxu0 0.0
        %2320 = vmatpush1.msra.mxu0 0.0
        %2321 = vmatprep.subr.mxu0 0.0
        %2322 = vmatpush1.msra.mxu0 0.0
        %2323 = vmatprep.subr.mxu0 0.0
        %2324 = vmatpush1.msra.mxu0 0.0
        %2325 = vmatprep.subr.mxu0 0.0
        %2326 = vmatpush1.msra.mxu0 0.0
        %2327 = vmatprep.subr.mxu0 0.0
        %2328 = vmatpush1.msra.mxu0 0.0
        %2329 = vmatprep.mubr.f32.mxu0 0.0
        %2330 = vmatmul.mubr.f32.gmra.mrb[0].mxu0 %v2251
        %v2331 = vpop.f32.mrb[0].mxu0
        %v2332 = vadd.f32 0.0, %v2331
        %v2333 = vpop.f32.mrb[0].mxu0
        %2334 = vmatprep.mubr.f32.mxu0 0.0
        %2335 = vmatmul.mubr.f32.gmra.mrb[0].mxu0 %v2254
        %v2336 = vpop.f32.mrb[0].mxu0
        %v2337 = vadd.f32 0.0, %v2336
        %v2338 = vpop.f32.mrb[0].mxu0
        %2339 = vmatprep.mubr.f32.mxu0 0.0
        %2340 = vmatmul.mubr.f32.gmra.mrb[0].mxu0 %v2257
        %v2341 = vpop.f32.mrb[0].mxu0
        %v2342 = vadd.f32 0.0, %v2341
        %v2343 = vpop.f32.mrb[0].mxu0
        %2344 = vmatprep.mubr.f32.mxu0 0.0
        %2345 = vmatmul.mubr.f32.gmra.mrb[0].mxu0 %v2260
        %v2346 = vpop.f32.mrb[0].mxu0
        %v2347 = vadd.f32 0.0, %v2346
        %v2348 = vpop.f32.mrb[0].mxu0
        %2349 = vdwg.mxu0
        %v2350 = vadd.f32 %v1998, %v2332
        %v2351 = vadd.f32 %v1999, %v2337
        %v2352 = vadd.f32 %v2000, %v2342
        %v2353 = vadd.f32 %v2001, %v2347
        %s2354 = scalar_lea.vmem %s7, 10
        %v2355 = vld [vmem:[%s2354] sm:$0x3]
        %v2357 = vsel %vm600, %v2355, 0
        %2359 = vmatprep.subr.mxu0 0.0
        %2360 = vmatpush1.msra.mxu0 %v340
        %2361 = vmatprep.subr.mxu0 0.0
        %2362 = vmatpush1.msra.mxu0 %v341
        %2363 = vmatprep.subr.mxu0 0.0
        %2364 = vmatpush1.msra.mxu0 %v342
        %2365 = vmatprep.subr.mxu0 0.0
        %2366 = vmatpush1.msra.mxu0 %v343
        %2367 = vmatprep.subr.mxu0 0.0
        %2368 = vmatpush1.msra.mxu0 0.0
        %2369 = vmatprep.subr.mxu0 0.0
        %2370 = vmatpush1.msra.mxu0 0.0
        %2371 = vmatprep.subr.mxu0 0.0
        %2372 = vmatpush1.msra.mxu0 0.0
        %2373 = vmatprep.subr.mxu0 0.0
        %2374 = vmatpush1.msra.mxu0 0.0
        %2375 = vmatprep.subr.mxu0 0.0
        %2376 = vmatpush1.msra.mxu0 0.0
        %2377 = vmatprep.subr.mxu0 0.0
        %2378 = vmatpush1.msra.mxu0 0.0
        %2379 = vmatprep.subr.mxu0 0.0
        %2380 = vmatpush1.msra.mxu0 0.0
        %2381 = vmatprep.subr.mxu0 0.0
        %2382 = vmatpush1.msra.mxu0 0.0
        %2383 = vmatprep.subr.mxu0 0.0
        %2384 = vmatpush1.msra.mxu0 0.0
        %2385 = vmatprep.subr.mxu0 0.0
        %2386 = vmatpush1.msra.mxu0 0.0
        %2387 = vmatprep.subr.mxu0 0.0
        %2388 = vmatpush1.msra.mxu0 0.0
        %2389 = vmatprep.subr.mxu0 0.0
        %2390 = vmatpush1.msra.mxu0 0.0
        %2391 = vmatprep.subr.mxu0 0.0
        %2392 = vmatpush1.msra.mxu0 0.0
        %2393 = vmatprep.subr.mxu0 0.0
        %2394 = vmatpush1.msra.mxu0 0.0
        %2395 = vmatprep.subr.mxu0 0.0
        %2396 = vmatpush1.msra.mxu0 0.0
        %2397 = vmatprep.subr.mxu0 0.0
        %2398 = vmatpush1.msra.mxu0 0.0
        %2399 = vmatprep.subr.mxu0 0.0
        %2400 = vmatpush1.msra.mxu0 0.0
        %2401 = vmatprep.subr.mxu0 0.0
        %2402 = vmatpush1.msra.mxu0 0.0
        %2403 = vmatprep.subr.mxu0 0.0
        %2404 = vmatpush1.msra.mxu0 0.0
        %2405 = vmatprep.subr.mxu0 0.0
        %2406 = vmatpush1.msra.mxu0 0.0
        %2407 = vmatprep.subr.mxu0 0.0
        %2408 = vmatpush1.msra.mxu0 0.0
        %2409 = vmatprep.subr.mxu0 0.0
        %2410 = vmatpush1.msra.mxu0 0.0
        %2411 = vmatprep.subr.mxu0 0.0
        %2412 = vmatpush1.msra.mxu0 0.0
        %2413 = vmatprep.subr.mxu0 0.0
        %2414 = vmatpush1.msra.mxu0 0.0
        %2415 = vmatprep.subr.mxu0 0.0
        %2416 = vmatpush1.msra.mxu0 0.0
        %2417 = vmatprep.subr.mxu0 0.0
        %2418 = vmatpush1.msra.mxu0 0.0
        %2419 = vmatprep.subr.mxu0 0.0
        %2420 = vmatpush1.msra.mxu0 0.0
        %2421 = vmatprep.subr.mxu0 0.0
        %2422 = vmatpush1.msra.mxu0 0.0
        %2423 = vmatprep.mubr.f32.mxu0 0.0
        %2424 = vmatmul.mubr.f32.gmra.mrb[0].mxu0 %v2357
        %v2425 = vpop.f32.mrb[0].mxu0
        %v2426 = vadd.f32 0.0, %v2425
        %v2427 = vpop.f32.mrb[0].mxu0
        %2428 = vdwg.mxu0
        %s2429 = scalar_lea.vmem %s5, 280
        %v2430 = vld [vmem:[%s2429] sm:$0xff]
        %v2431 = vld [vmem:[%s2429 + $0x8] sm:$0xff]
        %v2432 = vld [vmem:[%s2429 + $0x10] sm:$0xff]
        %v2433 = vld [vmem:[%s2429 + $0x18] sm:$0xff]
        %v2434 = vld [vmem:[%s2429 + $0x20] sm:$0xff]
        %v2435 = vld [vmem:[%s2429 + $0x28] sm:$0xff]
        %v2436 = vld [vmem:[%s2429 + $0x30] sm:$0x3]
        %v2438 = vsel %vm685, %v2436, 0
        %2440 = vmatprep.subr.mxu0 0.0
        %2441 = vmatpush1.msra.mxu0 %v2430
        %2442 = vmatprep.subr.mxu0 0.0
        %2443 = vmatpush1.msra.mxu0 %v2431
        %2444 = vmatprep.subr.mxu0 0.0
        %2445 = vmatpush1.msra.mxu0 %v2432
        %2446 = vmatprep.subr.mxu0 0.0
        %2447 = vmatpush1.msra.mxu0 %v2433
        %2448 = vmatprep.subr.mxu0 0.0
        %2449 = vmatpush1.msra.mxu0 %v2434
        %2450 = vmatprep.subr.mxu0 0.0
        %2451 = vmatpush1.msra.mxu0 %v2435
        %2452 = vmatprep.subr.mxu0 0.0
        %2453 = vmatpush1.msra.mxu0 %v2438
        %2454 = vmatprep.subr.mxu0 0.0
        %2455 = vmatpush1.msra.mxu0 0.0
        %2456 = vmatprep.subr.mxu0 0.0
        %2457 = vmatpush1.msra.mxu0 0.0
        %2458 = vmatprep.subr.mxu0 0.0
        %2459 = vmatpush1.msra.mxu0 0.0
        %2460 = vmatprep.subr.mxu0 0.0
        %2461 = vmatpush1.msra.mxu0 0.0
        %2462 = vmatprep.subr.mxu0 0.0
        %2463 = vmatpush1.msra.mxu0 0.0
        %2464 = vmatprep.subr.mxu0 0.0
        %2465 = vmatpush1.msra.mxu0 0.0
        %2466 = vmatprep.subr.mxu0 0.0
        %2467 = vmatpush1.msra.mxu0 0.0
        %2468 = vmatprep.subr.mxu0 0.0
        %2469 = vmatpush1.msra.mxu0 0.0
        %2470 = vmatprep.subr.mxu0 0.0
        %2471 = vmatpush1.msra.mxu0 0.0
        %2472 = vmatprep.subr.mxu0 0.0
        %2473 = vmatpush1.msra.mxu0 0.0
        %2474 = vmatprep.subr.mxu0 0.0
        %2475 = vmatpush1.msra.mxu0 0.0
        %2476 = vmatprep.subr.mxu0 0.0
        %2477 = vmatpush1.msra.mxu0 0.0
        %2478 = vmatprep.subr.mxu0 0.0
        %2479 = vmatpush1.msra.mxu0 0.0
        %2480 = vmatprep.subr.mxu0 0.0
        %2481 = vmatpush1.msra.mxu0 0.0
        %2482 = vmatprep.subr.mxu0 0.0
        %2483 = vmatpush1.msra.mxu0 0.0
        %2484 = vmatprep.subr.mxu0 0.0
        %2485 = vmatpush1.msra.mxu0 0.0
        %2486 = vmatprep.subr.mxu0 0.0
        %2487 = vmatpush1.msra.mxu0 0.0
        %2488 = vmatprep.subr.mxu0 0.0
        %2489 = vmatpush1.msra.mxu0 0.0
        %2490 = vmatprep.subr.mxu0 0.0
        %2491 = vmatpush1.msra.mxu0 0.0
        %2492 = vmatprep.subr.mxu0 0.0
        %2493 = vmatpush1.msra.mxu0 0.0
        %2494 = vmatprep.subr.mxu0 0.0
        %2495 = vmatpush1.msra.mxu0 0.0
        %2496 = vmatprep.subr.mxu0 0.0
        %2497 = vmatpush1.msra.mxu0 0.0
        %2498 = vmatprep.subr.mxu0 0.0
        %2499 = vmatpush1.msra.mxu0 0.0
        %2500 = vmatprep.subr.mxu0 0.0
        %2501 = vmatpush1.msra.mxu0 0.0
        %2502 = vmatprep.subr.mxu0 0.0
        %2503 = vmatpush1.msra.mxu0 0.0
        %2504 = vmatprep.mubr.f32.mxu0 0.0
        %2505 = vmatmul.mubr.f32.gmra.mrb[0].mxu0 %v683
        %v2506 = vpop.f32.mrb[0].mxu0
        %v2507 = vadd.f32 0.0, %v2506
        %v2508 = vpop.f32.mrb[0].mxu0
        %2509 = vdwg.mxu0
        %v2510 = vtanh.pop %v2507
        %v2511 = vsub.f32 %v2426, %v2510
        %v2512 = vmul.f32 %v2510, %v2510
        %v2513 = vsub.f32 1.0, %v2512
        %v2514 = vmul.f32 %v2511, %v2513
        %s2515 = scalar_lea.vmem %s6, 120
        %v2516 = vld [vmem:[%s2515] sm:$0xff]
        %v2517 = vld [vmem:[%s2515 + $0x8] sm:$0xff]
        %v2518 = vld [vmem:[%s2515 + $0x10] sm:$0xf]
        %v2520 = vsel %vm348, %v2514, 0
        %v2523 = vsel %vm361, %v2518, 0
        %2525 = vmatprep.subr.mxu0 0.0
        %2526 = vmatpush1.msra.mxu0 %v2516
        %2527 = vmatprep.subr.mxu0 0.0
        %2528 = vmatpush1.msra.mxu0 %v2517
        %2529 = vmatprep.subr.mxu0 0.0
        %2530 = vmatpush1.msra.mxu0 %v2523
        %2531 = vmatprep.subr.mxu0 0.0
        %2532 = vmatpush1.msra.mxu0 0.0
        %2533 = vmatprep.subr.mxu0 0.0
        %2534 = vmatpush1.msra.mxu0 0.0
        %2535 = vmatprep.subr.mxu0 0.0
        %2536 = vmatpush1.msra.mxu0 0.0
        %2537 = vmatprep.subr.mxu0 0.0
        %2538 = vmatpush1.msra.mxu0 0.0
        %2539 = vmatprep.subr.mxu0 0.0
        %2540 = vmatpush1.msra.mxu0 0.0
        %2541 = vmatprep.subr.mxu0 0.0
        %2542 = vmatpush1.msra.mxu0 0.0
        %2543 = vmatprep.subr.mxu0 0.0
        %2544 = vmatpush1.msra.mxu0 0.0
        %2545 = vmatprep.subr.mxu0 0.0
        %2546 = vmatpush1.msra.mxu0 0.0
        %2547 = vmatprep.subr.mxu0 0.0
        %2548 = vmatpush1.msra.mxu0 0.0
        %2549 = vmatprep.subr.mxu0 0.0
        %2550 = vmatpush1.msra.mxu0 0.0
        %2551 = vmatprep.subr.mxu0 0.0
        %2552 = vmatpush1.msra.mxu0 0.0
        %2553 = vmatprep.subr.mxu0 0.0
        %2554 = vmatpush1.msra.mxu0 0.0
        %2555 = vmatprep.subr.mxu0 0.0
        %2556 = vmatpush1.msra.mxu0 0.0
        %2557 = vmatprep.subr.mxu0 0.0
        %2558 = vmatpush1.msra.mxu0 0.0
        %2559 = vmatprep.subr.mxu0 0.0
        %2560 = vmatpush1.msra.mxu0 0.0
        %2561 = vmatprep.subr.mxu0 0.0
        %2562 = vmatpush1.msra.mxu0 0.0
        %2563 = vmatprep.subr.mxu0 0.0
        %2564 = vmatpush1.msra.mxu0 0.0
        %2565 = vmatprep.subr.mxu0 0.0
        %2566 = vmatpush1.msra.mxu0 0.0
        %2567 = vmatprep.subr.mxu0 0.0
        %2568 = vmatpush1.msra.mxu0 0.0
        %2569 = vmatprep.subr.mxu0 0.0
        %2570 = vmatpush1.msra.mxu0 0.0
        %2571 = vmatprep.subr.mxu0 0.0
        %2572 = vmatpush1.msra.mxu0 0.0
        %2573 = vmatprep.subr.mxu0 0.0
        %2574 = vmatpush1.msra.mxu0 0.0
        %2575 = vmatprep.subr.mxu0 0.0
        %2576 = vmatpush1.msra.mxu0 0.0
        %2577 = vmatprep.subr.mxu0 0.0
        %2578 = vmatpush1.msra.mxu0 0.0
        %2579 = vmatprep.subr.mxu0 0.0
        %2580 = vmatpush1.msra.mxu0 0.0
        %2581 = vmatprep.subr.mxu0 0.0
        %2582 = vmatpush1.msra.mxu0 0.0
        %2583 = vmatprep.subr.mxu0 0.0
        %2584 = vmatpush1.msra.mxu0 0.0
        %2585 = vmatprep.subr.mxu0 0.0
        %2586 = vmatpush1.msra.mxu0 0.0
        %2587 = vmatprep.subr.mxu0 0.0
        %2588 = vmatpush1.msra.mxu0 0.0
        %2589 = vmatprep.mubr.f32.mxu0 0.0
        %2590 = vmatmul.mubr.f32.gmra.mrb[0].mxu0 %v2520
        %v2591 = vpop.f32.mrb[0].mxu0
        %v2592 = vadd.f32 0.0, %v2591
        %v2593 = vpop.f32.mrb[0].mxu0
        %2594 = vdwg.mxu0
        %v2595 = vmul.f32 %v2592, -0.2
        %v2596 = vadd.f32 %v2244, %v2595
        %s2597 = scalar_lea.vmem %s8, 160
        %v2598 = vld [vmem:[%s2597] sm:$0xff]
        %v2599 = vld [vmem:[%s2597 + $0x8] sm:$0xff]
        %v2600 = vld [vmem:[%s2597 + $0x10] sm:$0xff]
        %v2601 = vld [vmem:[%s2597 + $0x18] sm:$0xff]
        %v2603 = vsel %vm1097, %v2598, 0
        %v2606 = vsel %vm1097, %v2599, 0
        %v2609 = vsel %vm1097, %v2600, 0
        %v2612 = vsel %vm1097, %v2601, 0
        %v2615 = vsel %vm685, %v2511, 0
        %2617 = vmatprep.subr.mxu0 0.0
        %2618 = vmatpush1.msra.mxu0 %v2615
        %2619 = vmatprep.subr.mxu0 0.0
        %2620 = vmatpush1.msra.mxu0 0.0
        %2621 = vmatprep.subr.mxu0 0.0
        %2622 = vmatpush1.msra.mxu0 0.0
        %2623 = vmatprep.subr.mxu0 0.0
        %2624 = vmatpush1.msra.mxu0 0.0
        %2625 = vmatprep.subr.mxu0 0.0
        %2626 = vmatpush1.msra.mxu0 0.0
        %2627 = vmatprep.subr.mxu0 0.0
        %2628 = vmatpush1.msra.mxu0 0.0
        %2629 = vmatprep.subr.mxu0 0.0
        %2630 = vmatpush1.msra.mxu0 0.0
        %2631 = vmatprep.subr.mxu0 0.0
        %2632 = vmatpush1.msra.mxu0 0.0
        %2633 = vmatprep.subr.mxu0 0.0
        %2634 = vmatpush1.msra.mxu0 0.0
        %2635 = vmatprep.subr.mxu0 0.0
        %2636 = vmatpush1.msra.mxu0 0.0
        %2637 = vmatprep.subr.mxu0 0.0
        %2638 = vmatpush1.msra.mxu0 0.0
        %2639 = vmatprep.subr.mxu0 0.0
        %2640 = vmatpush1.msra.mxu0 0.0
        %2641 = vmatprep.subr.mxu0 0.0
        %2642 = vmatpush1.msra.mxu0 0.0
        %2643 = vmatprep.subr.mxu0 0.0
        %2644 = vmatpush1.msra.mxu0 0.0
        %2645 = vmatprep.subr.mxu0 0.0
        %2646 = vmatpush1.msra.mxu0 0.0
        %2647 = vmatprep.subr.mxu0 0.0
        %2648 = vmatpush1.msra.mxu0 0.0
        %2649 = vmatprep.subr.mxu0 0.0
        %2650 = vmatpush1.msra.mxu0 0.0
        %2651 = vmatprep.subr.mxu0 0.0
        %2652 = vmatpush1.msra.mxu0 0.0
        %2653 = vmatprep.subr.mxu0 0.0
        %2654 = vmatpush1.msra.mxu0 0.0
        %2655 = vmatprep.subr.mxu0 0.0
        %2656 = vmatpush1.msra.mxu0 0.0
        %2657 = vmatprep.subr.mxu0 0.0
        %2658 = vmatpush1.msra.mxu0 0.0
        %2659 = vmatprep.subr.mxu0 0.0
        %2660 = vmatpush1.msra.mxu0 0.0
        %2661 = vmatprep.subr.mxu0 0.0
        %2662 = vmatpush1.msra.mxu0 0.0
        %2663 = vmatprep.subr.mxu0 0.0
        %2664 = vmatpush1.msra.mxu0 0.0
        %2665 = vmatprep.subr.mxu0 0.0
        %2666 = vmatpush1.msra.mxu0 0.0
        %2667 = vmatprep.subr.mxu0 0.0
        %2668 = vmatpush1.msra.mxu0 0.0
        %2669 = vmatprep.subr.mxu0 0.0
        %2670 = vmatpush1.msra.mxu0 0.0
        %2671 = vmatprep.subr.mxu0 0.0
        %2672 = vmatpush1.msra.mxu0 0.0
        %2673 = vmatprep.subr.mxu0 0.0
        %2674 = vmatpush1.msra.mxu0 0.0
        %2675 = vmatprep.subr.mxu0 0.0
        %2676 = vmatpush1.msra.mxu0 0.0
        %2677 = vmatprep.subr.mxu0 0.0
        %2678 = vmatpush1.msra.mxu0 0.0
        %2679 = vmatprep.subr.mxu0 0.0
        %2680 = vmatpush1.msra.mxu0 0.0
        %2681 = vmatprep.mubr.f32.mxu0 0.0
        %2682 = vmatmul.mubr.f32.gmra.mrb[0].mxu0 %v2603
        %v2683 = vpop.f32.mrb[0].mxu0
        %v2684 = vadd.f32 0.0, %v2683
        %v2685 = vpop.f32.mrb[0].mxu0
        %2686 = vmatprep.mubr.f32.mxu0 0.0
        %2687 = vmatmul.mubr.f32.gmra.mrb[0].mxu0 %v2606
        %v2688 = vpop.f32.mrb[0].mxu0
        %v2689 = vadd.f32 0.0, %v2688
        %v2690 = vpop.f32.mrb[0].mxu0
        %2691 = vmatprep.mubr.f32.mxu0 0.0
        %2692 = vmatmul.mubr.f32.gmra.mrb[0].mxu0 %v2609
        %v2693 = vpop.f32.mrb[0].mxu0
        %v2694 = vadd.f32 0.0, %v2693
        %v2695 = vpop.f32.mrb[0].mxu0
        %2696 = vmatprep.mubr.f32.mxu0 0.0
        %2697 = vmatmul.mubr.f32.gmra.mrb[0].mxu0 %v2612
        %v2698 = vpop.f32.mrb[0].mxu0
        %v2699 = vadd.f32 0.0, %v2698
        %v2700 = vpop.f32.mrb[0].mxu0
        %2701 = vdwg.mxu0
        %v2702 = vadd.f32 %v2350, %v2684
        %v2703 = vadd.f32 %v2351, %v2689
        %v2704 = vadd.f32 %v2352, %v2694
        %v2705 = vadd.f32 %v2353, %v2699
        %s2706 = scalar_lea.vmem %s7, 12
        %v2707 = vld [vmem:[%s2706] sm:$0x3]
        %v2709 = vsel %vm600, %v2707, 0
        %2711 = vmatprep.subr.mxu0 0.0
        %2712 = vmatpush1.msra.mxu0 %v340
        %2713 = vmatprep.subr.mxu0 0.0
        %2714 = vmatpush1.msra.mxu0 %v341
        %2715 = vmatprep.subr.mxu0 0.0
        %2716 = vmatpush1.msra.mxu0 %v342
        %2717 = vmatprep.subr.mxu0 0.0
        %2718 = vmatpush1.msra.mxu0 %v343
        %2719 = vmatprep.subr.mxu0 0.0
        %2720 = vmatpush1.msra.mxu0 0.0
        %2721 = vmatprep.subr.mxu0 0.0
        %2722 = vmatpush1.msra.mxu0 0.0
        %2723 = vmatprep.subr.mxu0 0.0
        %2724 = vmatpush1.msra.mxu0 0.0
        %2725 = vmatprep.subr.mxu0 0.0
        %2726 = vmatpush1.msra.mxu0 0.0
        %2727 = vmatprep.subr.mxu0 0.0
        %2728 = vmatpush1.msra.mxu0 0.0
        %2729 = vmatprep.subr.mxu0 0.0
        %2730 = vmatpush1.msra.mxu0 0.0
        %2731 = vmatprep.subr.mxu0 0.0
        %2732 = vmatpush1.msra.mxu0 0.0
        %2733 = vmatprep.subr.mxu0 0.0
        %2734 = vmatpush1.msra.mxu0 0.0
        %2735 = vmatprep.subr.mxu0 0.0
        %2736 = vmatpush1.msra.mxu0 0.0
        %2737 = vmatprep.subr.mxu0 0.0
        %2738 = vmatpush1.msra.mxu0 0.0
        %2739 = vmatprep.subr.mxu0 0.0
        %2740 = vmatpush1.msra.mxu0 0.0
        %2741 = vmatprep.subr.mxu0 0.0
        %2742 = vmatpush1.msra.mxu0 0.0
        %2743 = vmatprep.subr.mxu0 0.0
        %2744 = vmatpush1.msra.mxu0 0.0
        %2745 = vmatprep.subr.mxu0 0.0
        %2746 = vmatpush1.msra.mxu0 0.0
        %2747 = vmatprep.subr.mxu0 0.0
        %2748 = vmatpush1.msra.mxu0 0.0
        %2749 = vmatprep.subr.mxu0 0.0
        %2750 = vmatpush1.msra.mxu0 0.0
        %2751 = vmatprep.subr.mxu0 0.0
        %2752 = vmatpush1.msra.mxu0 0.0
        %2753 = vmatprep.subr.mxu0 0.0
        %2754 = vmatpush1.msra.mxu0 0.0
        %2755 = vmatprep.subr.mxu0 0.0
        %2756 = vmatpush1.msra.mxu0 0.0
        %2757 = vmatprep.subr.mxu0 0.0
        %2758 = vmatpush1.msra.mxu0 0.0
        %2759 = vmatprep.subr.mxu0 0.0
        %2760 = vmatpush1.msra.mxu0 0.0
        %2761 = vmatprep.subr.mxu0 0.0
        %2762 = vmatpush1.msra.mxu0 0.0
        %2763 = vmatprep.subr.mxu0 0.0
        %2764 = vmatpush1.msra.mxu0 0.0
        %2765 = vmatprep.subr.mxu0 0.0
        %2766 = vmatpush1.msra.mxu0 0.0
        %2767 = vmatprep.subr.mxu0 0.0
        %2768 = vmatpush1.msra.mxu0 0.0
        %2769 = vmatprep.subr.mxu0 0.0
        %2770 = vmatpush1.msra.mxu0 0.0
        %2771 = vmatprep.subr.mxu0 0.0
        %2772 = vmatpush1.msra.mxu0 0.0
        %2773 = vmatprep.subr.mxu0 0.0
        %2774 = vmatpush1.msra.mxu0 0.0
        %2775 = vmatprep.mubr.f32.mxu0 0.0
        %2776 = vmatmul.mubr.f32.gmra.mrb[0].mxu0 %v2709
        %v2777 = vpop.f32.mrb[0].mxu0
        %v2778 = vadd.f32 0.0, %v2777
        %v2779 = vpop.f32.mrb[0].mxu0
        %2780 = vdwg.mxu0
        %s2781 = scalar_lea.vmem %s5, 336
        %v2782 = vld [vmem:[%s2781] sm:$0xff]
        %v2783 = vld [vmem:[%s2781 + $0x8] sm:$0xff]
        %v2784 = vld [vmem:[%s2781 + $0x10] sm:$0xff]
        %v2785 = vld [vmem:[%s2781 + $0x18] sm:$0xff]
        %v2786 = vld [vmem:[%s2781 + $0x20] sm:$0xff]
        %v2787 = vld [vmem:[%s2781 + $0x28] sm:$0xff]
        %v2788 = vld [vmem:[%s2781 + $0x30] sm:$0x3]
        %v2790 = vsel %vm685, %v2788, 0
        %2792 = vmatprep.subr.mxu0 0.0
        %2793 = vmatpush1.msra.mxu0 %v2782
        %2794 = vmatprep.subr.mxu0 0.0
        %2795 = vmatpush1.msra.mxu0 %v2783
        %2796 = vmatprep.subr.mxu0 0.0
        %2797 = vmatpush1.msra.mxu0 %v2784
        %2798 = vmatprep.subr.mxu0 0.0
        %2799 = vmatpush1.msra.mxu0 %v2785
        %2800 = vmatprep.subr.mxu0 0.0
        %2801 = vmatpush1.msra.mxu0 %v2786
        %2802 = vmatprep.subr.mxu0 0.0
        %2803 = vmatpush1.msra.mxu0 %v2787
        %2804 = vmatprep.subr.mxu0 0.0
        %2805 = vmatpush1.msra.mxu0 %v2790
        %2806 = vmatprep.subr.mxu0 0.0
        %2807 = vmatpush1.msra.mxu0 0.0
        %2808 = vmatprep.subr.mxu0 0.0
        %2809 = vmatpush1.msra.mxu0 0.0
        %2810 = vmatprep.subr.mxu0 0.0
        %2811 = vmatpush1.msra.mxu0 0.0
        %2812 = vmatprep.subr.mxu0 0.0
        %2813 = vmatpush1.msra.mxu0 0.0
        %2814 = vmatprep.subr.mxu0 0.0
        %2815 = vmatpush1.msra.mxu0 0.0
        %2816 = vmatprep.subr.mxu0 0.0
        %2817 = vmatpush1.msra.mxu0 0.0
        %2818 = vmatprep.subr.mxu0 0.0
        %2819 = vmatpush1.msra.mxu0 0.0
        %2820 = vmatprep.subr.mxu0 0.0
        %2821 = vmatpush1.msra.mxu0 0.0
        %2822 = vmatprep.subr.mxu0 0.0
        %2823 = vmatpush1.msra.mxu0 0.0
        %2824 = vmatprep.subr.mxu0 0.0
        %2825 = vmatpush1.msra.mxu0 0.0
        %2826 = vmatprep.subr.mxu0 0.0
        %2827 = vmatpush1.msra.mxu0 0.0
        %2828 = vmatprep.subr.mxu0 0.0
        %2829 = vmatpush1.msra.mxu0 0.0
        %2830 = vmatprep.subr.mxu0 0.0
        %2831 = vmatpush1.msra.mxu0 0.0
        %2832 = vmatprep.subr.mxu0 0.0
        %2833 = vmatpush1.msra.mxu0 0.0
        %2834 = vmatprep.subr.mxu0 0.0
        %2835 = vmatpush1.msra.mxu0 0.0
        %2836 = vmatprep.subr.mxu0 0.0
        %2837 = vmatpush1.msra.mxu0 0.0
        %2838 = vmatprep.subr.mxu0 0.0
        %2839 = vmatpush1.msra.mxu0 0.0
        %2840 = vmatprep.subr.mxu0 0.0
        %2841 = vmatpush1.msra.mxu0 0.0
        %2842 = vmatprep.subr.mxu0 0.0
        %2843 = vmatpush1.msra.mxu0 0.0
        %2844 = vmatprep.subr.mxu0 0.0
        %2845 = vmatpush1.msra.mxu0 0.0
        %2846 = vmatprep.subr.mxu0 0.0
        %2847 = vmatpush1.msra.mxu0 0.0
        %2848 = vmatprep.subr.mxu0 0.0
        %2849 = vmatpush1.msra.mxu0 0.0
        %2850 = vmatprep.subr.mxu0 0.0
        %2851 = vmatpush1.msra.mxu0 0.0
        %2852 = vmatprep.subr.mxu0 0.0
        %2853 = vmatpush1.msra.mxu0 0.0
        %2854 = vmatprep.subr.mxu0 0.0
        %2855 = vmatpush1.msra.mxu0 0.0
        %2856 = vmatprep.mubr.f32.mxu0 0.0
        %2857 = vmatmul.mubr.f32.gmra.mrb[0].mxu0 %v683
        %v2858 = vpop.f32.mrb[0].mxu0
        %v2859 = vadd.f32 0.0, %v2858
        %v2860 = vpop.f32.mrb[0].mxu0
        %2861 = vdwg.mxu0
        %v2862 = vtanh.pop %v2859
        %v2863 = vsub.f32 %v2778, %v2862
        %v2864 = vmul.f32 %v2862, %v2862
        %v2865 = vsub.f32 1.0, %v2864
        %v2866 = vmul.f32 %v2863, %v2865
        %s2867 = scalar_lea.vmem %s6, 144
        %v2868 = vld [vmem:[%s2867] sm:$0xff]
        %v2869 = vld [vmem:[%s2867 + $0x8] sm:$0xff]
        %v2870 = vld [vmem:[%s2867 + $0x10] sm:$0xf]
        %v2872 = vsel %vm348, %v2866, 0
        %v2875 = vsel %vm361, %v2870, 0
        %2877 = vmatprep.subr.mxu0 0.0
        %2878 = vmatpush1.msra.mxu0 %v2868
        %2879 = vmatprep.subr.mxu0 0.0
        %2880 = vmatpush1.msra.mxu0 %v2869
        %2881 = vmatprep.subr.mxu0 0.0
        %2882 = vmatpush1.msra.mxu0 %v2875
        %2883 = vmatprep.subr.mxu0 0.0
        %2884 = vmatpush1.msra.mxu0 0.0
        %2885 = vmatprep.subr.mxu0 0.0
        %2886 = vmatpush1.msra.mxu0 0.0
        %2887 = vmatprep.subr.mxu0 0.0
        %2888 = vmatpush1.msra.mxu0 0.0
        %2889 = vmatprep.subr.mxu0 0.0
        %2890 = vmatpush1.msra.mxu0 0.0
        %2891 = vmatprep.subr.mxu0 0.0
        %2892 = vmatpush1.msra.mxu0 0.0
        %2893 = vmatprep.subr.mxu0 0.0
        %2894 = vmatpush1.msra.mxu0 0.0
        %2895 = vmatprep.subr.mxu0 0.0
        %2896 = vmatpush1.msra.mxu0 0.0
        %2897 = vmatprep.subr.mxu0 0.0
        %2898 = vmatpush1.msra.mxu0 0.0
        %2899 = vmatprep.subr.mxu0 0.0
        %2900 = vmatpush1.msra.mxu0 0.0
        %2901 = vmatprep.subr.mxu0 0.0
        %2902 = vmatpush1.msra.mxu0 0.0
        %2903 = vmatprep.subr.mxu0 0.0
        %2904 = vmatpush1.msra.mxu0 0.0
        %2905 = vmatprep.subr.mxu0 0.0
        %2906 = vmatpush1.msra.mxu0 0.0
        %2907 = vmatprep.subr.mxu0 0.0
        %2908 = vmatpush1.msra.mxu0 0.0
        %2909 = vmatprep.subr.mxu0 0.0
        %2910 = vmatpush1.msra.mxu0 0.0
        %2911 = vmatprep.subr.mxu0 0.0
        %2912 = vmatpush1.msra.mxu0 0.0
        %2913 = vmatprep.subr.mxu0 0.0
        %2914 = vmatpush1.msra.mxu0 0.0
        %2915 = vmatprep.subr.mxu0 0.0
        %2916 = vmatpush1.msra.mxu0 0.0
        %2917 = vmatprep.subr.mxu0 0.0
        %2918 = vmatpush1.msra.mxu0 0.0
        %2919 = vmatprep.subr.mxu0 0.0
        %2920 = vmatpush1.msra.mxu0 0.0
        %2921 = vmatprep.subr.mxu0 0.0
        %2922 = vmatpush1.msra.mxu0 0.0
        %2923 = vmatprep.subr.mxu0 0.0
        %2924 = vmatpush1.msra.mxu0 0.0
        %2925 = vmatprep.subr.mxu0 0.0
        %2926 = vmatpush1.msra.mxu0 0.0
        %2927 = vmatprep.subr.mxu0 0.0
        %2928 = vmatpush1.msra.mxu0 0.0
        %2929 = vmatprep.subr.mxu0 0.0
        %2930 = vmatpush1.msra.mxu0 0.0
        %2931 = vmatprep.subr.mxu0 0.0
        %2932 = vmatpush1.msra.mxu0 0.0
        %2933 = vmatprep.subr.mxu0 0.0
        %2934 = vmatpush1.msra.mxu0 0.0
        %2935 = vmatprep.subr.mxu0 0.0
        %2936 = vmatpush1.msra.mxu0 0.0
        %2937 = vmatprep.subr.mxu0 0.0
        %2938 = vmatpush1.msra.mxu0 0.0
        %2939 = vmatprep.subr.mxu0 0.0
        %2940 = vmatpush1.msra.mxu0 0.0
        %2941 = vmatprep.mubr.f32.mxu0 0.0
        %2942 = vmatmul.mubr.f32.gmra.mrb[0].mxu0 %v2872
        %v2943 = vpop.f32.mrb[0].mxu0
        %v2944 = vadd.f32 0.0, %v2943
        %v2945 = vpop.f32.mrb[0].mxu0
        %2946 = vdwg.mxu0
        %v2947 = vmul.f32 %v2944, -0.2
        %v2948 = vadd.f32 %v2596, %v2947
        %s2949 = scalar_lea.vmem %s8, 192
        %v2950 = vld [vmem:[%s2949] sm:$0xff]
        %v2951 = vld [vmem:[%s2949 + $0x8] sm:$0xff]
        %v2952 = vld [vmem:[%s2949 + $0x10] sm:$0xff]
        %v2953 = vld [vmem:[%s2949 + $0x18] sm:$0xff]
        %v2955 = vsel %vm1097, %v2950, 0
        %v2958 = vsel %vm1097, %v2951, 0
        %v2961 = vsel %vm1097, %v2952, 0
        %v2964 = vsel %vm1097, %v2953, 0
        %v2967 = vsel %vm685, %v2863, 0
        %2969 = vmatprep.subr.mxu0 0.0
        %2970 = vmatpush1.msra.mxu0 %v2967
        %2971 = vmatprep.subr.mxu0 0.0
        %2972 = vmatpush1.msra.mxu0 0.0
        %2973 = vmatprep.subr.mxu0 0.0
        %2974 = vmatpush1.msra.mxu0 0.0
        %2975 = vmatprep.subr.mxu0 0.0
        %2976 = vmatpush1.msra.mxu0 0.0
        %2977 = vmatprep.subr.mxu0 0.0
        %2978 = vmatpush1.msra.mxu0 0.0
        %2979 = vmatprep.subr.mxu0 0.0
        %2980 = vmatpush1.msra.mxu0 0.0
        %2981 = vmatprep.subr.mxu0 0.0
        %2982 = vmatpush1.msra.mxu0 0.0
        %2983 = vmatprep.subr.mxu0 0.0
        %2984 = vmatpush1.msra.mxu0 0.0
        %2985 = vmatprep.subr.mxu0 0.0
        %2986 = vmatpush1.msra.mxu0 0.0
        %2987 = vmatprep.subr.mxu0 0.0
        %2988 = vmatpush1.msra.mxu0 0.0
        %2989 = vmatprep.subr.mxu0 0.0
        %2990 = vmatpush1.msra.mxu0 0.0
        %2991 = vmatprep.subr.mxu0 0.0
        %2992 = vmatpush1.msra.mxu0 0.0
        %2993 = vmatprep.subr.mxu0 0.0
        %2994 = vmatpush1.msra.mxu0 0.0
        %2995 = vmatprep.subr.mxu0 0.0
        %2996 = vmatpush1.msra.mxu0 0.0
        %2997 = vmatprep.subr.mxu0 0.0
        %2998 = vmatpush1.msra.mxu0 0.0
        %2999 = vmatprep.subr.mxu0 0.0
        %3000 = vmatpush1.msra.mxu0 0.0
        %3001 = vmatprep.subr.mxu0 0.0
        %3002 = vmatpush1.msra.mxu0 0.0
        %3003 = vmatprep.subr.mxu0 0.0
        %3004 = vmatpush1.msra.mxu0 0.0
        %3005 = vmatprep.subr.mxu0 0.0
        %3006 = vmatpush1.msra.mxu0 0.0
        %3007 = vmatprep.subr.mxu0 0.0
        %3008 = vmatpush1.msra.mxu0 0.0
        %3009 = vmatprep.subr.mxu0 0.0
        %3010 = vmatpush1.msra.mxu0 0.0
        %3011 = vmatprep.subr.mxu0 0.0
        %3012 = vmatpush1.msra.mxu0 0.0
        %3013 = vmatprep.subr.mxu0 0.0
        %3014 = vmatpush1.msra.mxu0 0.0
        %3015 = vmatprep.subr.mxu0 0.0
        %3016 = vmatpush1.msra.mxu0 0.0
        %3017 = vmatprep.subr.mxu0 0.0
        %3018 = vmatpush1.msra.mxu0 0.0
        %3019 = vmatprep.subr.mxu0 0.0
        %3020 = vmatpush1.msra.mxu0 0.0
        %3021 = vmatprep.subr.mxu0 0.0
        %3022 = vmatpush1.msra.mxu0 0.0
        %3023 = vmatprep.subr.mxu0 0.0
        %3024 = vmatpush1.msra.mxu0 0.0
        %3025 = vmatprep.subr.mxu0 0.0
        %3026 = vmatpush1.msra.mxu0 0.0
        %3027 = vmatprep.subr.mxu0 0.0
        %3028 = vmatpush1.msra.mxu0 0.0
        %3029 = vmatprep.subr.mxu0 0.0
        %3030 = vmatpush1.msra.mxu0 0.0
        %3031 = vmatprep.subr.mxu0 0.0
        %3032 = vmatpush1.msra.mxu0 0.0
        %3033 = vmatprep.mubr.f32.mxu0 0.0
        %3034 = vmatmul.mubr.f32.gmra.mrb[0].mxu0 %v2955
        %v3035 = vpop.f32.mrb[0].mxu0
        %v3036 = vadd.f32 0.0, %v3035
        %v3037 = vpop.f32.mrb[0].mxu0
        %3038 = vmatprep.mubr.f32.mxu0 0.0
        %3039 = vmatmul.mubr.f32.gmra.mrb[0].mxu0 %v2958
        %v3040 = vpop.f32.mrb[0].mxu0
        %v3041 = vadd.f32 0.0, %v3040
        %v3042 = vpop.f32.mrb[0].mxu0
        %3043 = vmatprep.mubr.f32.mxu0 0.0
        %3044 = vmatmul.mubr.f32.gmra.mrb[0].mxu0 %v2961
        %v3045 = vpop.f32.mrb[0].mxu0
        %v3046 = vadd.f32 0.0, %v3045
        %v3047 = vpop.f32.mrb[0].mxu0
        %3048 = vmatprep.mubr.f32.mxu0 0.0
        %3049 = vmatmul.mubr.f32.gmra.mrb[0].mxu0 %v2964
        %v3050 = vpop.f32.mrb[0].mxu0
        %v3051 = vadd.f32 0.0, %v3050
        %v3052 = vpop.f32.mrb[0].mxu0
        %3053 = vdwg.mxu0
        %v3054 = vadd.f32 %v2702, %v3036
        %v3055 = vadd.f32 %v2703, %v3041
        %v3056 = vadd.f32 %v2704, %v3046
        %v3057 = vadd.f32 %v2705, %v3051
        %s3058 = scalar_lea.vmem %s7, 14
        %v3059 = vld [vmem:[%s3058] sm:$0x3]
        %v3061 = vsel %vm600, %v3059, 0
        %3063 = vmatprep.subr.mxu0 0.0
        %3064 = vmatpush1.msra.mxu0 %v340
        %3065 = vmatprep.subr.mxu0 0.0
        %3066 = vmatpush1.msra.mxu0 %v341
        %3067 = vmatprep.subr.mxu0 0.0
        %3068 = vmatpush1.msra.mxu0 %v342
        %3069 = vmatprep.subr.mxu0 0.0
        %3070 = vmatpush1.msra.mxu0 %v343
        %3071 = vmatprep.subr.mxu0 0.0
        %3072 = vmatpush1.msra.mxu0 0.0
        %3073 = vmatprep.subr.mxu0 0.0
        %3074 = vmatpush1.msra.mxu0 0.0
        %3075 = vmatprep.subr.mxu0 0.0
        %3076 = vmatpush1.msra.mxu0 0.0
        %3077 = vmatprep.subr.mxu0 0.0
        %3078 = vmatpush1.msra.mxu0 0.0
        %3079 = vmatprep.subr.mxu0 0.0
        %3080 = vmatpush1.msra.mxu0 0.0
        %3081 = vmatprep.subr.mxu0 0.0
        %3082 = vmatpush1.msra.mxu0 0.0
        %3083 = vmatprep.subr.mxu0 0.0
        %3084 = vmatpush1.msra.mxu0 0.0
        %3085 = vmatprep.subr.mxu0 0.0
        %3086 = vmatpush1.msra.mxu0 0.0
        %3087 = vmatprep.subr.mxu0 0.0
        %3088 = vmatpush1.msra.mxu0 0.0
        %3089 = vmatprep.subr.mxu0 0.0
        %3090 = vmatpush1.msra.mxu0 0.0
        %3091 = vmatprep.subr.mxu0 0.0
        %3092 = vmatpush1.msra.mxu0 0.0
        %3093 = vmatprep.subr.mxu0 0.0
        %3094 = vmatpush1.msra.mxu0 0.0
        %3095 = vmatprep.subr.mxu0 0.0
        %3096 = vmatpush1.msra.mxu0 0.0
        %3097 = vmatprep.subr.mxu0 0.0
        %3098 = vmatpush1.msra.mxu0 0.0
        %3099 = vmatprep.subr.mxu0 0.0
        %3100 = vmatpush1.msra.mxu0 0.0
        %3101 = vmatprep.subr.mxu0 0.0
        %3102 = vmatpush1.msra.mxu0 0.0
        %3103 = vmatprep.subr.mxu0 0.0
        %3104 = vmatpush1.msra.mxu0 0.0
        %3105 = vmatprep.subr.mxu0 0.0
        %3106 = vmatpush1.msra.mxu0 0.0
        %3107 = vmatprep.subr.mxu0 0.0
        %3108 = vmatpush1.msra.mxu0 0.0
        %3109 = vmatprep.subr.mxu0 0.0
        %3110 = vmatpush1.msra.mxu0 0.0
        %3111 = vmatprep.subr.mxu0 0.0
        %3112 = vmatpush1.msra.mxu0 0.0
        %3113 = vmatprep.subr.mxu0 0.0
        %3114 = vmatpush1.msra.mxu0 0.0
        %3115 = vmatprep.subr.mxu0 0.0
        %3116 = vmatpush1.msra.mxu0 0.0
        %3117 = vmatprep.subr.mxu0 0.0
        %3118 = vmatpush1.msra.mxu0 0.0
        %3119 = vmatprep.subr.mxu0 0.0
        %3120 = vmatpush1.msra.mxu0 0.0
        %3121 = vmatprep.subr.mxu0 0.0
        %3122 = vmatpush1.msra.mxu0 0.0
        %3123 = vmatprep.subr.mxu0 0.0
        %3124 = vmatpush1.msra.mxu0 0.0
        %3125 = vmatprep.subr.mxu0 0.0
        %3126 = vmatpush1.msra.mxu0 0.0
        %3127 = vmatprep.mubr.f32.mxu0 0.0
        %3128 = vmatmul.mubr.f32.gmra.mrb[0].mxu0 %v3061
        %v3129 = vpop.f32.mrb[0].mxu0
        %v3130 = vadd.f32 0.0, %v3129
        %v3131 = vpop.f32.mrb[0].mxu0
        %3132 = vdwg.mxu0
        %s3133 = scalar_lea.vmem %s5, 392
        %v3134 = vld [vmem:[%s3133] sm:$0xff]
        %v3135 = vld [vmem:[%s3133 + $0x8] sm:$0xff]
        %v3136 = vld [vmem:[%s3133 + $0x10] sm:$0xff]
        %v3137 = vld [vmem:[%s3133 + $0x18] sm:$0xff]
        %v3138 = vld [vmem:[%s3133 + $0x20] sm:$0xff]
        %v3139 = vld [vmem:[%s3133 + $0x28] sm:$0xff]
        %v3140 = vld [vmem:[%s3133 + $0x30] sm:$0x3]
        %v3142 = vsel %vm685, %v3140, 0
        %3144 = vmatprep.subr.mxu0 0.0
        %3145 = vmatpush1.msra.mxu0 %v3134
        %3146 = vmatprep.subr.mxu0 0.0
        %3147 = vmatpush1.msra.mxu0 %v3135
        %3148 = vmatprep.subr.mxu0 0.0
        %3149 = vmatpush1.msra.mxu0 %v3136
        %3150 = vmatprep.subr.mxu0 0.0
        %3151 = vmatpush1.msra.mxu0 %v3137
        %3152 = vmatprep.subr.mxu0 0.0
        %3153 = vmatpush1.msra.mxu0 %v3138
        %3154 = vmatprep.subr.mxu0 0.0
        %3155 = vmatpush1.msra.mxu0 %v3139
        %3156 = vmatprep.subr.mxu0 0.0
        %3157 = vmatpush1.msra.mxu0 %v3142
        %3158 = vmatprep.subr.mxu0 0.0
        %3159 = vmatpush1.msra.mxu0 0.0
        %3160 = vmatprep.subr.mxu0 0.0
        %3161 = vmatpush1.msra.mxu0 0.0
        %3162 = vmatprep.subr.mxu0 0.0
        %3163 = vmatpush1.msra.mxu0 0.0
        %3164 = vmatprep.subr.mxu0 0.0
        %3165 = vmatpush1.msra.mxu0 0.0
        %3166 = vmatprep.subr.mxu0 0.0
        %3167 = vmatpush1.msra.mxu0 0.0
        %3168 = vmatprep.subr.mxu0 0.0
        %3169 = vmatpush1.msra.mxu0 0.0
        %3170 = vmatprep.subr.mxu0 0.0
        %3171 = vmatpush1.msra.mxu0 0.0
        %3172 = vmatprep.subr.mxu0 0.0
        %3173 = vmatpush1.msra.mxu0 0.0
        %3174 = vmatprep.subr.mxu0 0.0
        %3175 = vmatpush1.msra.mxu0 0.0
        %3176 = vmatprep.subr.mxu0 0.0
        %3177 = vmatpush1.msra.mxu0 0.0
        %3178 = vmatprep.subr.mxu0 0.0
        %3179 = vmatpush1.msra.mxu0 0.0
        %3180 = vmatprep.subr.mxu0 0.0
        %3181 = vmatpush1.msra.mxu0 0.0
        %3182 = vmatprep.subr.mxu0 0.0
        %3183 = vmatpush1.msra.mxu0 0.0
        %3184 = vmatprep.subr.mxu0 0.0
        %3185 = vmatpush1.msra.mxu0 0.0
        %3186 = vmatprep.subr.mxu0 0.0
        %3187 = vmatpush1.msra.mxu0 0.0
        %3188 = vmatprep.subr.mxu0 0.0
        %3189 = vmatpush1.msra.mxu0 0.0
        %3190 = vmatprep.subr.mxu0 0.0
        %3191 = vmatpush1.msra.mxu0 0.0
        %3192 = vmatprep.subr.mxu0 0.0
        %3193 = vmatpush1.msra.mxu0 0.0
        %3194 = vmatprep.subr.mxu0 0.0
        %3195 = vmatpush1.msra.mxu0 0.0
        %3196 = vmatprep.subr.mxu0 0.0
        %3197 = vmatpush1.msra.mxu0 0.0
        %3198 = vmatprep.subr.mxu0 0.0
        %3199 = vmatpush1.msra.mxu0 0.0
        %3200 = vmatprep.subr.mxu0 0.0
        %3201 = vmatpush1.msra.mxu0 0.0
        %3202 = vmatprep.subr.mxu0 0.0
        %3203 = vmatpush1.msra.mxu0 0.0
        %3204 = vmatprep.subr.mxu0 0.0
        %3205 = vmatpush1.msra.mxu0 0.0
        %3206 = vmatprep.subr.mxu0 0.0
        %3207 = vmatpush1.msra.mxu0 0.0
        %3208 = vmatprep.mubr.f32.mxu0 0.0
        %3209 = vmatmul.mubr.f32.gmra.mrb[0].mxu0 %v683
        %v3210 = vpop.f32.mrb[0].mxu0
        %v3211 = vadd.f32 0.0, %v3210
        %v3212 = vpop.f32.mrb[0].mxu0
        %3213 = vdwg.mxu0
        %v3214 = vtanh.pop %v3211
        %v3215 = vsub.f32 %v3130, %v3214
        %v3216 = vmul.f32 %v3214, %v3214
        %v3217 = vsub.f32 1.0, %v3216
        %v3218 = vmul.f32 %v3215, %v3217
        %s3219 = scalar_lea.vmem %s6, 168
        %v3220 = vld [vmem:[%s3219] sm:$0xff]
        %v3221 = vld [vmem:[%s3219 + $0x8] sm:$0xff]
        %v3222 = vld [vmem:[%s3219 + $0x10] sm:$0xf]
        %v3224 = vsel %vm348, %v3218, 0
        %v3227 = vsel %vm361, %v3222, 0
        %3229 = vmatprep.subr.mxu0 0.0
        %3230 = vmatpush1.msra.mxu0 %v3220
        %3231 = vmatprep.subr.mxu0 0.0
        %3232 = vmatpush1.msra.mxu0 %v3221
        %3233 = vmatprep.subr.mxu0 0.0
        %3234 = vmatpush1.msra.mxu0 %v3227
        %3235 = vmatprep.subr.mxu0 0.0
        %3236 = vmatpush1.msra.mxu0 0.0
        %3237 = vmatprep.subr.mxu0 0.0
        %3238 = vmatpush1.msra.mxu0 0.0
        %3239 = vmatprep.subr.mxu0 0.0
        %3240 = vmatpush1.msra.mxu0 0.0
        %3241 = vmatprep.subr.mxu0 0.0
        %3242 = vmatpush1.msra.mxu0 0.0
        %3243 = vmatprep.subr.mxu0 0.0
        %3244 = vmatpush1.msra.mxu0 0.0
        %3245 = vmatprep.subr.mxu0 0.0
        %3246 = vmatpush1.msra.mxu0 0.0
        %3247 = vmatprep.subr.mxu0 0.0
        %3248 = vmatpush1.msra.mxu0 0.0
        %3249 = vmatprep.subr.mxu0 0.0
        %3250 = vmatpush1.msra.mxu0 0.0
        %3251 = vmatprep.subr.mxu0 0.0
        %3252 = vmatpush1.msra.mxu0 0.0
        %3253 = vmatprep.subr.mxu0 0.0
        %3254 = vmatpush1.msra.mxu0 0.0
        %3255 = vmatprep.subr.mxu0 0.0
        %3256 = vmatpush1.msra.mxu0 0.0
        %3257 = vmatprep.subr.mxu0 0.0
        %3258 = vmatpush1.msra.mxu0 0.0
        %3259 = vmatprep.subr.mxu0 0.0
        %3260 = vmatpush1.msra.mxu0 0.0
        %3261 = vmatprep.subr.mxu0 0.0
        %3262 = vmatpush1.msra.mxu0 0.0
        %3263 = vmatprep.subr.mxu0 0.0
        %3264 = vmatpush1.msra.mxu0 0.0
        %3265 = vmatprep.subr.mxu0 0.0
        %3266 = vmatpush1.msra.mxu0 0.0
        %3267 = vmatprep.subr.mxu0 0.0
        %3268 = vmatpush1.msra.mxu0 0.0
        %3269 = vmatprep.subr.mxu0 0.0
        %3270 = vmatpush1.msra.mxu0 0.0
        %3271 = vmatprep.subr.mxu0 0.0
        %3272 = vmatpush1.msra.mxu0 0.0
        %3273 = vmatprep.subr.mxu0 0.0
        %3274 = vmatpush1.msra.mxu0 0.0
        %3275 = vmatprep.subr.mxu0 0.0
        %3276 = vmatpush1.msra.mxu0 0.0
        %3277 = vmatprep.subr.mxu0 0.0
        %3278 = vmatpush1.msra.mxu0 0.0
        %3279 = vmatprep.subr.mxu0 0.0
        %3280 = vmatpush1.msra.mxu0 0.0
        %3281 = vmatprep.subr.mxu0 0.0
        %3282 = vmatpush1.msra.mxu0 0.0
        %3283 = vmatprep.subr.mxu0 0.0
        %3284 = vmatpush1.msra.mxu0 0.0
        %3285 = vmatprep.subr.mxu0 0.0
        %3286 = vmatpush1.msra.mxu0 0.0
        %3287 = vmatprep.subr.mxu0 0.0
        %3288 = vmatpush1.msra.mxu0 0.0
        %3289 = vmatprep.subr.mxu0 0.0
        %3290 = vmatpush1.msra.mxu0 0.0
        %3291 = vmatprep.subr.mxu0 0.0
        %3292 = vmatpush1.msra.mxu0 0.0
        %3293 = vmatprep.mubr.f32.mxu0 0.0
        %3294 = vmatmul.mubr.f32.gmra.mrb[0].mxu0 %v3224
        %v3295 = vpop.f32.mrb[0].mxu0
        %v3296 = vadd.f32 0.0, %v3295
        %v3297 = vpop.f32.mrb[0].mxu0
        %3298 = vdwg.mxu0
        %v3299 = vmul.f32 %v3296, -0.2
        %v3300 = vadd.f32 %v2948, %v3299
        %s3301 = scalar_lea.vmem %s8, 224
        %v3302 = vld [vmem:[%s3301] sm:$0xff]
        %v3303 = vld [vmem:[%s3301 + $0x8] sm:$0xff]
        %v3304 = vld [vmem:[%s3301 + $0x10] sm:$0xff]
        %v3305 = vld [vmem:[%s3301 + $0x18] sm:$0xff]
        %v3307 = vsel %vm1097, %v3302, 0
        %v3310 = vsel %vm1097, %v3303, 0
        %v3313 = vsel %vm1097, %v3304, 0
        %v3316 = vsel %vm1097, %v3305, 0
        %v3319 = vsel %vm685, %v3215, 0
        %3321 = vmatprep.subr.mxu0 0.0
        %3322 = vmatpush1.msra.mxu0 %v3319
        %3323 = vmatprep.subr.mxu0 0.0
        %3324 = vmatpush1.msra.mxu0 0.0
        %3325 = vmatprep.subr.mxu0 0.0
        %3326 = vmatpush1.msra.mxu0 0.0
        %3327 = vmatprep.subr.mxu0 0.0
        %3328 = vmatpush1.msra.mxu0 0.0
        %3329 = vmatprep.subr.mxu0 0.0
        %3330 = vmatpush1.msra.mxu0 0.0
        %3331 = vmatprep.subr.mxu0 0.0
        %3332 = vmatpush1.msra.mxu0 0.0
        %3333 = vmatprep.subr.mxu0 0.0
        %3334 = vmatpush1.msra.mxu0 0.0
        %3335 = vmatprep.subr.mxu0 0.0
        %3336 = vmatpush1.msra.mxu0 0.0
        %3337 = vmatprep.subr.mxu0 0.0
        %3338 = vmatpush1.msra.mxu0 0.0
        %3339 = vmatprep.subr.mxu0 0.0
        %3340 = vmatpush1.msra.mxu0 0.0
        %3341 = vmatprep.subr.mxu0 0.0
        %3342 = vmatpush1.msra.mxu0 0.0
        %3343 = vmatprep.subr.mxu0 0.0
        %3344 = vmatpush1.msra.mxu0 0.0
        %3345 = vmatprep.subr.mxu0 0.0
        %3346 = vmatpush1.msra.mxu0 0.0
        %3347 = vmatprep.subr.mxu0 0.0
        %3348 = vmatpush1.msra.mxu0 0.0
        %3349 = vmatprep.subr.mxu0 0.0
        %3350 = vmatpush1.msra.mxu0 0.0
        %3351 = vmatprep.subr.mxu0 0.0
        %3352 = vmatpush1.msra.mxu0 0.0
        %3353 = vmatprep.subr.mxu0 0.0
        %3354 = vmatpush1.msra.mxu0 0.0
        %3355 = vmatprep.subr.mxu0 0.0
        %3356 = vmatpush1.msra.mxu0 0.0
        %3357 = vmatprep.subr.mxu0 0.0
        %3358 = vmatpush1.msra.mxu0 0.0
        %3359 = vmatprep.subr.mxu0 0.0
        %3360 = vmatpush1.msra.mxu0 0.0
        %3361 = vmatprep.subr.mxu0 0.0
        %3362 = vmatpush1.msra.mxu0 0.0
        %3363 = vmatprep.subr.mxu0 0.0
        %3364 = vmatpush1.msra.mxu0 0.0
        %3365 = vmatprep.subr.mxu0 0.0
        %3366 = vmatpush1.msra.mxu0 0.0
        %3367 = vmatprep.subr.mxu0 0.0
        %3368 = vmatpush1.msra.mxu0 0.0
        %3369 = vmatprep.subr.mxu0 0.0
        %3370 = vmatpush1.msra.mxu0 0.0
        %3371 = vmatprep.subr.mxu0 0.0
        %3372 = vmatpush1.msra.mxu0 0.0
        %3373 = vmatprep.subr.mxu0 0.0
        %3374 = vmatpush1.msra.mxu0 0.0
        %3375 = vmatprep.subr.mxu0 0.0
        %3376 = vmatpush1.msra.mxu0 0.0
        %3377 = vmatprep.subr.mxu0 0.0
        %3378 = vmatpush1.msra.mxu0 0.0
        %3379 = vmatprep.subr.mxu0 0.0
        %3380 = vmatpush1.msra.mxu0 0.0
        %3381 = vmatprep.subr.mxu0 0.0
        %3382 = vmatpush1.msra.mxu0 0.0
        %3383 = vmatprep.subr.mxu0 0.0
        %3384 = vmatpush1.msra.mxu0 0.0
        %3385 = vmatprep.mubr.f32.mxu0 0.0
        %3386 = vmatmul.mubr.f32.gmra.mrb[0].mxu0 %v3307
        %v3387 = vpop.f32.mrb[0].mxu0
        %v3388 = vadd.f32 0.0, %v3387
        %v3389 = vpop.f32.mrb[0].mxu0
        %3390 = vmatprep.mubr.f32.mxu0 0.0
        %3391 = vmatmul.mubr.f32.gmra.mrb[0].mxu0 %v3310
        %v3392 = vpop.f32.mrb[0].mxu0
        %v3393 = vadd.f32 0.0, %v3392
        %v3394 = vpop.f32.mrb[0].mxu0
        %3395 = vmatprep.mubr.f32.mxu0 0.0
        %3396 = vmatmul.mubr.f32.gmra.mrb[0].mxu0 %v3313
        %v3397 = vpop.f32.mrb[0].mxu0
        %v3398 = vadd.f32 0.0, %v3397
        %v3399 = vpop.f32.mrb[0].mxu0
        %3400 = vmatprep.mubr.f32.mxu0 0.0
        %3401 = vmatmul.mubr.f32.gmra.mrb[0].mxu0 %v3316
        %v3402 = vpop.f32.mrb[0].mxu0
        %v3403 = vadd.f32 0.0, %v3402
        %v3404 = vpop.f32.mrb[0].mxu0
        %3405 = vdwg.mxu0
        %v3406 = vadd.f32 %v3054, %v3388
        %v3407 = vadd.f32 %v3055, %v3393
        %v3408 = vadd.f32 %v3056, %v3398
        %v3409 = vadd.f32 %v3057, %v3403
        %s3410 = scalar_lea.vmem %s7, 16
        %v3411 = vld [vmem:[%s3410] sm:$0x3]
        %v3413 = vsel %vm600, %v3411, 0
        %3415 = vmatprep.subr.mxu0 0.0
        %3416 = vmatpush1.msra.mxu0 %v340
        %3417 = vmatprep.subr.mxu0 0.0
        %3418 = vmatpush1.msra.mxu0 %v341
        %3419 = vmatprep.subr.mxu0 0.0
        %3420 = vmatpush1.msra.mxu0 %v342
        %3421 = vmatprep.subr.mxu0 0.0
        %3422 = vmatpush1.msra.mxu0 %v343
        %3423 = vmatprep.subr.mxu0 0.0
        %3424 = vmatpush1.msra.mxu0 0.0
        %3425 = vmatprep.subr.mxu0 0.0
        %3426 = vmatpush1.msra.mxu0 0.0
        %3427 = vmatprep.subr.mxu0 0.0
        %3428 = vmatpush1.msra.mxu0 0.0
        %3429 = vmatprep.subr.mxu0 0.0
        %3430 = vmatpush1.msra.mxu0 0.0
        %3431 = vmatprep.subr.mxu0 0.0
        %3432 = vmatpush1.msra.mxu0 0.0
        %3433 = vmatprep.subr.mxu0 0.0
        %3434 = vmatpush1.msra.mxu0 0.0
        %3435 = vmatprep.subr.mxu0 0.0
        %3436 = vmatpush1.msra.mxu0 0.0
        %3437 = vmatprep.subr.mxu0 0.0
        %3438 = vmatpush1.msra.mxu0 0.0
        %3439 = vmatprep.subr.mxu0 0.0
        %3440 = vmatpush1.msra.mxu0 0.0
        %3441 = vmatprep.subr.mxu0 0.0
        %3442 = vmatpush1.msra.mxu0 0.0
        %3443 = vmatprep.subr.mxu0 0.0
        %3444 = vmatpush1.msra.mxu0 0.0
        %3445 = vmatprep.subr.mxu0 0.0
        %3446 = vmatpush1.msra.mxu0 0.0
        %3447 = vmatprep.subr.mxu0 0.0
        %3448 = vmatpush1.msra.mxu0 0.0
        %3449 = vmatprep.subr.mxu0 0.0
        %3450 = vmatpush1.msra.mxu0 0.0
        %3451 = vmatprep.subr.mxu0 0.0
        %3452 = vmatpush1.msra.mxu0 0.0
        %3453 = vmatprep.subr.mxu0 0.0
        %3454 = vmatpush1.msra.mxu0 0.0
        %3455 = vmatprep.subr.mxu0 0.0
        %3456 = vmatpush1.msra.mxu0 0.0
        %3457 = vmatprep.subr.mxu0 0.0
        %3458 = vmatpush1.msra.mxu0 0.0
        %3459 = vmatprep.subr.mxu0 0.0
        %3460 = vmatpush1.msra.mxu0 0.0
        %3461 = vmatprep.subr.mxu0 0.0
        %3462 = vmatpush1.msra.mxu0 0.0
        %3463 = vmatprep.subr.mxu0 0.0
        %3464 = vmatpush1.msra.mxu0 0.0
        %3465 = vmatprep.subr.mxu0 0.0
        %3466 = vmatpush1.msra.mxu0 0.0
        %3467 = vmatprep.subr.mxu0 0.0
        %3468 = vmatpush1.msra.mxu0 0.0
        %3469 = vmatprep.subr.mxu0 0.0
        %3470 = vmatpush1.msra.mxu0 0.0
        %3471 = vmatprep.subr.mxu0 0.0
        %3472 = vmatpush1.msra.mxu0 0.0
        %3473 = vmatprep.subr.mxu0 0.0
        %3474 = vmatpush1.msra.mxu0 0.0
        %3475 = vmatprep.subr.mxu0 0.0
        %3476 = vmatpush1.msra.mxu0 0.0
        %3477 = vmatprep.subr.mxu0 0.0
        %3478 = vmatpush1.msra.mxu0 0.0
        %3479 = vmatprep.mubr.f32.mxu0 0.0
        %3480 = vmatmul.mubr.f32.gmra.mrb[0].mxu0 %v3413
        %v3481 = vpop.f32.mrb[0].mxu0
        %v3482 = vadd.f32 0.0, %v3481
        %v3483 = vpop.f32.mrb[0].mxu0
        %3484 = vdwg.mxu0
        %s3485 = scalar_lea.vmem %s5, 448
        %v3486 = vld [vmem:[%s3485] sm:$0xff]
        %v3487 = vld [vmem:[%s3485 + $0x8] sm:$0xff]
        %v3488 = vld [vmem:[%s3485 + $0x10] sm:$0xff]
        %v3489 = vld [vmem:[%s3485 + $0x18] sm:$0xff]
        %v3490 = vld [vmem:[%s3485 + $0x20] sm:$0xff]
        %v3491 = vld [vmem:[%s3485 + $0x28] sm:$0xff]
        %v3492 = vld [vmem:[%s3485 + $0x30] sm:$0x3]
        %v3494 = vsel %vm685, %v3492, 0
        %3496 = vmatprep.subr.mxu0 0.0
        %3497 = vmatpush1.msra.mxu0 %v3486
        %3498 = vmatprep.subr.mxu0 0.0
        %3499 = vmatpush1.msra.mxu0 %v3487
        %3500 = vmatprep.subr.mxu0 0.0
        %3501 = vmatpush1.msra.mxu0 %v3488
        %3502 = vmatprep.subr.mxu0 0.0
        %3503 = vmatpush1.msra.mxu0 %v3489
        %3504 = vmatprep.subr.mxu0 0.0
        %3505 = vmatpush1.msra.mxu0 %v3490
        %3506 = vmatprep.subr.mxu0 0.0
        %3507 = vmatpush1.msra.mxu0 %v3491
        %3508 = vmatprep.subr.mxu0 0.0
        %3509 = vmatpush1.msra.mxu0 %v3494
        %3510 = vmatprep.subr.mxu0 0.0
        %3511 = vmatpush1.msra.mxu0 0.0
        %3512 = vmatprep.subr.mxu0 0.0
        %3513 = vmatpush1.msra.mxu0 0.0
        %3514 = vmatprep.subr.mxu0 0.0
        %3515 = vmatpush1.msra.mxu0 0.0
        %3516 = vmatprep.subr.mxu0 0.0
        %3517 = vmatpush1.msra.mxu0 0.0
        %3518 = vmatprep.subr.mxu0 0.0
        %3519 = vmatpush1.msra.mxu0 0.0
        %3520 = vmatprep.subr.mxu0 0.0
        %3521 = vmatpush1.msra.mxu0 0.0
        %3522 = vmatprep.subr.mxu0 0.0
        %3523 = vmatpush1.msra.mxu0 0.0
        %3524 = vmatprep.subr.mxu0 0.0
        %3525 = vmatpush1.msra.mxu0 0.0
        %3526 = vmatprep.subr.mxu0 0.0
        %3527 = vmatpush1.msra.mxu0 0.0
        %3528 = vmatprep.subr.mxu0 0.0
        %3529 = vmatpush1.msra.mxu0 0.0
        %3530 = vmatprep.subr.mxu0 0.0
        %3531 = vmatpush1.msra.mxu0 0.0
        %3532 = vmatprep.subr.mxu0 0.0
        %3533 = vmatpush1.msra.mxu0 0.0
        %3534 = vmatprep.subr.mxu0 0.0
        %3535 = vmatpush1.msra.mxu0 0.0
        %3536 = vmatprep.subr.mxu0 0.0
        %3537 = vmatpush1.msra.mxu0 0.0
        %3538 = vmatprep.subr.mxu0 0.0
        %3539 = vmatpush1.msra.mxu0 0.0
        %3540 = vmatprep.subr.mxu0 0.0
        %3541 = vmatpush1.msra.mxu0 0.0
        %3542 = vmatprep.subr.mxu0 0.0
        %3543 = vmatpush1.msra.mxu0 0.0
        %3544 = vmatprep.subr.mxu0 0.0
        %3545 = vmatpush1.msra.mxu0 0.0
        %3546 = vmatprep.subr.mxu0 0.0
        %3547 = vmatpush1.msra.mxu0 0.0
        %3548 = vmatprep.subr.mxu0 0.0
        %3549 = vmatpush1.msra.mxu0 0.0
        %3550 = vmatprep.subr.mxu0 0.0
        %3551 = vmatpush1.msra.mxu0 0.0
        %3552 = vmatprep.subr.mxu0 0.0
        %3553 = vmatpush1.msra.mxu0 0.0
        %3554 = vmatprep.subr.mxu0 0.0
        %3555 = vmatpush1.msra.mxu0 0.0
        %3556 = vmatprep.subr.mxu0 0.0
        %3557 = vmatpush1.msra.mxu0 0.0
        %3558 = vmatprep.subr.mxu0 0.0
        %3559 = vmatpush1.msra.mxu0 0.0
        %3560 = vmatprep.mubr.f32.mxu0 0.0
        %3561 = vmatmul.mubr.f32.gmra.mrb[0].mxu0 %v683
        %v3562 = vpop.f32.mrb[0].mxu0
        %v3563 = vadd.f32 0.0, %v3562
        %v3564 = vpop.f32.mrb[0].mxu0
        %3565 = vdwg.mxu0
        %v3566 = vtanh.pop %v3563
        %v3567 = vsub.f32 %v3482, %v3566
        %v3568 = vmul.f32 %v3566, %v3566
        %v3569 = vsub.f32 1.0, %v3568
        %v3570 = vmul.f32 %v3567, %v3569
        %s3571 = scalar_lea.vmem %s6, 192
        %v3572 = vld [vmem:[%s3571] sm:$0xff]
        %v3573 = vld [vmem:[%s3571 + $0x8] sm:$0xff]
        %v3574 = vld [vmem:[%s3571 + $0x10] sm:$0xf]
        %v3576 = vsel %vm348, %v3570, 0
        %v3579 = vsel %vm361, %v3574, 0
        %3581 = vmatprep.subr.mxu0 0.0
        %3582 = vmatpush1.msra.mxu0 %v3572
        %3583 = vmatprep.subr.mxu0 0.0
        %3584 = vmatpush1.msra.mxu0 %v3573
        %3585 = vmatprep.subr.mxu0 0.0
        %3586 = vmatpush1.msra.mxu0 %v3579
        %3587 = vmatprep.subr.mxu0 0.0
        %3588 = vmatpush1.msra.mxu0 0.0
        %3589 = vmatprep.subr.mxu0 0.0
        %3590 = vmatpush1.msra.mxu0 0.0
        %3591 = vmatprep.subr.mxu0 0.0
        %3592 = vmatpush1.msra.mxu0 0.0
        %3593 = vmatprep.subr.mxu0 0.0
        %3594 = vmatpush1.msra.mxu0 0.0
        %3595 = vmatprep.subr.mxu0 0.0
        %3596 = vmatpush1.msra.mxu0 0.0
        %3597 = vmatprep.subr.mxu0 0.0
        %3598 = vmatpush1.msra.mxu0 0.0
        %3599 = vmatprep.subr.mxu0 0.0
        %3600 = vmatpush1.msra.mxu0 0.0
        %3601 = vmatprep.subr.mxu0 0.0
        %3602 = vmatpush1.msra.mxu0 0.0
        %3603 = vmatprep.subr.mxu0 0.0
        %3604 = vmatpush1.msra.mxu0 0.0
        %3605 = vmatprep.subr.mxu0 0.0
        %3606 = vmatpush1.msra.mxu0 0.0
        %3607 = vmatprep.subr.mxu0 0.0
        %3608 = vmatpush1.msra.mxu0 0.0
        %3609 = vmatprep.subr.mxu0 0.0
        %3610 = vmatpush1.msra.mxu0 0.0
        %3611 = vmatprep.subr.mxu0 0.0
        %3612 = vmatpush1.msra.mxu0 0.0
        %3613 = vmatprep.subr.mxu0 0.0
        %3614 = vmatpush1.msra.mxu0 0.0
        %3615 = vmatprep.subr.mxu0 0.0
        %3616 = vmatpush1.msra.mxu0 0.0
        %3617 = vmatprep.subr.mxu0 0.0
        %3618 = vmatpush1.msra.mxu0 0.0
        %3619 = vmatprep.subr.mxu0 0.0
        %3620 = vmatpush1.msra.mxu0 0.0
        %3621 = vmatprep.subr.mxu0 0.0
        %3622 = vmatpush1.msra.mxu0 0.0
        %3623 = vmatprep.subr.mxu0 0.0
        %3624 = vmatpush1.msra.mxu0 0.0
        %3625 = vmatprep.subr.mxu0 0.0
        %3626 = vmatpush1.msra.mxu0 0.0
        %3627 = vmatprep.subr.mxu0 0.0
        %3628 = vmatpush1.msra.mxu0 0.0
        %3629 = vmatprep.subr.mxu0 0.0
        %3630 = vmatpush1.msra.mxu0 0.0
        %3631 = vmatprep.subr.mxu0 0.0
        %3632 = vmatpush1.msra.mxu0 0.0
        %3633 = vmatprep.subr.mxu0 0.0
        %3634 = vmatpush1.msra.mxu0 0.0
        %3635 = vmatprep.subr.mxu0 0.0
        %3636 = vmatpush1.msra.mxu0 0.0
        %3637 = vmatprep.subr.mxu0 0.0
        %3638 = vmatpush1.msra.mxu0 0.0
        %3639 = vmatprep.subr.mxu0 0.0
        %3640 = vmatpush1.msra.mxu0 0.0
        %3641 = vmatprep.subr.mxu0 0.0
        %3642 = vmatpush1.msra.mxu0 0.0
        %3643 = vmatprep.subr.mxu0 0.0
        %3644 = vmatpush1.msra.mxu0 0.0
        %3645 = vmatprep.mubr.f32.mxu0 0.0
        %3646 = vmatmul.mubr.f32.gmra.mrb[0].mxu0 %v3576
        %v3647 = vpop.f32.mrb[0].mxu0
        %v3648 = vadd.f32 0.0, %v3647
        %v3649 = vpop.f32.mrb[0].mxu0
        %3650 = vdwg.mxu0
        %v3651 = vmul.f32 %v3648, -0.2
        %v3652 = vadd.f32 %v3300, %v3651
        %s3653 = scalar_lea.vmem %s8, 256
        %v3654 = vld [vmem:[%s3653] sm:$0xff]
        %v3655 = vld [vmem:[%s3653 + $0x8] sm:$0xff]
        %v3656 = vld [vmem:[%s3653 + $0x10] sm:$0xff]
        %v3657 = vld [vmem:[%s3653 + $0x18] sm:$0xff]
        %v3659 = vsel %vm1097, %v3654, 0
        %v3662 = vsel %vm1097, %v3655, 0
        %v3665 = vsel %vm1097, %v3656, 0
        %v3668 = vsel %vm1097, %v3657, 0
        %v3671 = vsel %vm685, %v3567, 0
        %3673 = vmatprep.subr.mxu0 0.0
        %3674 = vmatpush1.msra.mxu0 %v3671
        %3675 = vmatprep.subr.mxu0 0.0
        %3676 = vmatpush1.msra.mxu0 0.0
        %3677 = vmatprep.subr.mxu0 0.0
        %3678 = vmatpush1.msra.mxu0 0.0
        %3679 = vmatprep.subr.mxu0 0.0
        %3680 = vmatpush1.msra.mxu0 0.0
        %3681 = vmatprep.subr.mxu0 0.0
        %3682 = vmatpush1.msra.mxu0 0.0
        %3683 = vmatprep.subr.mxu0 0.0
        %3684 = vmatpush1.msra.mxu0 0.0
        %3685 = vmatprep.subr.mxu0 0.0
        %3686 = vmatpush1.msra.mxu0 0.0
        %3687 = vmatprep.subr.mxu0 0.0
        %3688 = vmatpush1.msra.mxu0 0.0
        %3689 = vmatprep.subr.mxu0 0.0
        %3690 = vmatpush1.msra.mxu0 0.0
        %3691 = vmatprep.subr.mxu0 0.0
        %3692 = vmatpush1.msra.mxu0 0.0
        %3693 = vmatprep.subr.mxu0 0.0
        %3694 = vmatpush1.msra.mxu0 0.0
        %3695 = vmatprep.subr.mxu0 0.0
        %3696 = vmatpush1.msra.mxu0 0.0
        %3697 = vmatprep.subr.mxu0 0.0
        %3698 = vmatpush1.msra.mxu0 0.0
        %3699 = vmatprep.subr.mxu0 0.0
        %3700 = vmatpush1.msra.mxu0 0.0
        %3701 = vmatprep.subr.mxu0 0.0
        %3702 = vmatpush1.msra.mxu0 0.0
        %3703 = vmatprep.subr.mxu0 0.0
        %3704 = vmatpush1.msra.mxu0 0.0
        %3705 = vmatprep.subr.mxu0 0.0
        %3706 = vmatpush1.msra.mxu0 0.0
        %3707 = vmatprep.subr.mxu0 0.0
        %3708 = vmatpush1.msra.mxu0 0.0
        %3709 = vmatprep.subr.mxu0 0.0
        %3710 = vmatpush1.msra.mxu0 0.0
        %3711 = vmatprep.subr.mxu0 0.0
        %3712 = vmatpush1.msra.mxu0 0.0
        %3713 = vmatprep.subr.mxu0 0.0
        %3714 = vmatpush1.msra.mxu0 0.0
        %3715 = vmatprep.subr.mxu0 0.0
        %3716 = vmatpush1.msra.mxu0 0.0
        %3717 = vmatprep.subr.mxu0 0.0
        %3718 = vmatpush1.msra.mxu0 0.0
        %3719 = vmatprep.subr.mxu0 0.0
        %3720 = vmatpush1.msra.mxu0 0.0
        %3721 = vmatprep.subr.mxu0 0.0
        %3722 = vmatpush1.msra.mxu0 0.0
        %3723 = vmatprep.subr.mxu0 0.0
        %3724 = vmatpush1.msra.mxu0 0.0
        %3725 = vmatprep.subr.mxu0 0.0
        %3726 = vmatpush1.msra.mxu0 0.0
        %3727 = vmatprep.subr.mxu0 0.0
        %3728 = vmatpush1.msra.mxu0 0.0
        %3729 = vmatprep.subr.mxu0 0.0
        %3730 = vmatpush1.msra.mxu0 0.0
        %3731 = vmatprep.subr.mxu0 0.0
        %3732 = vmatpush1.msra.mxu0 0.0
        %3733 = vmatprep.subr.mxu0 0.0
        %3734 = vmatpush1.msra.mxu0 0.0
        %3735 = vmatprep.subr.mxu0 0.0
        %3736 = vmatpush1.msra.mxu0 0.0
        %3737 = vmatprep.mubr.f32.mxu0 0.0
        %3738 = vmatmul.mubr.f32.gmra.mrb[0].mxu0 %v3659
        %v3739 = vpop.f32.mrb[0].mxu0
        %v3740 = vadd.f32 0.0, %v3739
        %v3741 = vpop.f32.mrb[0].mxu0
        %3742 = vmatprep.mubr.f32.mxu0 0.0
        %3743 = vmatmul.mubr.f32.gmra.mrb[0].mxu0 %v3662
        %v3744 = vpop.f32.mrb[0].mxu0
        %v3745 = vadd.f32 0.0, %v3744
        %v3746 = vpop.f32.mrb[0].mxu0
        %3747 = vmatprep.mubr.f32.mxu0 0.0
        %3748 = vmatmul.mubr.f32.gmra.mrb[0].mxu0 %v3665
        %v3749 = vpop.f32.mrb[0].mxu0
        %v3750 = vadd.f32 0.0, %v3749
        %v3751 = vpop.f32.mrb[0].mxu0
        %3752 = vmatprep.mubr.f32.mxu0 0.0
        %3753 = vmatmul.mubr.f32.gmra.mrb[0].mxu0 %v3668
        %v3754 = vpop.f32.mrb[0].mxu0
        %v3755 = vadd.f32 0.0, %v3754
        %v3756 = vpop.f32.mrb[0].mxu0
        %3757 = vdwg.mxu0
        %v3758 = vadd.f32 %v3406, %v3740
        %v3759 = vadd.f32 %v3407, %v3745
        %v3760 = vadd.f32 %v3408, %v3750
        %v3761 = vadd.f32 %v3409, %v3755
        %v3762 = vmul.f32 %v3758, 0.2
        %v3763 = vmul.f32 %v3759, 0.2
        %v3764 = vmul.f32 %v3760, 0.2
        %v3765 = vmul.f32 %v3761, 0.2
        %v3766 = vadd.f32 %v594, %v3762
        %v3767 = vadd.f32 %v595, %v3763
        %v3768 = vadd.f32 %v596, %v3764
        %v3769 = vadd.f32 %v597, %v3765
        %v3770 = vmul.f32 %v3766, 0.0025
        %v3771 = vmul.f32 %v3767, 0.0025
        %v3772 = vmul.f32 %v3768, 0.0025
        %v3773 = vmul.f32 %v3769, 0.0025
        %v3774 = vsub.f32 %v340, %v3770
        %v3775 = vsub.f32 %v341, %v3771
        %v3776 = vsub.f32 %v342, %v3772
        %v3777 = vsub.f32 %v343, %v3773
        %3778 = vst.msk [vmem:[%s9] sm:$0xff] %vm348, %v3774
        %3779 = vst.msk [vmem:[%s9 + $0x8] sm:$0xff] %vm348, %v3775
        %3780 = vst.msk [vmem:[%s9 + $0x10] sm:$0xff] %vm348, %v3776
        %3781 = vst.msk [vmem:[%s9 + $0x18] sm:$0xff] %vm348, %v3777
        %v3782 = vmul.f32 %v3652, 0.0025
        %v3783 = vsub.f32 %v344, %v3782
        %vm3784 = vcmask 402432
        %3785 = vst.msk [vmem:[#allocation2] sm:$0x3] %vm3784, %v3783
        // Predicated region
        $region61: #{run.1} parent=55 // pred_check
          %p3786 = pneg %p225
        $region62: #{run.1} parent=55 // pred_check_branch
          %3788 = sbr.rel (%p3786) target = $region64
        $region63: #{run.1} parent=55 // pred_region
          _
        $region64: #{run.1} parent=55 // pred_fallthru
          _
        // Predicated region
        $region65: #{run.1} parent=55 // pred_check
          %p3789 = pneg %p246
        $region66: #{run.1} parent=55 // pred_check_branch
          %3791 = sbr.rel (%p3789) target = $region68
        $region67: #{run.1} parent=55 // pred_region
          %s3793 = ssub.s32 32, 32
          %3794 = vsyncadd [#allocation3], %s3793
          %s3796 = sshll.u32 [#allocation2], 4
          %s3797 = int_to_ptr.vmem [resolvable:$true] %s3796
          %3799 = dma.vmem_to_hbm [thread:$0]  %s3797, 32, %s10, [#allocation3]
        $region68: #{run.1} parent=55 // pred_fallthru
          _
        // Predicated region
        $region69: #{run.1} parent=55 // pred_check
          %p3800 = pneg %p225
        $region70: #{run.1} parent=55 // pred_check_branch
          %3802 = sbr.rel (%p3800) target = $region72
        $region71: #{run.1} parent=55 // pred_region
          _
        $region72: #{run.1} parent=55 // pred_fallthru
          _
        // Predicated region
        $region73: #{run.1} parent=55 // pred_check
          %p3803 = pneg %p246
        $region74: #{run.1} parent=55 // pred_check_branch
          %3805 = sbr.rel (%p3803) target = $region76
        $region75: #{run.1} parent=55 // pred_region
          %3806 = dma.done [#allocation3], 32
        $region76: #{run.1} parent=55 // pred_fallthru
          _
      $region56: #{run.1} parent=5 // pred_fallthru
        _
      %p3807 = scmp.le.s32.totalorder 2, %s18
      // Predicated region
      $region77: #{run.1} parent=5 // pred_check
        %p3808 = pneg %p3807
      $region78: #{run.1} parent=5 // pred_check_branch
        %3810 = sbr.rel (%p3808) target = $region80
      $region79: #{run.1} parent=5 // pred_region
        %s3811 = ssub.s32 %s18, 2
      $region80: #{run.1} parent=5 // pred_fallthru
        _
    $region6: #{run.1} parent=1 // loop_footer
      %s22 = sadd.s32 1, %s18
    $region7: #{run.1} parent=1 // loop_footer_branch
      %17 = sbr.rel target = $region3
    $region8: #{run.1} parent=1 // loop_exit
      _
    %3812 = vsyncpa [#allocation3], 1
    %s3813 = scalar_lea.sflag [#allocation3], 1
    %3814 = vsyncpa %s3813, 1

</llo_original>
